<compile_context>
chip_gen: v7x
topology: tpu7x:2x2x1
jax: 0.10.0
libtpu: 0.0.40
codegen_flags: <defaults>
</compile_context>

<pallas_src>
import jax
import jax.numpy as jnp
from jax.experimental import pallas as pl
from jax.experimental.pallas import tpu as pltpu

_TIME_BLOCK = 8  # LSTM steps per grid step (amortizes ~0.35 us/step pipeline overhead)


# --------------------------------------------------------------------------- #
# Kernel factory (closes over static T / TBLK / tail-mask flag)
# --------------------------------------------------------------------------- #
def _make_bert_decoder_kernel(t_true, t_block, mask_tail):
    def kernel(
        emb_ref,      # (TBLK, B, E) f32   per-block BERT embeddings
        h0_ref,       # (B, D)       f32   initial hidden state
        c0_ref,       # (B, D)       f32   initial cell state
        w_ih_ref,     # (E, 4D)      bf16  LSTM input weight, pre-transposed
        w_hh_ref,     # (D, 4D)      f32   LSTM hidden weight, pre-transposed (f32: no recurrent drift)
        b_ref,        # (1, 4D)      f32   b_ih + b_hh
        w_fc_ref,     # (D, E)       bf16  fc weight, pre-transposed
        b_fc_ref,     # (1, E)       f32   fc bias
        scores_ref,   # (TBLK, B, E) f32   per-step output scores
        h_out_ref,    # (B, D)       f32   final hidden state (aliased onto h0)
        c_out_ref,    # (B, D)       f32   final cell state   (aliased onto c0)
        h_sc,         # (B, D)       f32   VMEM scratch: carried hidden state
        c_sc,         # (B, D)       f32   VMEM scratch: carried cell state
    ):
        tb = pl.program_id(0)
        D = h_sc.shape[-1]

        # Load the initial recurrent state into VMEM scratch on the first block.
        @pl.when(tb == 0)
        def _():
            h_sc[...] = h0_ref[...]
            c_sc[...] = c0_ref[...]

        # Small loop-invariant biases hoisted out of the unrolled step loop.
        b_gate = b_ref[...]   # (1, 4D)
        b_fc = b_fc_ref[...]  # (1, E)

        def step(j, carry):
            h, c = carry                                   # (B, D) f32 each
            x = emb_ref[j].astype(jnp.bfloat16)            # (B, E) bf16

            # Two resident-weight matmuls, f32 accumulation (no concat slab).
            gates = (
                jnp.dot(x, w_ih_ref[...], preferred_element_type=jnp.float32)
                + jnp.dot(h, w_hh_ref[...], preferred_element_type=jnp.float32)
                + b_gate
            )                                              # (B, 4D) f32

            # PyTorch LSTMCell gate order: input, forget, cell(g), output.
            i_g = jax.nn.sigmoid(gates[:, 0 * D:1 * D])
            f_g = jax.nn.sigmoid(gates[:, 1 * D:2 * D])
            g_g = jnp.tanh(gates[:, 2 * D:3 * D])
            o_g = jax.nn.sigmoid(gates[:, 3 * D:4 * D])

            c_new = f_g * c + i_g * g_g
            h_new = o_g * jnp.tanh(c_new)

            # dropout(p=0.5) is identity in eval mode.
            scores = (
                jnp.dot(h_new.astype(jnp.bfloat16), w_fc_ref[...],
                        preferred_element_type=jnp.float32)
                + b_fc
            )                                              # (B, E) f32
            scores_ref[j] = scores.astype(scores_ref.dtype)

            if mask_tail:
                # Steps beyond the true sequence length (zero-padded emb) must
                # not advance the recurrent state.
                valid = (tb * t_block + j) < t_true
                h_new = jnp.where(valid, h_new, h)
                c_new = jnp.where(valid, c_new, c)
            return (h_new, c_new)

        h_fin, c_fin = jax.lax.fori_loop(
            0, t_block, step, (h_sc[...], c_sc[...]), unroll=True
        )
        h_sc[...] = h_fin
        c_sc[...] = c_fin

        # Final-state HBM writeback only on the last grid step.
        @pl.when(tb == pl.num_programs(0) - 1)
        def _():
            h_out_ref[...] = h_fin
            c_out_ref[...] = c_fin

    return kernel


# --------------------------------------------------------------------------- #
# One-time parameter preparation (transpose / bias-combine / dtype cast)
# --------------------------------------------------------------------------- #
def prepare_params(params):
    """Do weight layout work ONCE, not per decoder step."""
    E = params["w_ih"].shape[1]
    D = params["w_hh"].shape[1]
    return {
        "w_ih_t": params["w_ih"].T.astype(jnp.bfloat16),    # (E, 4D)
        "w_hh_t": params["w_hh"].T.astype(jnp.float32),     # (D, 4D) f32 (recurrent path)
        "b": (params["b_ih"] + params["b_hh"]).reshape(1, 4 * D).astype(jnp.float32),
        "w_fc_t": params["w_fc"].T.astype(jnp.bfloat16),     # (D, E)
        "b_fc": params["b_fc"].reshape(1, E).astype(jnp.float32),
    }


# --------------------------------------------------------------------------- #
# Wrappers
# --------------------------------------------------------------------------- #
def _decode_sequence_impl(emb_seq, h0, c0, prep):
    """emb_seq: (T, B, E) f32 per-step BERT embeddings; h0, c0: (B, D) f32.

    Returns (scores_seq (T, B, E) f32, h_T, c_T).  Weights are DMA'd into VMEM
    once (constant index_map) and reused across all grid steps; TBLK LSTM steps
    run per grid step with h/c carried in VMEM scratch.
    """
    T, B, E = emb_seq.shape
    D = h0.shape[1]

    t_block = max(1, min(_TIME_BLOCK, T))
    n_blocks = pl.cdiv(T, t_block)
    t_pad = n_blocks * t_block
    if t_pad != T:
        emb_seq = jnp.pad(emb_seq, ((0, t_pad - T), (0, 0), (0, 0)))

    kernel = _make_bert_decoder_kernel(T, t_block, mask_tail=(t_pad != T))

    grid_spec = pltpu.PrefetchScalarGridSpec(
        num_scalar_prefetch=0,
        grid=(n_blocks,),
        in_specs=[
            pl.BlockSpec((t_block, B, E), lambda t: (t, 0, 0)),   # embeddings per block
            pl.BlockSpec((B, D), lambda t: (0, 0)),               # h0 (read once)
            pl.BlockSpec((B, D), lambda t: (0, 0)),               # c0 (read once)
            pl.BlockSpec((E, 4 * D), lambda t: (0, 0)),           # w_ih_T (resident)
            pl.BlockSpec((D, 4 * D), lambda t: (0, 0)),           # w_hh_T (resident)
            pl.BlockSpec((1, 4 * D), lambda t: (0, 0)),           # combined LSTM bias
            pl.BlockSpec((D, E), lambda t: (0, 0)),               # fc weight (resident)
            pl.BlockSpec((1, E), lambda t: (0, 0)),               # fc bias
        ],
        out_specs=[
            pl.BlockSpec((t_block, B, E), lambda t: (t, 0, 0)),   # scores per block
            pl.BlockSpec((B, D), lambda t: (0, 0)),               # final h
            pl.BlockSpec((B, D), lambda t: (0, 0)),               # final c
        ],
        scratch_shapes=[
            pltpu.VMEM((B, D), jnp.float32),                      # carried h
            pltpu.VMEM((B, D), jnp.float32),                      # carried c
        ],
    )

    out_shapes = (
        jax.ShapeDtypeStruct((t_pad, B, E), jnp.float32),
        jax.ShapeDtypeStruct((B, D), jnp.float32),
        jax.ShapeDtypeStruct((B, D), jnp.float32),
    )

    scores_seq, h_t, c_t = pl.pallas_call(
        kernel,
        out_shape=out_shapes,
        grid_spec=grid_spec,
        # h/c state updated in place (input 1 -> output 1, input 2 -> output 2);
        # backed by jit-level donation of h0/c0 below.
        input_output_aliases={1: 1, 2: 2},
        compiler_params=pltpu.CompilerParams(
            dimension_semantics=("arbitrary",),                   # sequential carry over time
        ),
    )(emb_seq, h0, c0, prep["w_ih_t"], prep["w_hh_t"], prep["b"],
      prep["w_fc_t"], prep["b_fc"])

    if t_pad != T:
        scores_seq = scores_seq[:T]
    return scores_seq, h_t, c_t


# h0/c0 are donated so the pallas input_output_aliases actually alias
# (callers that need the old state afterwards must pass a copy).
bert_decoder_decode_sequence = jax.jit(_decode_sequence_impl, donate_argnums=(1, 2))


def bert_decoder_forward(embeddings, h, c, prep):
    """Single decoder step == the PyTorch module's forward().

    embeddings: (B, E) contextualized BERT embeddings (external BERT model
    output stands in for get_inputs_contextualized_embeddings(batch_words)).
    NOTE: h and c are donated (consumed) by this call.
    """
    scores_seq, h_new, c_new = bert_decoder_decode_sequence(
        embeddings[None], h, c, prep
    )
    return scores_seq[0], h_new, c_new


# --------------------------------------------------------------------------- #
# Synthetic parameters + pure-JAX reference
# --------------------------------------------------------------------------- #
def make_params(key, embed_dim, decoder_dim):
    """Deterministic synthetic parameters matching nn.LSTMCell / nn.Linear."""
    k1, k2, k3, k4, k5 = jax.random.split(key, 5)
    lim = 1.0 / jnp.sqrt(decoder_dim)
    return {
        # nn.LSTMCell(embed_dim, decoder_dim): weight_ih (4D, E), weight_hh (4D, D)
        "w_ih": jax.random.uniform(k1, (4 * decoder_dim, embed_dim), jnp.float32, -lim, lim),
        "w_hh": jax.random.uniform(k2, (4 * decoder_dim, decoder_dim), jnp.float32, -lim, lim),
        "b_ih": jax.random.uniform(k3, (4 * decoder_dim,), jnp.float32, -lim, lim),
        "b_hh": jax.random.uniform(k4, (4 * decoder_dim,), jnp.float32, -lim, lim),
        # nn.Linear(decoder_dim, embed_dim), init_weights(): weight ~ U(-0.1, 0.1), bias = 0
        "w_fc": jax.random.uniform(k5, (embed_dim, decoder_dim), jnp.float32, -0.1, 0.1),
        "b_fc": jnp.zeros((embed_dim,), jnp.float32),
    }


def reference_step(x, h, c, params):
    """Pure-JAX f32 reference (mirrors torch.nn.LSTMCell + Linear)."""
    gates = (x @ params["w_ih"].T + params["b_ih"]
             + h @ params["w_hh"].T + params["b_hh"])
    D = h.shape[1]
    i_g = jax.nn.sigmoid(gates[:, 0 * D:1 * D])
    f_g = jax.nn.sigmoid(gates[:, 1 * D:2 * D])
    g_g = jnp.tanh(gates[:, 2 * D:3 * D])
    o_g = jax.nn.sigmoid(gates[:, 3 * D:4 * D])
    c_new = f_g * c + i_g * g_g
    h_new = o_g * jnp.tanh(c_new)
    scores = h_new @ params["w_fc"].T + params["b_fc"]
    return scores, h_new, c_new


def reference_sequence(emb_seq, h0, c0, params):
    def step(carry, x):
        h, c = carry
        scores, h, c = reference_step(x, h, c, params)
        return (h, c), scores
    (hT, cT), scores_seq = jax.lax.scan(step, (h0, c0), emb_seq)
    return scores_seq, hT, cT


# --------------------------------------------------------------------------- #
if __name__ == "__main__":
    B = 8      # batch size
    E = 768    # BERT embed_dim (fixed by the module)
    D = 256    # decoder_dim
    T = 10     # decode steps (not a multiple of _TIME_BLOCK -> exercises tail mask)

    key = jax.random.PRNGKey(0)
    k_emb, k_h, k_c, k_par = jax.random.split(key, 4)

    # Contextualized BERT embeddings per step stand in for the external
    # get_inputs_contextualized_embeddings(batch_words) call.
    emb_seq = jax.random.normal(k_emb, (T, B, E), jnp.float32)
    h0 = jax.random.normal(k_h, (B, D), jnp.float32)
    c0 = jax.random.normal(k_c, (B, D), jnp.float32)

    params = make_params(k_par, E, D)
    prep = prepare_params(params)   # one-time layout / dtype prep

    # ---- single step: matches BertDecoder.forward semantics -----------------
    # (pass copies: h/c are donated by the jitted kernel wrapper)
    scores, h1, c1 = bert_decoder_forward(emb_seq[0], jnp.copy(h0), jnp.copy(c0), prep)
    jax.block_until_ready((scores, h1, c1))

    scores_ref, h1_ref, c1_ref = reference_step(emb_seq[0], h0, c0, params)
    # Tolerances loosened vs pure-f32: x / w_ih / w_fc feed the MXU in bf16
    # (intentional precision trade), accumulation and recurrent path are f32.
    assert jnp.allclose(scores, scores_ref, atol=3e-2, rtol=3e-2)
    assert jnp.allclose(h1, h1_ref, atol=2e-2, rtol=2e-2)
    assert jnp.allclose(c1, c1_ref, atol=2e-2, rtol=2e-2)

    # ---- multi-step decode: weights stay VMEM-resident across all steps -----
    scores_seq, hT, cT = bert_decoder_decode_sequence(
        emb_seq, jnp.copy(h0), jnp.copy(c0), prep
    )
    jax.block_until_ready((scores_seq, hT, cT))

    scores_seq_ref, hT_ref, cT_ref = reference_sequence(emb_seq, h0, c0, params)
    # bf16 input-side errors accumulate mildly through T steps of recurrence.
    assert jnp.allclose(scores_seq, scores_seq_ref, atol=8e-2, rtol=5e-2)
    assert jnp.allclose(hT, hT_ref, atol=8e-2, rtol=5e-2)
    assert jnp.allclose(cT, cT_ref, atol=8e-2, rtol=5e-2)

    print("KERNEL_OK")
</pallas_src>

<mosaic_0001>
module attributes {stable_mosaic.version = 11 : i64} {
  func.func @kernel(%arg0: i32, %arg1: memref<1x8x768xf32, #tpu.memory_space<vmem>>, %arg2: memref<8x256xf32, #tpu.memory_space<vmem>>, %arg3: memref<8x256xf32, #tpu.memory_space<vmem>>, %arg4: memref<768x1024xbf16, #tpu.memory_space<vmem>>, %arg5: memref<256x1024xf32, #tpu.memory_space<vmem>>, %arg6: memref<1x1024xf32, #tpu.memory_space<vmem>>, %arg7: memref<256x768xbf16, #tpu.memory_space<vmem>>, %arg8: memref<1x768xf32, #tpu.memory_space<vmem>>, %arg9: memref<1x8x768xf32, #tpu.memory_space<vmem>>, %arg10: memref<8x256xf32, #tpu.memory_space<vmem>>, %arg11: memref<8x256xf32, #tpu.memory_space<vmem>>, %arg12: memref<8x256xf32, #tpu.memory_space<vmem>>, %arg13: memref<8x256xf32, #tpu.memory_space<vmem>>) attributes {dimension_semantics = [#tpu.dimension_semantics<arbitrary>], iteration_bounds = array<i64: 1>, scalar_prefetch = 0 : i64, scratch_operands = 2 : i64, tpu.core_type = #tpu.core_type<tc>, window_params = [{transform_indices = @transform_0, window_bounds = array<i64: 1, 8, 768>}, {pipeline_mode = #tpu.pipeline_mode<synchronous>, transform_indices = @transform_1, window_bounds = array<i64: 8, 256>}, {pipeline_mode = #tpu.pipeline_mode<synchronous>, transform_indices = @transform_2, window_bounds = array<i64: 8, 256>}, {pipeline_mode = #tpu.pipeline_mode<synchronous>, transform_indices = @transform_3, window_bounds = array<i64: 768, 1024>}, {pipeline_mode = #tpu.pipeline_mode<synchronous>, transform_indices = @transform_4, window_bounds = array<i64: 256, 1024>}, {pipeline_mode = #tpu.pipeline_mode<synchronous>, transform_indices = @transform_5, window_bounds = array<i64: 1, 1024>}, {pipeline_mode = #tpu.pipeline_mode<synchronous>, transform_indices = @transform_6, window_bounds = array<i64: 256, 768>}, {pipeline_mode = #tpu.pipeline_mode<synchronous>, transform_indices = @transform_7, window_bounds = array<i64: 1, 768>}, {transform_indices = @transform_8, window_bounds = array<i64: 1, 8, 768>}, {pipeline_mode = #tpu.pipeline_mode<synchronous>, transform_indices = @transform_9, window_bounds = array<i64: 8, 256>}, {pipeline_mode = #tpu.pipeline_mode<synchronous>, transform_indices = @transform_10, window_bounds = array<i64: 8, 256>}]} {
    %c0_i32 = arith.constant 0 : i32
    %0 = arith.cmpi eq, %arg0, %c0_i32 : i32
    %1 = arith.extui %0 : i1 to i32
    %c0_i32_0 = arith.constant 0 : i32
    %2 = arith.cmpi ne, %1, %c0_i32_0 : i32
    scf.if %2 {
      %c0_30 = arith.constant 0 : index
      %c0_31 = arith.constant 0 : index
      %57 = vector.load %arg2[%c0_30, %c0_31] : memref<8x256xf32, #tpu.memory_space<vmem>>, vector<8x256xf32>
      %c0_32 = arith.constant 0 : index
      %c0_33 = arith.constant 0 : index
      %58 = vector.load %arg12[%c0_32, %c0_33] : memref<8x256xf32, #tpu.memory_space<vmem>>, vector<8x256xf32>
      tpu.vector_store %arg12[%c0_32, %c0_33], %57 {strides = array<i32>} : memref<8x256xf32, #tpu.memory_space<vmem>>, vector<8x256xf32>,
      %c0_34 = arith.constant 0 : index
      %c0_35 = arith.constant 0 : index
      %59 = vector.load %arg3[%c0_34, %c0_35] : memref<8x256xf32, #tpu.memory_space<vmem>>, vector<8x256xf32>
      %c0_36 = arith.constant 0 : index
      %c0_37 = arith.constant 0 : index
      %60 = vector.load %arg13[%c0_36, %c0_37] : memref<8x256xf32, #tpu.memory_space<vmem>>, vector<8x256xf32>
      tpu.vector_store %arg13[%c0_36, %c0_37], %59 {strides = array<i32>} : memref<8x256xf32, #tpu.memory_space<vmem>>, vector<8x256xf32>,
    } else {
    }
    %c0 = arith.constant 0 : index
    %c0_1 = arith.constant 0 : index
    %3 = vector.load %arg6[%c0, %c0_1] : memref<1x1024xf32, #tpu.memory_space<vmem>>, vector<1x1024xf32>
    %c0_2 = arith.constant 0 : index
    %c0_3 = arith.constant 0 : index
    %4 = vector.load %arg8[%c0_2, %c0_3] : memref<1x768xf32, #tpu.memory_space<vmem>>, vector<1x768xf32>
    %c0_4 = arith.constant 0 : index
    %c0_5 = arith.constant 0 : index
    %5 = vector.load %arg12[%c0_4, %c0_5] : memref<8x256xf32, #tpu.memory_space<vmem>>, vector<8x256xf32>
    %c0_6 = arith.constant 0 : index
    %c0_7 = arith.constant 0 : index
    %6 = vector.load %arg13[%c0_6, %c0_7] : memref<8x256xf32, #tpu.memory_space<vmem>>, vector<8x256xf32>
    %c0_i32_8 = arith.constant 0 : i32
    %7 = arith.index_cast %c0_i32_8 : i32 to index
    %c0_9 = arith.constant 0 : index
    %c0_10 = arith.constant 0 : index
    %8 = vector.load %arg1[%7, %c0_9, %c0_10] : memref<1x8x768xf32, #tpu.memory_space<vmem>>, vector<1x8x768xf32>
    %9 = vector.shape_cast %8 : vector<1x8x768xf32> to vector<8x768xf32>
    %10 = arith.truncf %9 : vector<8x768xf32> to vector<8x768xbf16>
    %c0_11 = arith.constant 0 : index
    %c0_12 = arith.constant 0 : index
    %11 = vector.load %arg4[%c0_11, %c0_12] : memref<768x1024xbf16, #tpu.memory_space<vmem>>, vector<768x1024xbf16>
    %cst = arith.constant dense<0.000000e+00> : vector<8x1024xf32>
    %12 = tpu.matmul %10, %11, %cst {dimension_numbers = #tpu.dot_dimension_numbers<[1], [0], [0], [1], [0, 0, 1, 1], [], []>} : vector<8x768xbf16>, vector<768x1024xbf16>, vector<8x1024xf32> -> vector<8x1024xf32>
    %c0_13 = arith.constant 0 : index
    %c0_14 = arith.constant 0 : index
    %13 = vector.load %arg5[%c0_13, %c0_14] : memref<256x1024xf32, #tpu.memory_space<vmem>>, vector<256x1024xf32>
    %cst_15 = arith.constant dense<0.000000e+00> : vector<8x1024xf32>
    %14 = tpu.matmul %5, %13, %cst_15 {dimension_numbers = #tpu.dot_dimension_numbers<[1], [0], [0], [1], [0, 0, 1, 1], [], []>} : vector<8x256xf32>, vector<256x1024xf32>, vector<8x1024xf32> -> vector<8x1024xf32>
    %15 = arith.addf %12, %14 : vector<8x1024xf32>
    %16 = vector.broadcast %3 : vector<1x1024xf32> to vector<8x1024xf32>
    %17 = arith.addf %15, %16 : vector<8x1024xf32>
    %18 = vector.extract_strided_slice %17 {offsets = [0, 0], sizes = [8, 256], strides = [1, 1]} : vector<8x1024xf32> to vector<8x256xf32>
    %19 = arith.negf %18 : vector<8x256xf32>
    %20 = math.exp %19 : vector<8x256xf32>
    %cst_16 = arith.constant 1.000000e+00 : f32
    %21 = vector.broadcast %cst_16 : f32 to vector<8x256xf32>
    %22 = arith.addf %21, %20 : vector<8x256xf32>
    %23 = arith.divf %21, %22 : vector<8x256xf32>
    %24 = vector.extract_strided_slice %17 {offsets = [0, 256], sizes = [8, 256], strides = [1, 1]} : vector<8x1024xf32> to vector<8x256xf32>
    %25 = arith.negf %24 : vector<8x256xf32>
    %26 = math.exp %25 : vector<8x256xf32>
    %cst_17 = arith.constant 1.000000e+00 : f32
    %27 = vector.broadcast %cst_17 : f32 to vector<8x256xf32>
    %28 = arith.addf %27, %26 : vector<8x256xf32>
    %29 = arith.divf %27, %28 : vector<8x256xf32>
    %30 = vector.extract_strided_slice %17 {offsets = [0, 512], sizes = [8, 256], strides = [1, 1]} : vector<8x1024xf32> to vector<8x256xf32>
    %31 = math.tanh %30 : vector<8x256xf32>
    %32 = vector.extract_strided_slice %17 {offsets = [0, 768], sizes = [8, 256], strides = [1, 1]} : vector<8x1024xf32> to vector<8x256xf32>
    %33 = arith.negf %32 : vector<8x256xf32>
    %34 = math.exp %33 : vector<8x256xf32>
    %cst_18 = arith.constant 1.000000e+00 : f32
    %35 = vector.broadcast %cst_18 : f32 to vector<8x256xf32>
    %36 = arith.addf %35, %34 : vector<8x256xf32>
    %37 = arith.divf %35, %36 : vector<8x256xf32>
    %38 = arith.mulf %29, %6 : vector<8x256xf32>
    %39 = arith.mulf %23, %31 : vector<8x256xf32>
    %40 = arith.addf %38, %39 : vector<8x256xf32>
    %41 = math.tanh %40 : vector<8x256xf32>
    %42 = arith.mulf %37, %41 : vector<8x256xf32>
    %43 = arith.truncf %42 : vector<8x256xf32> to vector<8x256xbf16>
    %c0_19 = arith.constant 0 : index
    %c0_20 = arith.constant 0 : index
    %44 = vector.load %arg7[%c0_19, %c0_20] : memref<256x768xbf16, #tpu.memory_space<vmem>>, vector<256x768xbf16>
    %cst_21 = arith.constant dense<0.000000e+00> : vector<8x768xf32>
    %45 = tpu.matmul %43, %44, %cst_21 {dimension_numbers = #tpu.dot_dimension_numbers<[1], [0], [0], [1], [0, 0, 1, 1], [], []>} : vector<8x256xbf16>, vector<256x768xbf16>, vector<8x768xf32> -> vector<8x768xf32>
    %46 = vector.broadcast %4 : vector<1x768xf32> to vector<8x768xf32>
    %47 = arith.addf %45, %46 : vector<8x768xf32>
    %48 = arith.index_cast %c0_i32_8 : i32 to index
    %c0_22 = arith.constant 0 : index
    %c0_23 = arith.constant 0 : index
    %49 = vector.load %arg9[%48, %c0_22, %c0_23] : memref<1x8x768xf32, #tpu.memory_space<vmem>>, vector<1x8x768xf32>
    %50 = vector.shape_cast %49 : vector<1x8x768xf32> to vector<8x768xf32>
    %51 = vector.shape_cast %47 : vector<8x768xf32> to vector<1x8x768xf32>
    tpu.vector_store %arg9[%48, %c0_22, %c0_23], %51 {strides = array<i32>} : memref<1x8x768xf32, #tpu.memory_space<vmem>>, vector<1x8x768xf32>,
    %c1_i32 = arith.constant 1 : i32
    %c0_24 = arith.constant 0 : index
    %c0_25 = arith.constant 0 : index
    %52 = vector.load %arg12[%c0_24, %c0_25] : memref<8x256xf32, #tpu.memory_space<vmem>>, vector<8x256xf32>
    tpu.vector_store %arg12[%c0_24, %c0_25], %42 {strides = array<i32>} : memref<8x256xf32, #tpu.memory_space<vmem>>, vector<8x256xf32>,
    %c0_26 = arith.constant 0 : index
    %c0_27 = arith.constant 0 : index
    %53 = vector.load %arg13[%c0_26, %c0_27] : memref<8x256xf32, #tpu.memory_space<vmem>>, vector<8x256xf32>
    tpu.vector_store %arg13[%c0_26, %c0_27], %40 {strides = array<i32>} : memref<8x256xf32, #tpu.memory_space<vmem>>, vector<8x256xf32>,
    %c0_i32_28 = arith.constant 0 : i32
    %54 = arith.cmpi eq, %arg0, %c0_i32_28 : i32
    %55 = arith.extui %54 : i1 to i32
    %c0_i32_29 = arith.constant 0 : i32
    %56 = arith.cmpi ne, %55, %c0_i32_29 : i32
    scf.if %56 {
      %c0_30 = arith.constant 0 : index
      %c0_31 = arith.constant 0 : index
      %57 = vector.load %arg10[%c0_30, %c0_31] : memref<8x256xf32, #tpu.memory_space<vmem>>, vector<8x256xf32>
      tpu.vector_store %arg10[%c0_30, %c0_31], %42 {strides = array<i32>} : memref<8x256xf32, #tpu.memory_space<vmem>>, vector<8x256xf32>,
      %c0_32 = arith.constant 0 : index
      %c0_33 = arith.constant 0 : index
      %58 = vector.load %arg11[%c0_32, %c0_33] : memref<8x256xf32, #tpu.memory_space<vmem>>, vector<8x256xf32>
      tpu.vector_store %arg11[%c0_32, %c0_33], %40 {strides = array<i32>} : memref<8x256xf32, #tpu.memory_space<vmem>>, vector<8x256xf32>,
    } else {
    }
    return
  }
  func.func @transform_0(%arg0: i32) -> (i32, i32, i32) {
    %c0_i32 = arith.constant 0 : i32
    %c0_i32_0 = arith.constant 0 : i32
    %c0_i32_1 = arith.constant 0 : i32
    return %arg0, %c0_i32, %c0_i32_0 : i32, i32, i32
  }
  func.func @transform_1(%arg0: i32) -> (i32, i32) {
    %c0_i32 = arith.constant 0 : i32
    %c0_i32_0 = arith.constant 0 : i32
    %c0_i32_1 = arith.constant 0 : i32
    return %c0_i32, %c0_i32_0 : i32, i32
  }
  func.func @transform_2(%arg0: i32) -> (i32, i32) {
    %c0_i32 = arith.constant 0 : i32
    %c0_i32_0 = arith.constant 0 : i32
    %c0_i32_1 = arith.constant 0 : i32
    return %c0_i32, %c0_i32_0 : i32, i32
  }
  func.func @transform_3(%arg0: i32) -> (i32, i32) {
    %c0_i32 = arith.constant 0 : i32
    %c0_i32_0 = arith.constant 0 : i32
    %c0_i32_1 = arith.constant 0 : i32
    return %c0_i32, %c0_i32_0 : i32, i32
  }
  func.func @transform_4(%arg0: i32) -> (i32, i32) {
    %c0_i32 = arith.constant 0 : i32
    %c0_i32_0 = arith.constant 0 : i32
    %c0_i32_1 = arith.constant 0 : i32
    return %c0_i32, %c0_i32_0 : i32, i32
  }
  func.func @transform_5(%arg0: i32) -> (i32, i32) {
    %c0_i32 = arith.constant 0 : i32
    %c0_i32_0 = arith.constant 0 : i32
    %c0_i32_1 = arith.constant 0 : i32
    return %c0_i32, %c0_i32_0 : i32, i32
  }
  func.func @transform_6(%arg0: i32) -> (i32, i32) {
    %c0_i32 = arith.constant 0 : i32
    %c0_i32_0 = arith.constant 0 : i32
    %c0_i32_1 = arith.constant 0 : i32
    return %c0_i32, %c0_i32_0 : i32, i32
  }
  func.func @transform_7(%arg0: i32) -> (i32, i32) {
    %c0_i32 = arith.constant 0 : i32
    %c0_i32_0 = arith.constant 0 : i32
    %c0_i32_1 = arith.constant 0 : i32
    return %c0_i32, %c0_i32_0 : i32, i32
  }
  func.func @transform_8(%arg0: i32) -> (i32, i32, i32) {
    %c0_i32 = arith.constant 0 : i32
    %c0_i32_0 = arith.constant 0 : i32
    %c0_i32_1 = arith.constant 0 : i32
    return %arg0, %c0_i32, %c0_i32_0 : i32, i32, i32
  }
  func.func @transform_9(%arg0: i32) -> (i32, i32) {
    %c0_i32 = arith.constant 0 : i32
    %c0_i32_0 = arith.constant 0 : i32
    %c0_i32_1 = arith.constant 0 : i32
    return %c0_i32, %c0_i32_0 : i32, i32
  }
  func.func @transform_10(%arg0: i32) -> (i32, i32) {
    %c0_i32 = arith.constant 0 : i32
    %c0_i32_0 = arith.constant 0 : i32
    %c0_i32_1 = arith.constant 0 : i32
    return %c0_i32, %c0_i32_0 : i32, i32
  }
}

</mosaic_0001>

<llo_original>
// kernel: _decode_sequence_impl.1
$region0: #{_decode_sequence_impl.1}
  #allocation0 [shape = 'u32[]', space=smem, size = 0x4, offset = 0x4, fixed_abs, tag = 'smem constant byte address 0x4 - core index']
  #allocation1 [shape = 'u32[144,128]{1,0:T(1,128)}', space=vmem, size = 0x12000, scoped, tag = 'internal scratch']
  #allocation2 [shape = 'f32[8,256]{1,0:T(8,128)}', space=vmem, size = 0x2000, scoped, tag = 'scratch operand']
  #allocation3 [shape = 'f32[8,256]{1,0:T(8,128)}', space=vmem, size = 0x2000, scoped, tag = 'scratch operand']
  %s0 = inlined_call_operand.hbm [shape: f32[1,8,768], index: 0, kind: input, shape index: {}]
  %s1 = inlined_call_operand.hbm [shape: f32[8,256], index: 1, kind: input, shape index: {}, may-alias: {1,9}]
  %s2 = inlined_call_operand.hbm [shape: f32[8,256], index: 2, kind: input, shape index: {}, may-alias: {2,10}]
  %s3 = inlined_call_operand.hbm [shape: bf16[768,1024], index: 3, kind: input, shape index: {}]
  %s4 = inlined_call_operand.hbm [shape: f32[256,1024], index: 4, kind: input, shape index: {}]
  %s5 = inlined_call_operand.hbm [shape: f32[1,1024], index: 5, kind: input, shape index: {}]
  %s6 = inlined_call_operand.hbm [shape: bf16[256,768], index: 6, kind: input, shape index: {}]
  %s7 = inlined_call_operand.hbm [shape: f32[1,768], index: 7, kind: input, shape index: {}]
  %s8 = inlined_call_operand.hbm [shape: f32[1,8,768], index: 8, kind: output, shape index: {0}]
  %s9 = inlined_call_operand.hbm [shape: f32[8,256], index: 9, kind: output, shape index: {1}, may-alias: {1,9}]
  %s10 = inlined_call_operand.hbm [shape: f32[8,256], index: 10, kind: output, shape index: {2}, may-alias: {2,10}]
  %11 = xla_tuple %s8, %s9, %s10
  %s12 = sld [smem:[#allocation0]]
  $region98: #{_decode_sequence_impl.1} parent=0
    _
  %s14 = ssub.s32 1, %s12
  %s15 = scalar_select 0, %s14, %s12
  $region1: #{_decode_sequence_impl.1} parent=0
    #allocation4 [shape = 'u8[24576]{0}', space=vmem, size = 0x6000, scoped, tag = 'input window, operand 0, single buffered']
    #allocation5 [shape = 's32[1]{0}', space=sflag, size = 0x4, scoped, tag = 'scoped memory for _decode_sequence_impl.1']
    #allocation6 [shape = 's32[1]{0}', space=sflag, size = 0x4, scoped, tag = 'scoped memory for _decode_sequence_impl.1']
    #allocation7 [shape = 'u8[8192]{0}', space=vmem, size = 0x2000, scoped, tag = 'input window, operand 1, single buffered']
    #allocation8 [shape = 's32[1]{0}', space=sflag, size = 0x4, scoped, tag = 'scoped memory for _decode_sequence_impl.1']
    #allocation9 [shape = 'u8[8192]{0}', space=vmem, size = 0x2000, scoped, tag = 'input window, operand 2, single buffered']
    #allocation10 [shape = 'u8[1572864]{0}', space=vmem, size = 0x180000, scoped, tag = 'input window, operand 3, single buffered']
    #allocation11 [shape = 's32[1]{0}', space=sflag, size = 0x4, scoped, tag = 'scoped memory for _decode_sequence_impl.1']
    #allocation12 [shape = 'u8[1048576]{0}', space=vmem, size = 0x100000, scoped, tag = 'input window, operand 4, single buffered']
    #allocation13 [shape = 'u8[4096]{0}', space=vmem, size = 0x1000, scoped, tag = 'input window, operand 5, single buffered']
    #allocation14 [shape = 's32[1]{0}', space=sflag, size = 0x4, scoped, tag = 'scoped memory for _decode_sequence_impl.1']
    #allocation15 [shape = 'u8[393216]{0}', space=vmem, size = 0x60000, scoped, tag = 'input window, operand 6, single buffered']
    #allocation16 [shape = 'u8[3072]{0}', space=vmem, size = 0xc00, scoped, tag = 'input window, operand 7, single buffered']
    #allocation17 [shape = 's32[1]{0}', space=sflag, size = 0x4, scoped, tag = 'scoped memory for _decode_sequence_impl.1']
    #allocation18 [shape = 'u8[24576]{0}', space=vmem, size = 0x6000, scoped, tag = 'output window, operand 0, single buffered']
    #allocation19 [shape = 'u8[8192]{0}', space=vmem, size = 0x2000, scoped, tag = 'output window, operand 1, single buffered']
    #allocation20 [shape = 's32[1]{0}', space=sflag, size = 0x4, scoped, tag = 'scoped memory for _decode_sequence_impl.1']
    #allocation21 [shape = 'u8[8192]{0}', space=vmem, size = 0x2000, scoped, tag = 'output window, operand 2, single buffered']
    %16 = vsyncpa [#allocation5], 0
    %17 = vsyncpa [#allocation8], 0
    %18 = vsyncpa [#allocation11], 0
    %19 = vsyncpa [#allocation14], 0
    %20 = vsyncpa [#allocation17], 0
    %21 = vsyncpa [#allocation6], 0
    %22 = vsyncpa [#allocation20], 0
    // Predicated region
    $region2: #{_decode_sequence_impl.1} parent=1 // pred_check
      _
    $region3: #{_decode_sequence_impl.1} parent=1 // pred_check_branch
      %24 = sbr.rel (0) target = $region5
    $region4: #{_decode_sequence_impl.1} parent=1 // pred_region
      %s26 = ssub.s32 768, 768
      %27 = vsyncadd [#allocation5], %s26
      %s29 = sshll.u32 [#allocation4], 4
      %s30 = int_to_ptr.vmem [resolvable:$true] %s29
      %32 = dma.hbm_to_vmem [thread:$0]  %s0, 768, %s30, [#allocation5]
    $region5: #{_decode_sequence_impl.1} parent=1 // pred_fallthru
      _
    // Predicated region
    $region6: #{_decode_sequence_impl.1} parent=1 // pred_check
      _
    $region7: #{_decode_sequence_impl.1} parent=1 // pred_check_branch
      %34 = sbr.rel (0) target = $region9
    $region8: #{_decode_sequence_impl.1} parent=1 // pred_region
      %s36 = ssub.s32 256, 256
      %37 = vsyncadd [#allocation8], %s36
      %s39 = sshll.u32 [#allocation7], 4
      %s40 = int_to_ptr.vmem [resolvable:$true] %s39
      %42 = dma.hbm_to_vmem [thread:$0]  %s1, 256, %s40, [#allocation8]
    $region9: #{_decode_sequence_impl.1} parent=1 // pred_fallthru
      _
    // Predicated region
    $region10: #{_decode_sequence_impl.1} parent=1 // pred_check
      _
    $region11: #{_decode_sequence_impl.1} parent=1 // pred_check_branch
      %44 = sbr.rel (0) target = $region13
    $region12: #{_decode_sequence_impl.1} parent=1 // pred_region
      %s46 = ssub.s32 256, 256
      %47 = vsyncadd [#allocation8], %s46
      %s49 = sshll.u32 [#allocation9], 4
      %s50 = int_to_ptr.vmem [resolvable:$true] %s49
      %52 = dma.hbm_to_vmem [thread:$0]  %s2, 256, %s50, [#allocation8]
    $region13: #{_decode_sequence_impl.1} parent=1 // pred_fallthru
      _
    // Predicated region
    $region14: #{_decode_sequence_impl.1} parent=1 // pred_check
      _
    $region15: #{_decode_sequence_impl.1} parent=1 // pred_check_branch
      %54 = sbr.rel (0) target = $region17
    $region16: #{_decode_sequence_impl.1} parent=1 // pred_region
      %s56 = ssub.s32 49152, 49152
      %57 = vsyncadd [#allocation11], %s56
      %s58 = sshll.u32 [#allocation10], 4
      %s59 = int_to_ptr.vmem [resolvable:$true] %s58
      %64 = dma.hbm_to_vmem [thread:$0]  %s3, 49152, %s59, [#allocation11], 512, 512, 32
    $region17: #{_decode_sequence_impl.1} parent=1 // pred_fallthru
      _
    // Predicated region
    $region18: #{_decode_sequence_impl.1} parent=1 // pred_check
      _
    $region19: #{_decode_sequence_impl.1} parent=1 // pred_check_branch
      %66 = sbr.rel (0) target = $region21
    $region20: #{_decode_sequence_impl.1} parent=1 // pred_region
      %s68 = ssub.s32 32768, 32768
      %69 = vsyncadd [#allocation11], %s68
      %s70 = sshll.u32 [#allocation12], 4
      %s71 = int_to_ptr.vmem [resolvable:$true] %s70
      %76 = dma.hbm_to_vmem [thread:$0]  %s4, 32768, %s71, [#allocation11], 1024, 1024, 64
    $region21: #{_decode_sequence_impl.1} parent=1 // pred_fallthru
      _
    // Predicated region
    $region22: #{_decode_sequence_impl.1} parent=1 // pred_check
      _
    $region23: #{_decode_sequence_impl.1} parent=1 // pred_check_branch
      %78 = sbr.rel (0) target = $region25
    $region24: #{_decode_sequence_impl.1} parent=1 // pred_region
      %s80 = ssub.s32 128, 128
      %81 = vsyncadd [#allocation14], %s80
      %s83 = sshll.u32 [#allocation13], 4
      %s84 = int_to_ptr.vmem [resolvable:$true] %s83
      %86 = dma.hbm_to_vmem [thread:$0]  %s5, 128, %s84, [#allocation14]
    $region25: #{_decode_sequence_impl.1} parent=1 // pred_fallthru
      _
    // Predicated region
    $region26: #{_decode_sequence_impl.1} parent=1 // pred_check
      _
    $region27: #{_decode_sequence_impl.1} parent=1 // pred_check_branch
      %88 = sbr.rel (0) target = $region29
    $region28: #{_decode_sequence_impl.1} parent=1 // pred_region
      %s90 = ssub.s32 12288, 12288
      %91 = vsyncadd [#allocation14], %s90
      %s92 = sshll.u32 [#allocation15], 4
      %s93 = int_to_ptr.vmem [resolvable:$true] %s92
      %98 = dma.hbm_to_vmem [thread:$0]  %s6, 12288, %s93, [#allocation14], 384, 384, 24
    $region29: #{_decode_sequence_impl.1} parent=1 // pred_fallthru
      _
    // Predicated region
    $region30: #{_decode_sequence_impl.1} parent=1 // pred_check
      _
    $region31: #{_decode_sequence_impl.1} parent=1 // pred_check_branch
      %100 = sbr.rel (0) target = $region33
    $region32: #{_decode_sequence_impl.1} parent=1 // pred_region
      %s102 = ssub.s32 96, 96
      %103 = vsyncadd [#allocation17], %s102
      %s105 = sshll.u32 [#allocation16], 4
      %s106 = int_to_ptr.vmem [resolvable:$true] %s105
      %108 = dma.hbm_to_vmem [thread:$0]  %s7, 96, %s106, [#allocation17]
    $region33: #{_decode_sequence_impl.1} parent=1 // pred_fallthru
      _
    // Predicated region
    $region34: #{_decode_sequence_impl.1} parent=1 // pred_check
      _
    $region35: #{_decode_sequence_impl.1} parent=1 // pred_check_branch
      %110 = sbr.rel (0) target = $region37
    $region36: #{_decode_sequence_impl.1} parent=1 // pred_region
      %111 = dma.done [#allocation5], 768
    $region37: #{_decode_sequence_impl.1} parent=1 // pred_fallthru
      _
    // Predicated region
    $region38: #{_decode_sequence_impl.1} parent=1 // pred_check
      _
    $region39: #{_decode_sequence_impl.1} parent=1 // pred_check_branch
      %113 = sbr.rel (0) target = $region41
    $region40: #{_decode_sequence_impl.1} parent=1 // pred_region
      %114 = dma.done [#allocation8], 256
    $region41: #{_decode_sequence_impl.1} parent=1 // pred_fallthru
      _
    // Predicated region
    $region42: #{_decode_sequence_impl.1} parent=1 // pred_check
      _
    $region43: #{_decode_sequence_impl.1} parent=1 // pred_check_branch
      %116 = sbr.rel (0) target = $region45
    $region44: #{_decode_sequence_impl.1} parent=1 // pred_region
      %117 = dma.done [#allocation8], 256
    $region45: #{_decode_sequence_impl.1} parent=1 // pred_fallthru
      _
    // Predicated region
    $region46: #{_decode_sequence_impl.1} parent=1 // pred_check
      _
    $region47: #{_decode_sequence_impl.1} parent=1 // pred_check_branch
      %119 = sbr.rel (0) target = $region49
    $region48: #{_decode_sequence_impl.1} parent=1 // pred_region
      %120 = dma.done [#allocation11], 49152
    $region49: #{_decode_sequence_impl.1} parent=1 // pred_fallthru
      _
    // Predicated region
    $region50: #{_decode_sequence_impl.1} parent=1 // pred_check
      _
    $region51: #{_decode_sequence_impl.1} parent=1 // pred_check_branch
      %122 = sbr.rel (0) target = $region53
    $region52: #{_decode_sequence_impl.1} parent=1 // pred_region
      %123 = dma.done [#allocation11], 32768
    $region53: #{_decode_sequence_impl.1} parent=1 // pred_fallthru
      _
    // Predicated region
    $region54: #{_decode_sequence_impl.1} parent=1 // pred_check
      _
    $region55: #{_decode_sequence_impl.1} parent=1 // pred_check_branch
      %125 = sbr.rel (0) target = $region57
    $region56: #{_decode_sequence_impl.1} parent=1 // pred_region
      %126 = dma.done [#allocation14], 128
    $region57: #{_decode_sequence_impl.1} parent=1 // pred_fallthru
      _
    // Predicated region
    $region58: #{_decode_sequence_impl.1} parent=1 // pred_check
      _
    $region59: #{_decode_sequence_impl.1} parent=1 // pred_check_branch
      %128 = sbr.rel (0) target = $region61
    $region60: #{_decode_sequence_impl.1} parent=1 // pred_region
      %129 = dma.done [#allocation14], 12288
    $region61: #{_decode_sequence_impl.1} parent=1 // pred_fallthru
      _
    // Predicated region
    $region62: #{_decode_sequence_impl.1} parent=1 // pred_check
      _
    $region63: #{_decode_sequence_impl.1} parent=1 // pred_check_branch
      %131 = sbr.rel (0) target = $region65
    $region64: #{_decode_sequence_impl.1} parent=1 // pred_region
      %132 = dma.done [#allocation17], 96
    $region65: #{_decode_sequence_impl.1} parent=1 // pred_fallthru
      _
    %p133 = scmp.eq.s32.totalorder 0, 0
    // Predicated region
    $region66: #{_decode_sequence_impl.1} parent=1 // pred_check
      %p134 = pneg %p133
    $region67: #{_decode_sequence_impl.1} parent=1 // pred_check_branch
      %136 = sbr.rel (%p134) target = $region69
    $region68: #{_decode_sequence_impl.1} parent=1 // pred_region
      %v137 = vld [vmem:[#allocation7] sm:$0xff]
      %v138 = vld [vmem:[#allocation7 + $0x8] sm:$0xff]
      %139 = vst [vmem:[#allocation2] sm:$0xff] %v137
      %140 = vst [vmem:[#allocation2 + $0x8] sm:$0xff] %v138
      %v141 = vld [vmem:[#allocation9] sm:$0xff]
      %v142 = vld [vmem:[#allocation9 + $0x8] sm:$0xff]
      %143 = vst [vmem:[#allocation3] sm:$0xff] %v141
      %144 = vst [vmem:[#allocation3 + $0x8] sm:$0xff] %v142
    $region69: #{_decode_sequence_impl.1} parent=1 // pred_fallthru
      _
    %v145 = vld [vmem:[#allocation13] sm:$0xff]
    %v146 = vld [vmem:[#allocation16] sm:$0x3f]
    %v147 = vld [vmem:[#allocation2] sm:$0xff]
    %v148 = vld [vmem:[#allocation2 + $0x8] sm:$0xff]
    %v149 = vld [vmem:[#allocation3] sm:$0xff]
    %v150 = vld [vmem:[#allocation3 + $0x8] sm:$0xff]
    %v151 = vld [vmem:[#allocation4] sm:$0xff]
    %v152 = vld [vmem:[#allocation4 + $0x8] sm:$0xff]
    %v153 = vld [vmem:[#allocation4 + $0x10] sm:$0xff]
    %v154 = vld [vmem:[#allocation4 + $0x18] sm:$0xff]
    %v155 = vld [vmem:[#allocation4 + $0x20] sm:$0xff]
    %v156 = vld [vmem:[#allocation4 + $0x28] sm:$0xff]
    %v157 = vpack.c.bf16 %v151, %v151
    %v158 = vpack.c.bf16 %v152, %v152
    %v159 = vpack.c.bf16 %v153, %v153
    %v160 = vpack.c.bf16 %v154, %v154
    %v161 = vpack.c.bf16 %v155, %v155
    %v162 = vpack.c.bf16 %v156, %v156
    %v163 = vld [vmem:[#allocation10] sm:$0xff]
    %v164 = vld [vmem:[#allocation10 + $0x8] sm:$0xff]
    %v165 = vld [vmem:[#allocation10 + $0x10] sm:$0xff]
    %v166 = vld [vmem:[#allocation10 + $0x18] sm:$0xff]
    %v167 = vld [vmem:[#allocation10 + $0x20] sm:$0xff]
    %v168 = vld [vmem:[#allocation10 + $0x28] sm:$0xff]
    %v169 = vld [vmem:[#allocation10 + $0x30] sm:$0xff]
    %v170 = vld [vmem:[#allocation10 + $0x38] sm:$0xff]
    %v171 = vld [vmem:[#allocation10 + $0x40] sm:$0xff]
    %v172 = vld [vmem:[#allocation10 + $0x48] sm:$0xff]
    %v173 = vld [vmem:[#allocation10 + $0x50] sm:$0xff]
    %v174 = vld [vmem:[#allocation10 + $0x58] sm:$0xff]
    %v175 = vld [vmem:[#allocation10 + $0x60] sm:$0xff]
    %v176 = vld [vmem:[#allocation10 + $0x68] sm:$0xff]
    %v177 = vld [vmem:[#allocation10 + $0x70] sm:$0xff]
    %v178 = vld [vmem:[#allocation10 + $0x78] sm:$0xff]
    %v179 = vld [vmem:[#allocation10 + $0x80] sm:$0xff]
    %v180 = vld [vmem:[#allocation10 + $0x88] sm:$0xff]
    %v181 = vld [vmem:[#allocation10 + $0x90] sm:$0xff]
    %v182 = vld [vmem:[#allocation10 + $0x98] sm:$0xff]
    %v183 = vld [vmem:[#allocation10 + $0xa0] sm:$0xff]
    %v184 = vld [vmem:[#allocation10 + $0xa8] sm:$0xff]
    %v185 = vld [vmem:[#allocation10 + $0xb0] sm:$0xff]
    %v186 = vld [vmem:[#allocation10 + $0xb8] sm:$0xff]
    %v187 = vld [vmem:[#allocation10 + $0xc0] sm:$0xff]
    %v188 = vld [vmem:[#allocation10 + $0xc8] sm:$0xff]
    %v189 = vld [vmem:[#allocation10 + $0xd0] sm:$0xff]
    %v190 = vld [vmem:[#allocation10 + $0xd8] sm:$0xff]
    %v191 = vld [vmem:[#allocation10 + $0xe0] sm:$0xff]
    %v192 = vld [vmem:[#allocation10 + $0xe8] sm:$0xff]
    %v193 = vld [vmem:[#allocation10 + $0xf0] sm:$0xff]
    %v194 = vld [vmem:[#allocation10 + $0xf8] sm:$0xff]
    %v195 = vld [vmem:[#allocation10 + $0x100] sm:$0xff]
    %v196 = vld [vmem:[#allocation10 + $0x108] sm:$0xff]
    %v197 = vld [vmem:[#allocation10 + $0x110] sm:$0xff]
    %v198 = vld [vmem:[#allocation10 + $0x118] sm:$0xff]
    %v199 = vld [vmem:[#allocation10 + $0x120] sm:$0xff]
    %v200 = vld [vmem:[#allocation10 + $0x128] sm:$0xff]
    %v201 = vld [vmem:[#allocation10 + $0x130] sm:$0xff]
    %v202 = vld [vmem:[#allocation10 + $0x138] sm:$0xff]
    %v203 = vld [vmem:[#allocation10 + $0x140] sm:$0xff]
    %v204 = vld [vmem:[#allocation10 + $0x148] sm:$0xff]
    %v205 = vld [vmem:[#allocation10 + $0x150] sm:$0xff]
    %v206 = vld [vmem:[#allocation10 + $0x158] sm:$0xff]
    %v207 = vld [vmem:[#allocation10 + $0x160] sm:$0xff]
    %v208 = vld [vmem:[#allocation10 + $0x168] sm:$0xff]
    %v209 = vld [vmem:[#allocation10 + $0x170] sm:$0xff]
    %v210 = vld [vmem:[#allocation10 + $0x178] sm:$0xff]
    %v211 = vld [vmem:[#allocation10 + $0x180] sm:$0xff]
    %v212 = vld [vmem:[#allocation10 + $0x188] sm:$0xff]
    %v213 = vld [vmem:[#allocation10 + $0x190] sm:$0xff]
    %v214 = vld [vmem:[#allocation10 + $0x198] sm:$0xff]
    %v215 = vld [vmem:[#allocation10 + $0x1a0] sm:$0xff]
    %v216 = vld [vmem:[#allocation10 + $0x1a8] sm:$0xff]
    %v217 = vld [vmem:[#allocation10 + $0x1b0] sm:$0xff]
    %v218 = vld [vmem:[#allocation10 + $0x1b8] sm:$0xff]
    %v219 = vld [vmem:[#allocation10 + $0x1c0] sm:$0xff]
    %v220 = vld [vmem:[#allocation10 + $0x1c8] sm:$0xff]
    %v221 = vld [vmem:[#allocation10 + $0x1d0] sm:$0xff]
    %v222 = vld [vmem:[#allocation10 + $0x1d8] sm:$0xff]
    %v223 = vld [vmem:[#allocation10 + $0x1e0] sm:$0xff]
    %v224 = vld [vmem:[#allocation10 + $0x1e8] sm:$0xff]
    %v225 = vld [vmem:[#allocation10 + $0x1f0] sm:$0xff]
    %v226 = vld [vmem:[#allocation10 + $0x1f8] sm:$0xff]
    %v227 = vld [vmem:[#allocation10 + $0x200] sm:$0xff]
    %v228 = vld [vmem:[#allocation10 + $0x208] sm:$0xff]
    %v229 = vld [vmem:[#allocation10 + $0x210] sm:$0xff]
    %v230 = vld [vmem:[#allocation10 + $0x218] sm:$0xff]
    %v231 = vld [vmem:[#allocation10 + $0x220] sm:$0xff]
    %v232 = vld [vmem:[#allocation10 + $0x228] sm:$0xff]
    %v233 = vld [vmem:[#allocation10 + $0x230] sm:$0xff]
    %v234 = vld [vmem:[#allocation10 + $0x238] sm:$0xff]
    %v235 = vld [vmem:[#allocation10 + $0x240] sm:$0xff]
    %v236 = vld [vmem:[#allocation10 + $0x248] sm:$0xff]
    %v237 = vld [vmem:[#allocation10 + $0x250] sm:$0xff]
    %v238 = vld [vmem:[#allocation10 + $0x258] sm:$0xff]
    %v239 = vld [vmem:[#allocation10 + $0x260] sm:$0xff]
    %v240 = vld [vmem:[#allocation10 + $0x268] sm:$0xff]
    %v241 = vld [vmem:[#allocation10 + $0x270] sm:$0xff]
    %v242 = vld [vmem:[#allocation10 + $0x278] sm:$0xff]
    %v243 = vld [vmem:[#allocation10 + $0x280] sm:$0xff]
    %v244 = vld [vmem:[#allocation10 + $0x288] sm:$0xff]
    %v245 = vld [vmem:[#allocation10 + $0x290] sm:$0xff]
    %v246 = vld [vmem:[#allocation10 + $0x298] sm:$0xff]
    %v247 = vld [vmem:[#allocation10 + $0x2a0] sm:$0xff]
    %v248 = vld [vmem:[#allocation10 + $0x2a8] sm:$0xff]
    %v249 = vld [vmem:[#allocation10 + $0x2b0] sm:$0xff]
    %v250 = vld [vmem:[#allocation10 + $0x2b8] sm:$0xff]
    %v251 = vld [vmem:[#allocation10 + $0x2c0] sm:$0xff]
    %v252 = vld [vmem:[#allocation10 + $0x2c8] sm:$0xff]
    %v253 = vld [vmem:[#allocation10 + $0x2d0] sm:$0xff]
    %v254 = vld [vmem:[#allocation10 + $0x2d8] sm:$0xff]
    %v255 = vld [vmem:[#allocation10 + $0x2e0] sm:$0xff]
    %v256 = vld [vmem:[#allocation10 + $0x2e8] sm:$0xff]
    %v257 = vld [vmem:[#allocation10 + $0x2f0] sm:$0xff]
    %v258 = vld [vmem:[#allocation10 + $0x2f8] sm:$0xff]
    %v259 = vld [vmem:[#allocation10 + $0x300] sm:$0xff]
    %v260 = vld [vmem:[#allocation10 + $0x308] sm:$0xff]
    %v261 = vld [vmem:[#allocation10 + $0x310] sm:$0xff]
    %v262 = vld [vmem:[#allocation10 + $0x318] sm:$0xff]
    %v263 = vld [vmem:[#allocation10 + $0x320] sm:$0xff]
    %v264 = vld [vmem:[#allocation10 + $0x328] sm:$0xff]
    %v265 = vld [vmem:[#allocation10 + $0x330] sm:$0xff]
    %v266 = vld [vmem:[#allocation10 + $0x338] sm:$0xff]
    %v267 = vld [vmem:[#allocation10 + $0x340] sm:$0xff]
    %v268 = vld [vmem:[#allocation10 + $0x348] sm:$0xff]
    %v269 = vld [vmem:[#allocation10 + $0x350] sm:$0xff]
    %v270 = vld [vmem:[#allocation10 + $0x358] sm:$0xff]
    %v271 = vld [vmem:[#allocation10 + $0x360] sm:$0xff]
    %v272 = vld [vmem:[#allocation10 + $0x368] sm:$0xff]
    %v273 = vld [vmem:[#allocation10 + $0x370] sm:$0xff]
    %v274 = vld [vmem:[#allocation10 + $0x378] sm:$0xff]
    %v275 = vld [vmem:[#allocation10 + $0x380] sm:$0xff]
    %v276 = vld [vmem:[#allocation10 + $0x388] sm:$0xff]
    %v277 = vld [vmem:[#allocation10 + $0x390] sm:$0xff]
    %v278 = vld [vmem:[#allocation10 + $0x398] sm:$0xff]
    %v279 = vld [vmem:[#allocation10 + $0x3a0] sm:$0xff]
    %v280 = vld [vmem:[#allocation10 + $0x3a8] sm:$0xff]
    %v281 = vld [vmem:[#allocation10 + $0x3b0] sm:$0xff]
    %v282 = vld [vmem:[#allocation10 + $0x3b8] sm:$0xff]
    %v283 = vld [vmem:[#allocation10 + $0x3c0] sm:$0xff]
    %v284 = vld [vmem:[#allocation10 + $0x3c8] sm:$0xff]
    %v285 = vld [vmem:[#allocation10 + $0x3d0] sm:$0xff]
    %v286 = vld [vmem:[#allocation10 + $0x3d8] sm:$0xff]
    %v287 = vld [vmem:[#allocation10 + $0x3e0] sm:$0xff]
    %v288 = vld [vmem:[#allocation10 + $0x3e8] sm:$0xff]
    %v289 = vld [vmem:[#allocation10 + $0x3f0] sm:$0xff]
    %v290 = vld [vmem:[#allocation10 + $0x3f8] sm:$0xff]
    %v291 = vld [vmem:[#allocation10 + $0x400] sm:$0xff]
    %v292 = vld [vmem:[#allocation10 + $0x408] sm:$0xff]
    %v293 = vld [vmem:[#allocation10 + $0x410] sm:$0xff]
    %v294 = vld [vmem:[#allocation10 + $0x418] sm:$0xff]
    %v295 = vld [vmem:[#allocation10 + $0x420] sm:$0xff]
    %v296 = vld [vmem:[#allocation10 + $0x428] sm:$0xff]
    %v297 = vld [vmem:[#allocation10 + $0x430] sm:$0xff]
    %v298 = vld [vmem:[#allocation10 + $0x438] sm:$0xff]
    %v299 = vld [vmem:[#allocation10 + $0x440] sm:$0xff]
    %v300 = vld [vmem:[#allocation10 + $0x448] sm:$0xff]
    %v301 = vld [vmem:[#allocation10 + $0x450] sm:$0xff]
    %v302 = vld [vmem:[#allocation10 + $0x458] sm:$0xff]
    %v303 = vld [vmem:[#allocation10 + $0x460] sm:$0xff]
    %v304 = vld [vmem:[#allocation10 + $0x468] sm:$0xff]
    %v305 = vld [vmem:[#allocation10 + $0x470] sm:$0xff]
    %v306 = vld [vmem:[#allocation10 + $0x478] sm:$0xff]
    %v307 = vld [vmem:[#allocation10 + $0x480] sm:$0xff]
    %v308 = vld [vmem:[#allocation10 + $0x488] sm:$0xff]
    %v309 = vld [vmem:[#allocation10 + $0x490] sm:$0xff]
    %v310 = vld [vmem:[#allocation10 + $0x498] sm:$0xff]
    %v311 = vld [vmem:[#allocation10 + $0x4a0] sm:$0xff]
    %v312 = vld [vmem:[#allocation10 + $0x4a8] sm:$0xff]
    %v313 = vld [vmem:[#allocation10 + $0x4b0] sm:$0xff]
    %v314 = vld [vmem:[#allocation10 + $0x4b8] sm:$0xff]
    %v315 = vld [vmem:[#allocation10 + $0x4c0] sm:$0xff]
    %v316 = vld [vmem:[#allocation10 + $0x4c8] sm:$0xff]
    %v317 = vld [vmem:[#allocation10 + $0x4d0] sm:$0xff]
    %v318 = vld [vmem:[#allocation10 + $0x4d8] sm:$0xff]
    %v319 = vld [vmem:[#allocation10 + $0x4e0] sm:$0xff]
    %v320 = vld [vmem:[#allocation10 + $0x4e8] sm:$0xff]
    %v321 = vld [vmem:[#allocation10 + $0x4f0] sm:$0xff]
    %v322 = vld [vmem:[#allocation10 + $0x4f8] sm:$0xff]
    %v323 = vld [vmem:[#allocation10 + $0x500] sm:$0xff]
    %v324 = vld [vmem:[#allocation10 + $0x508] sm:$0xff]
    %v325 = vld [vmem:[#allocation10 + $0x510] sm:$0xff]
    %v326 = vld [vmem:[#allocation10 + $0x518] sm:$0xff]
    %v327 = vld [vmem:[#allocation10 + $0x520] sm:$0xff]
    %v328 = vld [vmem:[#allocation10 + $0x528] sm:$0xff]
    %v329 = vld [vmem:[#allocation10 + $0x530] sm:$0xff]
    %v330 = vld [vmem:[#allocation10 + $0x538] sm:$0xff]
    %v331 = vld [vmem:[#allocation10 + $0x540] sm:$0xff]
    %v332 = vld [vmem:[#allocation10 + $0x548] sm:$0xff]
    %v333 = vld [vmem:[#allocation10 + $0x550] sm:$0xff]
    %v334 = vld [vmem:[#allocation10 + $0x558] sm:$0xff]
    %v335 = vld [vmem:[#allocation10 + $0x560] sm:$0xff]
    %v336 = vld [vmem:[#allocation10 + $0x568] sm:$0xff]
    %v337 = vld [vmem:[#allocation10 + $0x570] sm:$0xff]
    %v338 = vld [vmem:[#allocation10 + $0x578] sm:$0xff]
    %v339 = vld [vmem:[#allocation10 + $0x580] sm:$0xff]
    %v340 = vld [vmem:[#allocation10 + $0x588] sm:$0xff]
    %v341 = vld [vmem:[#allocation10 + $0x590] sm:$0xff]
    %v342 = vld [vmem:[#allocation10 + $0x598] sm:$0xff]
    %v343 = vld [vmem:[#allocation10 + $0x5a0] sm:$0xff]
    %v344 = vld [vmem:[#allocation10 + $0x5a8] sm:$0xff]
    %v345 = vld [vmem:[#allocation10 + $0x5b0] sm:$0xff]
    %v346 = vld [vmem:[#allocation10 + $0x5b8] sm:$0xff]
    %v347 = vld [vmem:[#allocation10 + $0x5c0] sm:$0xff]
    %v348 = vld [vmem:[#allocation10 + $0x5c8] sm:$0xff]
    %v349 = vld [vmem:[#allocation10 + $0x5d0] sm:$0xff]
    %v350 = vld [vmem:[#allocation10 + $0x5d8] sm:$0xff]
    %v351 = vld [vmem:[#allocation10 + $0x5e0] sm:$0xff]
    %v352 = vld [vmem:[#allocation10 + $0x5e8] sm:$0xff]
    %v353 = vld [vmem:[#allocation10 + $0x5f0] sm:$0xff]
    %v354 = vld [vmem:[#allocation10 + $0x5f8] sm:$0xff]
    %v355 = vld [vmem:[#allocation10 + $0x600] sm:$0xff]
    %v356 = vld [vmem:[#allocation10 + $0x608] sm:$0xff]
    %v357 = vld [vmem:[#allocation10 + $0x610] sm:$0xff]
    %v358 = vld [vmem:[#allocation10 + $0x618] sm:$0xff]
    %v359 = vld [vmem:[#allocation10 + $0x620] sm:$0xff]
    %v360 = vld [vmem:[#allocation10 + $0x628] sm:$0xff]
    %v361 = vld [vmem:[#allocation10 + $0x630] sm:$0xff]
    %v362 = vld [vmem:[#allocation10 + $0x638] sm:$0xff]
    %v363 = vld [vmem:[#allocation10 + $0x640] sm:$0xff]
    %v364 = vld [vmem:[#allocation10 + $0x648] sm:$0xff]
    %v365 = vld [vmem:[#allocation10 + $0x650] sm:$0xff]
    %v366 = vld [vmem:[#allocation10 + $0x658] sm:$0xff]
    %v367 = vld [vmem:[#allocation10 + $0x660] sm:$0xff]
    %v368 = vld [vmem:[#allocation10 + $0x668] sm:$0xff]
    %v369 = vld [vmem:[#allocation10 + $0x670] sm:$0xff]
    %v370 = vld [vmem:[#allocation10 + $0x678] sm:$0xff]
    %v371 = vld [vmem:[#allocation10 + $0x680] sm:$0xff]
    %v372 = vld [vmem:[#allocation10 + $0x688] sm:$0xff]
    %v373 = vld [vmem:[#allocation10 + $0x690] sm:$0xff]
    %v374 = vld [vmem:[#allocation10 + $0x698] sm:$0xff]
    %v375 = vld [vmem:[#allocation10 + $0x6a0] sm:$0xff]
    %v376 = vld [vmem:[#allocation10 + $0x6a8] sm:$0xff]
    %v377 = vld [vmem:[#allocation10 + $0x6b0] sm:$0xff]
    %v378 = vld [vmem:[#allocation10 + $0x6b8] sm:$0xff]
    %v379 = vld [vmem:[#allocation10 + $0x6c0] sm:$0xff]
    %v380 = vld [vmem:[#allocation10 + $0x6c8] sm:$0xff]
    %v381 = vld [vmem:[#allocation10 + $0x6d0] sm:$0xff]
    %v382 = vld [vmem:[#allocation10 + $0x6d8] sm:$0xff]
    %v383 = vld [vmem:[#allocation10 + $0x6e0] sm:$0xff]
    %v384 = vld [vmem:[#allocation10 + $0x6e8] sm:$0xff]
    %v385 = vld [vmem:[#allocation10 + $0x6f0] sm:$0xff]
    %v386 = vld [vmem:[#allocation10 + $0x6f8] sm:$0xff]
    %v387 = vld [vmem:[#allocation10 + $0x700] sm:$0xff]
    %v388 = vld [vmem:[#allocation10 + $0x708] sm:$0xff]
    %v389 = vld [vmem:[#allocation10 + $0x710] sm:$0xff]
    %v390 = vld [vmem:[#allocation10 + $0x718] sm:$0xff]
    %v391 = vld [vmem:[#allocation10 + $0x720] sm:$0xff]
    %v392 = vld [vmem:[#allocation10 + $0x728] sm:$0xff]
    %v393 = vld [vmem:[#allocation10 + $0x730] sm:$0xff]
    %v394 = vld [vmem:[#allocation10 + $0x738] sm:$0xff]
    %v395 = vld [vmem:[#allocation10 + $0x740] sm:$0xff]
    %v396 = vld [vmem:[#allocation10 + $0x748] sm:$0xff]
    %v397 = vld [vmem:[#allocation10 + $0x750] sm:$0xff]
    %v398 = vld [vmem:[#allocation10 + $0x758] sm:$0xff]
    %v399 = vld [vmem:[#allocation10 + $0x760] sm:$0xff]
    %v400 = vld [vmem:[#allocation10 + $0x768] sm:$0xff]
    %v401 = vld [vmem:[#allocation10 + $0x770] sm:$0xff]
    %v402 = vld [vmem:[#allocation10 + $0x778] sm:$0xff]
    %v403 = vld [vmem:[#allocation10 + $0x780] sm:$0xff]
    %v404 = vld [vmem:[#allocation10 + $0x788] sm:$0xff]
    %v405 = vld [vmem:[#allocation10 + $0x790] sm:$0xff]
    %v406 = vld [vmem:[#allocation10 + $0x798] sm:$0xff]
    %v407 = vld [vmem:[#allocation10 + $0x7a0] sm:$0xff]
    %v408 = vld [vmem:[#allocation10 + $0x7a8] sm:$0xff]
    %v409 = vld [vmem:[#allocation10 + $0x7b0] sm:$0xff]
    %v410 = vld [vmem:[#allocation10 + $0x7b8] sm:$0xff]
    %v411 = vld [vmem:[#allocation10 + $0x7c0] sm:$0xff]
    %v412 = vld [vmem:[#allocation10 + $0x7c8] sm:$0xff]
    %v413 = vld [vmem:[#allocation10 + $0x7d0] sm:$0xff]
    %v414 = vld [vmem:[#allocation10 + $0x7d8] sm:$0xff]
    %v415 = vld [vmem:[#allocation10 + $0x7e0] sm:$0xff]
    %v416 = vld [vmem:[#allocation10 + $0x7e8] sm:$0xff]
    %v417 = vld [vmem:[#allocation10 + $0x7f0] sm:$0xff]
    %v418 = vld [vmem:[#allocation10 + $0x7f8] sm:$0xff]
    %v419 = vld [vmem:[#allocation10 + $0x800] sm:$0xff]
    %v420 = vld [vmem:[#allocation10 + $0x808] sm:$0xff]
    %v421 = vld [vmem:[#allocation10 + $0x810] sm:$0xff]
    %v422 = vld [vmem:[#allocation10 + $0x818] sm:$0xff]
    %v423 = vld [vmem:[#allocation10 + $0x820] sm:$0xff]
    %v424 = vld [vmem:[#allocation10 + $0x828] sm:$0xff]
    %v425 = vld [vmem:[#allocation10 + $0x830] sm:$0xff]
    %v426 = vld [vmem:[#allocation10 + $0x838] sm:$0xff]
    %v427 = vld [vmem:[#allocation10 + $0x840] sm:$0xff]
    %v428 = vld [vmem:[#allocation10 + $0x848] sm:$0xff]
    %v429 = vld [vmem:[#allocation10 + $0x850] sm:$0xff]
    %v430 = vld [vmem:[#allocation10 + $0x858] sm:$0xff]
    %v431 = vld [vmem:[#allocation10 + $0x860] sm:$0xff]
    %v432 = vld [vmem:[#allocation10 + $0x868] sm:$0xff]
    %v433 = vld [vmem:[#allocation10 + $0x870] sm:$0xff]
    %v434 = vld [vmem:[#allocation10 + $0x878] sm:$0xff]
    %v435 = vld [vmem:[#allocation10 + $0x880] sm:$0xff]
    %v436 = vld [vmem:[#allocation10 + $0x888] sm:$0xff]
    %v437 = vld [vmem:[#allocation10 + $0x890] sm:$0xff]
    %v438 = vld [vmem:[#allocation10 + $0x898] sm:$0xff]
    %v439 = vld [vmem:[#allocation10 + $0x8a0] sm:$0xff]
    %v440 = vld [vmem:[#allocation10 + $0x8a8] sm:$0xff]
    %v441 = vld [vmem:[#allocation10 + $0x8b0] sm:$0xff]
    %v442 = vld [vmem:[#allocation10 + $0x8b8] sm:$0xff]
    %v443 = vld [vmem:[#allocation10 + $0x8c0] sm:$0xff]
    %v444 = vld [vmem:[#allocation10 + $0x8c8] sm:$0xff]
    %v445 = vld [vmem:[#allocation10 + $0x8d0] sm:$0xff]
    %v446 = vld [vmem:[#allocation10 + $0x8d8] sm:$0xff]
    %v447 = vld [vmem:[#allocation10 + $0x8e0] sm:$0xff]
    %v448 = vld [vmem:[#allocation10 + $0x8e8] sm:$0xff]
    %v449 = vld [vmem:[#allocation10 + $0x8f0] sm:$0xff]
    %v450 = vld [vmem:[#allocation10 + $0x8f8] sm:$0xff]
    %v451 = vld [vmem:[#allocation10 + $0x900] sm:$0xff]
    %v452 = vld [vmem:[#allocation10 + $0x908] sm:$0xff]
    %v453 = vld [vmem:[#allocation10 + $0x910] sm:$0xff]
    %v454 = vld [vmem:[#allocation10 + $0x918] sm:$0xff]
    %v455 = vld [vmem:[#allocation10 + $0x920] sm:$0xff]
    %v456 = vld [vmem:[#allocation10 + $0x928] sm:$0xff]
    %v457 = vld [vmem:[#allocation10 + $0x930] sm:$0xff]
    %v458 = vld [vmem:[#allocation10 + $0x938] sm:$0xff]
    %v459 = vld [vmem:[#allocation10 + $0x940] sm:$0xff]
    %v460 = vld [vmem:[#allocation10 + $0x948] sm:$0xff]
    %v461 = vld [vmem:[#allocation10 + $0x950] sm:$0xff]
    %v462 = vld [vmem:[#allocation10 + $0x958] sm:$0xff]
    %v463 = vld [vmem:[#allocation10 + $0x960] sm:$0xff]
    %v464 = vld [vmem:[#allocation10 + $0x968] sm:$0xff]
    %v465 = vld [vmem:[#allocation10 + $0x970] sm:$0xff]
    %v466 = vld [vmem:[#allocation10 + $0x978] sm:$0xff]
    %v467 = vld [vmem:[#allocation10 + $0x980] sm:$0xff]
    %v468 = vld [vmem:[#allocation10 + $0x988] sm:$0xff]
    %v469 = vld [vmem:[#allocation10 + $0x990] sm:$0xff]
    %v470 = vld [vmem:[#allocation10 + $0x998] sm:$0xff]
    %v471 = vld [vmem:[#allocation10 + $0x9a0] sm:$0xff]
    %v472 = vld [vmem:[#allocation10 + $0x9a8] sm:$0xff]
    %v473 = vld [vmem:[#allocation10 + $0x9b0] sm:$0xff]
    %v474 = vld [vmem:[#allocation10 + $0x9b8] sm:$0xff]
    %v475 = vld [vmem:[#allocation10 + $0x9c0] sm:$0xff]
    %v476 = vld [vmem:[#allocation10 + $0x9c8] sm:$0xff]
    %v477 = vld [vmem:[#allocation10 + $0x9d0] sm:$0xff]
    %v478 = vld [vmem:[#allocation10 + $0x9d8] sm:$0xff]
    %v479 = vld [vmem:[#allocation10 + $0x9e0] sm:$0xff]
    %v480 = vld [vmem:[#allocation10 + $0x9e8] sm:$0xff]
    %v481 = vld [vmem:[#allocation10 + $0x9f0] sm:$0xff]
    %v482 = vld [vmem:[#allocation10 + $0x9f8] sm:$0xff]
    %v483 = vld [vmem:[#allocation10 + $0xa00] sm:$0xff]
    %v484 = vld [vmem:[#allocation10 + $0xa08] sm:$0xff]
    %v485 = vld [vmem:[#allocation10 + $0xa10] sm:$0xff]
    %v486 = vld [vmem:[#allocation10 + $0xa18] sm:$0xff]
    %v487 = vld [vmem:[#allocation10 + $0xa20] sm:$0xff]
    %v488 = vld [vmem:[#allocation10 + $0xa28] sm:$0xff]
    %v489 = vld [vmem:[#allocation10 + $0xa30] sm:$0xff]
    %v490 = vld [vmem:[#allocation10 + $0xa38] sm:$0xff]
    %v491 = vld [vmem:[#allocation10 + $0xa40] sm:$0xff]
    %v492 = vld [vmem:[#allocation10 + $0xa48] sm:$0xff]
    %v493 = vld [vmem:[#allocation10 + $0xa50] sm:$0xff]
    %v494 = vld [vmem:[#allocation10 + $0xa58] sm:$0xff]
    %v495 = vld [vmem:[#allocation10 + $0xa60] sm:$0xff]
    %v496 = vld [vmem:[#allocation10 + $0xa68] sm:$0xff]
    %v497 = vld [vmem:[#allocation10 + $0xa70] sm:$0xff]
    %v498 = vld [vmem:[#allocation10 + $0xa78] sm:$0xff]
    %v499 = vld [vmem:[#allocation10 + $0xa80] sm:$0xff]
    %v500 = vld [vmem:[#allocation10 + $0xa88] sm:$0xff]
    %v501 = vld [vmem:[#allocation10 + $0xa90] sm:$0xff]
    %v502 = vld [vmem:[#allocation10 + $0xa98] sm:$0xff]
    %v503 = vld [vmem:[#allocation10 + $0xaa0] sm:$0xff]
    %v504 = vld [vmem:[#allocation10 + $0xaa8] sm:$0xff]
    %v505 = vld [vmem:[#allocation10 + $0xab0] sm:$0xff]
    %v506 = vld [vmem:[#allocation10 + $0xab8] sm:$0xff]
    %v507 = vld [vmem:[#allocation10 + $0xac0] sm:$0xff]
    %v508 = vld [vmem:[#allocation10 + $0xac8] sm:$0xff]
    %v509 = vld [vmem:[#allocation10 + $0xad0] sm:$0xff]
    %v510 = vld [vmem:[#allocation10 + $0xad8] sm:$0xff]
    %v511 = vld [vmem:[#allocation10 + $0xae0] sm:$0xff]
    %v512 = vld [vmem:[#allocation10 + $0xae8] sm:$0xff]
    %v513 = vld [vmem:[#allocation10 + $0xaf0] sm:$0xff]
    %v514 = vld [vmem:[#allocation10 + $0xaf8] sm:$0xff]
    %v515 = vld [vmem:[#allocation10 + $0xb00] sm:$0xff]
    %v516 = vld [vmem:[#allocation10 + $0xb08] sm:$0xff]
    %v517 = vld [vmem:[#allocation10 + $0xb10] sm:$0xff]
    %v518 = vld [vmem:[#allocation10 + $0xb18] sm:$0xff]
    %v519 = vld [vmem:[#allocation10 + $0xb20] sm:$0xff]
    %v520 = vld [vmem:[#allocation10 + $0xb28] sm:$0xff]
    %v521 = vld [vmem:[#allocation10 + $0xb30] sm:$0xff]
    %v522 = vld [vmem:[#allocation10 + $0xb38] sm:$0xff]
    %v523 = vld [vmem:[#allocation10 + $0xb40] sm:$0xff]
    %v524 = vld [vmem:[#allocation10 + $0xb48] sm:$0xff]
    %v525 = vld [vmem:[#allocation10 + $0xb50] sm:$0xff]
    %v526 = vld [vmem:[#allocation10 + $0xb58] sm:$0xff]
    %v527 = vld [vmem:[#allocation10 + $0xb60] sm:$0xff]
    %v528 = vld [vmem:[#allocation10 + $0xb68] sm:$0xff]
    %v529 = vld [vmem:[#allocation10 + $0xb70] sm:$0xff]
    %v530 = vld [vmem:[#allocation10 + $0xb78] sm:$0xff]
    %v531 = vld [vmem:[#allocation10 + $0xb80] sm:$0xff]
    %v532 = vld [vmem:[#allocation10 + $0xb88] sm:$0xff]
    %v533 = vld [vmem:[#allocation10 + $0xb90] sm:$0xff]
    %v534 = vld [vmem:[#allocation10 + $0xb98] sm:$0xff]
    %v535 = vld [vmem:[#allocation10 + $0xba0] sm:$0xff]
    %v536 = vld [vmem:[#allocation10 + $0xba8] sm:$0xff]
    %v537 = vld [vmem:[#allocation10 + $0xbb0] sm:$0xff]
    %v538 = vld [vmem:[#allocation10 + $0xbb8] sm:$0xff]
    %v539 = vld [vmem:[#allocation10 + $0xbc0] sm:$0xff]
    %v540 = vld [vmem:[#allocation10 + $0xbc8] sm:$0xff]
    %v541 = vld [vmem:[#allocation10 + $0xbd0] sm:$0xff]
    %v542 = vld [vmem:[#allocation10 + $0xbd8] sm:$0xff]
    %v543 = vld [vmem:[#allocation10 + $0xbe0] sm:$0xff]
    %v544 = vld [vmem:[#allocation10 + $0xbe8] sm:$0xff]
    %v545 = vld [vmem:[#allocation10 + $0xbf0] sm:$0xff]
    %v546 = vld [vmem:[#allocation10 + $0xbf8] sm:$0xff]
    %v547 = vld [vmem:[#allocation12] sm:$0xff]
    %v548 = vld [vmem:[#allocation12 + $0x8] sm:$0xff]
    %v549 = vld [vmem:[#allocation12 + $0x10] sm:$0xff]
    %v550 = vld [vmem:[#allocation12 + $0x18] sm:$0xff]
    %v551 = vld [vmem:[#allocation12 + $0x20] sm:$0xff]
    %v552 = vld [vmem:[#allocation12 + $0x28] sm:$0xff]
    %v553 = vld [vmem:[#allocation12 + $0x30] sm:$0xff]
    %v554 = vld [vmem:[#allocation12 + $0x38] sm:$0xff]
    %v555 = vld [vmem:[#allocation12 + $0x40] sm:$0xff]
    %v556 = vld [vmem:[#allocation12 + $0x48] sm:$0xff]
    %v557 = vld [vmem:[#allocation12 + $0x50] sm:$0xff]
    %v558 = vld [vmem:[#allocation12 + $0x58] sm:$0xff]
    %v559 = vld [vmem:[#allocation12 + $0x60] sm:$0xff]
    %v560 = vld [vmem:[#allocation12 + $0x68] sm:$0xff]
    %v561 = vld [vmem:[#allocation12 + $0x70] sm:$0xff]
    %v562 = vld [vmem:[#allocation12 + $0x78] sm:$0xff]
    %v563 = vld [vmem:[#allocation12 + $0x80] sm:$0xff]
    %v564 = vld [vmem:[#allocation12 + $0x88] sm:$0xff]
    %v565 = vld [vmem:[#allocation12 + $0x90] sm:$0xff]
    %v566 = vld [vmem:[#allocation12 + $0x98] sm:$0xff]
    %v567 = vld [vmem:[#allocation12 + $0xa0] sm:$0xff]
    %v568 = vld [vmem:[#allocation12 + $0xa8] sm:$0xff]
    %v569 = vld [vmem:[#allocation12 + $0xb0] sm:$0xff]
    %v570 = vld [vmem:[#allocation12 + $0xb8] sm:$0xff]
    %v571 = vld [vmem:[#allocation12 + $0xc0] sm:$0xff]
    %v572 = vld [vmem:[#allocation12 + $0xc8] sm:$0xff]
    %v573 = vld [vmem:[#allocation12 + $0xd0] sm:$0xff]
    %v574 = vld [vmem:[#allocation12 + $0xd8] sm:$0xff]
    %v575 = vld [vmem:[#allocation12 + $0xe0] sm:$0xff]
    %v576 = vld [vmem:[#allocation12 + $0xe8] sm:$0xff]
    %v577 = vld [vmem:[#allocation12 + $0xf0] sm:$0xff]
    %v578 = vld [vmem:[#allocation12 + $0xf8] sm:$0xff]
    %v579 = vld [vmem:[#allocation12 + $0x100] sm:$0xff]
    %v580 = vld [vmem:[#allocation12 + $0x108] sm:$0xff]
    %v581 = vld [vmem:[#allocation12 + $0x110] sm:$0xff]
    %v582 = vld [vmem:[#allocation12 + $0x118] sm:$0xff]
    %v583 = vld [vmem:[#allocation12 + $0x120] sm:$0xff]
    %v584 = vld [vmem:[#allocation12 + $0x128] sm:$0xff]
    %v585 = vld [vmem:[#allocation12 + $0x130] sm:$0xff]
    %v586 = vld [vmem:[#allocation12 + $0x138] sm:$0xff]
    %v587 = vld [vmem:[#allocation12 + $0x140] sm:$0xff]
    %v588 = vld [vmem:[#allocation12 + $0x148] sm:$0xff]
    %v589 = vld [vmem:[#allocation12 + $0x150] sm:$0xff]
    %v590 = vld [vmem:[#allocation12 + $0x158] sm:$0xff]
    %v591 = vld [vmem:[#allocation12 + $0x160] sm:$0xff]
    %v592 = vld [vmem:[#allocation12 + $0x168] sm:$0xff]
    %v593 = vld [vmem:[#allocation12 + $0x170] sm:$0xff]
    %v594 = vld [vmem:[#allocation12 + $0x178] sm:$0xff]
    %v595 = vld [vmem:[#allocation12 + $0x180] sm:$0xff]
    %v596 = vld [vmem:[#allocation12 + $0x188] sm:$0xff]
    %v597 = vld [vmem:[#allocation12 + $0x190] sm:$0xff]
    %v598 = vld [vmem:[#allocation12 + $0x198] sm:$0xff]
    %v599 = vld [vmem:[#allocation12 + $0x1a0] sm:$0xff]
    %v600 = vld [vmem:[#allocation12 + $0x1a8] sm:$0xff]
    %v601 = vld [vmem:[#allocation12 + $0x1b0] sm:$0xff]
    %v602 = vld [vmem:[#allocation12 + $0x1b8] sm:$0xff]
    %v603 = vld [vmem:[#allocation12 + $0x1c0] sm:$0xff]
    %v604 = vld [vmem:[#allocation12 + $0x1c8] sm:$0xff]
    %v605 = vld [vmem:[#allocation12 + $0x1d0] sm:$0xff]
    %v606 = vld [vmem:[#allocation12 + $0x1d8] sm:$0xff]
    %v607 = vld [vmem:[#allocation12 + $0x1e0] sm:$0xff]
    %v608 = vld [vmem:[#allocation12 + $0x1e8] sm:$0xff]
    %v609 = vld [vmem:[#allocation12 + $0x1f0] sm:$0xff]
    %v610 = vld [vmem:[#allocation12 + $0x1f8] sm:$0xff]
    %v611 = vld [vmem:[#allocation12 + $0x200] sm:$0xff]
    %v612 = vld [vmem:[#allocation12 + $0x208] sm:$0xff]
    %v613 = vld [vmem:[#allocation12 + $0x210] sm:$0xff]
    %v614 = vld [vmem:[#allocation12 + $0x218] sm:$0xff]
    %v615 = vld [vmem:[#allocation12 + $0x220] sm:$0xff]
    %v616 = vld [vmem:[#allocation12 + $0x228] sm:$0xff]
    %v617 = vld [vmem:[#allocation12 + $0x230] sm:$0xff]
    %v618 = vld [vmem:[#allocation12 + $0x238] sm:$0xff]
    %v619 = vld [vmem:[#allocation12 + $0x240] sm:$0xff]
    %v620 = vld [vmem:[#allocation12 + $0x248] sm:$0xff]
    %v621 = vld [vmem:[#allocation12 + $0x250] sm:$0xff]
    %v622 = vld [vmem:[#allocation12 + $0x258] sm:$0xff]
    %v623 = vld [vmem:[#allocation12 + $0x260] sm:$0xff]
    %v624 = vld [vmem:[#allocation12 + $0x268] sm:$0xff]
    %v625 = vld [vmem:[#allocation12 + $0x270] sm:$0xff]
    %v626 = vld [vmem:[#allocation12 + $0x278] sm:$0xff]
    %v627 = vld [vmem:[#allocation12 + $0x280] sm:$0xff]
    %v628 = vld [vmem:[#allocation12 + $0x288] sm:$0xff]
    %v629 = vld [vmem:[#allocation12 + $0x290] sm:$0xff]
    %v630 = vld [vmem:[#allocation12 + $0x298] sm:$0xff]
    %v631 = vld [vmem:[#allocation12 + $0x2a0] sm:$0xff]
    %v632 = vld [vmem:[#allocation12 + $0x2a8] sm:$0xff]
    %v633 = vld [vmem:[#allocation12 + $0x2b0] sm:$0xff]
    %v634 = vld [vmem:[#allocation12 + $0x2b8] sm:$0xff]
    %v635 = vld [vmem:[#allocation12 + $0x2c0] sm:$0xff]
    %v636 = vld [vmem:[#allocation12 + $0x2c8] sm:$0xff]
    %v637 = vld [vmem:[#allocation12 + $0x2d0] sm:$0xff]
    %v638 = vld [vmem:[#allocation12 + $0x2d8] sm:$0xff]
    %v639 = vld [vmem:[#allocation12 + $0x2e0] sm:$0xff]
    %v640 = vld [vmem:[#allocation12 + $0x2e8] sm:$0xff]
    %v641 = vld [vmem:[#allocation12 + $0x2f0] sm:$0xff]
    %v642 = vld [vmem:[#allocation12 + $0x2f8] sm:$0xff]
    %v643 = vld [vmem:[#allocation12 + $0x300] sm:$0xff]
    %v644 = vld [vmem:[#allocation12 + $0x308] sm:$0xff]
    %v645 = vld [vmem:[#allocation12 + $0x310] sm:$0xff]
    %v646 = vld [vmem:[#allocation12 + $0x318] sm:$0xff]
    %v647 = vld [vmem:[#allocation12 + $0x320] sm:$0xff]
    %v648 = vld [vmem:[#allocation12 + $0x328] sm:$0xff]
    %v649 = vld [vmem:[#allocation12 + $0x330] sm:$0xff]
    %v650 = vld [vmem:[#allocation12 + $0x338] sm:$0xff]
    %v651 = vld [vmem:[#allocation12 + $0x340] sm:$0xff]
    %v652 = vld [vmem:[#allocation12 + $0x348] sm:$0xff]
    %v653 = vld [vmem:[#allocation12 + $0x350] sm:$0xff]
    %v654 = vld [vmem:[#allocation12 + $0x358] sm:$0xff]
    %v655 = vld [vmem:[#allocation12 + $0x360] sm:$0xff]
    %v656 = vld [vmem:[#allocation12 + $0x368] sm:$0xff]
    %v657 = vld [vmem:[#allocation12 + $0x370] sm:$0xff]
    %v658 = vld [vmem:[#allocation12 + $0x378] sm:$0xff]
    %v659 = vld [vmem:[#allocation12 + $0x380] sm:$0xff]
    %v660 = vld [vmem:[#allocation12 + $0x388] sm:$0xff]
    %v661 = vld [vmem:[#allocation12 + $0x390] sm:$0xff]
    %v662 = vld [vmem:[#allocation12 + $0x398] sm:$0xff]
    %v663 = vld [vmem:[#allocation12 + $0x3a0] sm:$0xff]
    %v664 = vld [vmem:[#allocation12 + $0x3a8] sm:$0xff]
    %v665 = vld [vmem:[#allocation12 + $0x3b0] sm:$0xff]
    %v666 = vld [vmem:[#allocation12 + $0x3b8] sm:$0xff]
    %v667 = vld [vmem:[#allocation12 + $0x3c0] sm:$0xff]
    %v668 = vld [vmem:[#allocation12 + $0x3c8] sm:$0xff]
    %v669 = vld [vmem:[#allocation12 + $0x3d0] sm:$0xff]
    %v670 = vld [vmem:[#allocation12 + $0x3d8] sm:$0xff]
    %v671 = vld [vmem:[#allocation12 + $0x3e0] sm:$0xff]
    %v672 = vld [vmem:[#allocation12 + $0x3e8] sm:$0xff]
    %v673 = vld [vmem:[#allocation12 + $0x3f0] sm:$0xff]
    %v674 = vld [vmem:[#allocation12 + $0x3f8] sm:$0xff]
    %v675 = vld [vmem:[#allocation12 + $0x400] sm:$0xff]
    %v676 = vld [vmem:[#allocation12 + $0x408] sm:$0xff]
    %v677 = vld [vmem:[#allocation12 + $0x410] sm:$0xff]
    %v678 = vld [vmem:[#allocation12 + $0x418] sm:$0xff]
    %v679 = vld [vmem:[#allocation12 + $0x420] sm:$0xff]
    %v680 = vld [vmem:[#allocation12 + $0x428] sm:$0xff]
    %v681 = vld [vmem:[#allocation12 + $0x430] sm:$0xff]
    %v682 = vld [vmem:[#allocation12 + $0x438] sm:$0xff]
    %v683 = vld [vmem:[#allocation12 + $0x440] sm:$0xff]
    %v684 = vld [vmem:[#allocation12 + $0x448] sm:$0xff]
    %v685 = vld [vmem:[#allocation12 + $0x450] sm:$0xff]
    %v686 = vld [vmem:[#allocation12 + $0x458] sm:$0xff]
    %v687 = vld [vmem:[#allocation12 + $0x460] sm:$0xff]
    %v688 = vld [vmem:[#allocation12 + $0x468] sm:$0xff]
    %v689 = vld [vmem:[#allocation12 + $0x470] sm:$0xff]
    %v690 = vld [vmem:[#allocation12 + $0x478] sm:$0xff]
    %v691 = vld [vmem:[#allocation12 + $0x480] sm:$0xff]
    %v692 = vld [vmem:[#allocation12 + $0x488] sm:$0xff]
    %v693 = vld [vmem:[#allocation12 + $0x490] sm:$0xff]
    %v694 = vld [vmem:[#allocation12 + $0x498] sm:$0xff]
    %v695 = vld [vmem:[#allocation12 + $0x4a0] sm:$0xff]
    %v696 = vld [vmem:[#allocation12 + $0x4a8] sm:$0xff]
    %v697 = vld [vmem:[#allocation12 + $0x4b0] sm:$0xff]
    %v698 = vld [vmem:[#allocation12 + $0x4b8] sm:$0xff]
    %v699 = vld [vmem:[#allocation12 + $0x4c0] sm:$0xff]
    %v700 = vld [vmem:[#allocation12 + $0x4c8] sm:$0xff]
    %v701 = vld [vmem:[#allocation12 + $0x4d0] sm:$0xff]
    %v702 = vld [vmem:[#allocation12 + $0x4d8] sm:$0xff]
    %v703 = vld [vmem:[#allocation12 + $0x4e0] sm:$0xff]
    %v704 = vld [vmem:[#allocation12 + $0x4e8] sm:$0xff]
    %v705 = vld [vmem:[#allocation12 + $0x4f0] sm:$0xff]
    %v706 = vld [vmem:[#allocation12 + $0x4f8] sm:$0xff]
    %v707 = vld [vmem:[#allocation12 + $0x500] sm:$0xff]
    %v708 = vld [vmem:[#allocation12 + $0x508] sm:$0xff]
    %v709 = vld [vmem:[#allocation12 + $0x510] sm:$0xff]
    %v710 = vld [vmem:[#allocation12 + $0x518] sm:$0xff]
    %v711 = vld [vmem:[#allocation12 + $0x520] sm:$0xff]
    %v712 = vld [vmem:[#allocation12 + $0x528] sm:$0xff]
    %v713 = vld [vmem:[#allocation12 + $0x530] sm:$0xff]
    %v714 = vld [vmem:[#allocation12 + $0x538] sm:$0xff]
    %v715 = vld [vmem:[#allocation12 + $0x540] sm:$0xff]
    %v716 = vld [vmem:[#allocation12 + $0x548] sm:$0xff]
    %v717 = vld [vmem:[#allocation12 + $0x550] sm:$0xff]
    %v718 = vld [vmem:[#allocation12 + $0x558] sm:$0xff]
    %v719 = vld [vmem:[#allocation12 + $0x560] sm:$0xff]
    %v720 = vld [vmem:[#allocation12 + $0x568] sm:$0xff]
    %v721 = vld [vmem:[#allocation12 + $0x570] sm:$0xff]
    %v722 = vld [vmem:[#allocation12 + $0x578] sm:$0xff]
    %v723 = vld [vmem:[#allocation12 + $0x580] sm:$0xff]
    %v724 = vld [vmem:[#allocation12 + $0x588] sm:$0xff]
    %v725 = vld [vmem:[#allocation12 + $0x590] sm:$0xff]
    %v726 = vld [vmem:[#allocation12 + $0x598] sm:$0xff]
    %v727 = vld [vmem:[#allocation12 + $0x5a0] sm:$0xff]
    %v728 = vld [vmem:[#allocation12 + $0x5a8] sm:$0xff]
    %v729 = vld [vmem:[#allocation12 + $0x5b0] sm:$0xff]
    %v730 = vld [vmem:[#allocation12 + $0x5b8] sm:$0xff]
    %v731 = vld [vmem:[#allocation12 + $0x5c0] sm:$0xff]
    %v732 = vld [vmem:[#allocation12 + $0x5c8] sm:$0xff]
    %v733 = vld [vmem:[#allocation12 + $0x5d0] sm:$0xff]
    %v734 = vld [vmem:[#allocation12 + $0x5d8] sm:$0xff]
    %v735 = vld [vmem:[#allocation12 + $0x5e0] sm:$0xff]
    %v736 = vld [vmem:[#allocation12 + $0x5e8] sm:$0xff]
    %v737 = vld [vmem:[#allocation12 + $0x5f0] sm:$0xff]
    %v738 = vld [vmem:[#allocation12 + $0x5f8] sm:$0xff]
    %v739 = vld [vmem:[#allocation12 + $0x600] sm:$0xff]
    %v740 = vld [vmem:[#allocation12 + $0x608] sm:$0xff]
    %v741 = vld [vmem:[#allocation12 + $0x610] sm:$0xff]
    %v742 = vld [vmem:[#allocation12 + $0x618] sm:$0xff]
    %v743 = vld [vmem:[#allocation12 + $0x620] sm:$0xff]
    %v744 = vld [vmem:[#allocation12 + $0x628] sm:$0xff]
    %v745 = vld [vmem:[#allocation12 + $0x630] sm:$0xff]
    %v746 = vld [vmem:[#allocation12 + $0x638] sm:$0xff]
    %v747 = vld [vmem:[#allocation12 + $0x640] sm:$0xff]
    %v748 = vld [vmem:[#allocation12 + $0x648] sm:$0xff]
    %v749 = vld [vmem:[#allocation12 + $0x650] sm:$0xff]
    %v750 = vld [vmem:[#allocation12 + $0x658] sm:$0xff]
    %v751 = vld [vmem:[#allocation12 + $0x660] sm:$0xff]
    %v752 = vld [vmem:[#allocation12 + $0x668] sm:$0xff]
    %v753 = vld [vmem:[#allocation12 + $0x670] sm:$0xff]
    %v754 = vld [vmem:[#allocation12 + $0x678] sm:$0xff]
    %v755 = vld [vmem:[#allocation12 + $0x680] sm:$0xff]
    %v756 = vld [vmem:[#allocation12 + $0x688] sm:$0xff]
    %v757 = vld [vmem:[#allocation12 + $0x690] sm:$0xff]
    %v758 = vld [vmem:[#allocation12 + $0x698] sm:$0xff]
    %v759 = vld [vmem:[#allocation12 + $0x6a0] sm:$0xff]
    %v760 = vld [vmem:[#allocation12 + $0x6a8] sm:$0xff]
    %v761 = vld [vmem:[#allocation12 + $0x6b0] sm:$0xff]
    %v762 = vld [vmem:[#allocation12 + $0x6b8] sm:$0xff]
    %v763 = vld [vmem:[#allocation12 + $0x6c0] sm:$0xff]
    %v764 = vld [vmem:[#allocation12 + $0x6c8] sm:$0xff]
    %v765 = vld [vmem:[#allocation12 + $0x6d0] sm:$0xff]
    %v766 = vld [vmem:[#allocation12 + $0x6d8] sm:$0xff]
    %v767 = vld [vmem:[#allocation12 + $0x6e0] sm:$0xff]
    %v768 = vld [vmem:[#allocation12 + $0x6e8] sm:$0xff]
    %v769 = vld [vmem:[#allocation12 + $0x6f0] sm:$0xff]
    %v770 = vld [vmem:[#allocation12 + $0x6f8] sm:$0xff]
    %v771 = vld [vmem:[#allocation12 + $0x700] sm:$0xff]
    %v772 = vld [vmem:[#allocation12 + $0x708] sm:$0xff]
    %v773 = vld [vmem:[#allocation12 + $0x710] sm:$0xff]
    %v774 = vld [vmem:[#allocation12 + $0x718] sm:$0xff]
    %v775 = vld [vmem:[#allocation12 + $0x720] sm:$0xff]
    %v776 = vld [vmem:[#allocation12 + $0x728] sm:$0xff]
    %v777 = vld [vmem:[#allocation12 + $0x730] sm:$0xff]
    %v778 = vld [vmem:[#allocation12 + $0x738] sm:$0xff]
    %v779 = vld [vmem:[#allocation12 + $0x740] sm:$0xff]
    %v780 = vld [vmem:[#allocation12 + $0x748] sm:$0xff]
    %v781 = vld [vmem:[#allocation12 + $0x750] sm:$0xff]
    %v782 = vld [vmem:[#allocation12 + $0x758] sm:$0xff]
    %v783 = vld [vmem:[#allocation12 + $0x760] sm:$0xff]
    %v784 = vld [vmem:[#allocation12 + $0x768] sm:$0xff]
    %v785 = vld [vmem:[#allocation12 + $0x770] sm:$0xff]
    %v786 = vld [vmem:[#allocation12 + $0x778] sm:$0xff]
    %v787 = vld [vmem:[#allocation12 + $0x780] sm:$0xff]
    %v788 = vld [vmem:[#allocation12 + $0x788] sm:$0xff]
    %v789 = vld [vmem:[#allocation12 + $0x790] sm:$0xff]
    %v790 = vld [vmem:[#allocation12 + $0x798] sm:$0xff]
    %v791 = vld [vmem:[#allocation12 + $0x7a0] sm:$0xff]
    %v792 = vld [vmem:[#allocation12 + $0x7a8] sm:$0xff]
    %v793 = vld [vmem:[#allocation12 + $0x7b0] sm:$0xff]
    %v794 = vld [vmem:[#allocation12 + $0x7b8] sm:$0xff]
    %v795 = vld [vmem:[#allocation12 + $0x7c0] sm:$0xff]
    %v796 = vld [vmem:[#allocation12 + $0x7c8] sm:$0xff]
    %v797 = vld [vmem:[#allocation12 + $0x7d0] sm:$0xff]
    %v798 = vld [vmem:[#allocation12 + $0x7d8] sm:$0xff]
    %v799 = vld [vmem:[#allocation12 + $0x7e0] sm:$0xff]
    %v800 = vld [vmem:[#allocation12 + $0x7e8] sm:$0xff]
    %v801 = vld [vmem:[#allocation12 + $0x7f0] sm:$0xff]
    %v802 = vld [vmem:[#allocation12 + $0x7f8] sm:$0xff]
    %803 = vmatprep.subr.mxu0 %v548
    %804 = vmatpush1.msra.mxu0 %v547
    %805 = vmatprep.subr.mxu0 %v556
    %806 = vmatpush1.msra.mxu0 %v555
    %807 = vmatprep.subr.mxu0 %v564
    %808 = vmatpush1.msra.mxu0 %v563
    %809 = vmatprep.subr.mxu0 %v572
    %810 = vmatpush1.msra.mxu0 %v571
    %811 = vmatprep.subr.mxu0 %v580
    %812 = vmatpush1.msra.mxu0 %v579
    %813 = vmatprep.subr.mxu0 %v588
    %814 = vmatpush1.msra.mxu0 %v587
    %815 = vmatprep.subr.mxu0 %v596
    %816 = vmatpush1.msra.mxu0 %v595
    %817 = vmatprep.subr.mxu0 %v604
    %818 = vmatpush1.msra.mxu0 %v603
    %819 = vmatprep.subr.mxu0 %v612
    %820 = vmatpush1.msra.mxu0 %v611
    %821 = vmatprep.subr.mxu0 %v620
    %822 = vmatpush1.msra.mxu0 %v619
    %823 = vmatprep.subr.mxu0 %v628
    %824 = vmatpush1.msra.mxu0 %v627
    %825 = vmatprep.subr.mxu0 %v636
    %826 = vmatpush1.msra.mxu0 %v635
    %827 = vmatprep.subr.mxu0 %v644
    %828 = vmatpush1.msra.mxu0 %v643
    %829 = vmatprep.subr.mxu0 %v652
    %830 = vmatpush1.msra.mxu0 %v651
    %831 = vmatprep.subr.mxu0 %v660
    %832 = vmatpush1.msra.mxu0 %v659
    %833 = vmatprep.subr.mxu0 %v668
    %834 = vmatpush1.msra.mxu0 %v667
    %835 = vmatprep.subr.mxu0 %v676
    %836 = vmatpush1.msra.mxu0 %v675
    %837 = vmatprep.subr.mxu0 %v684
    %838 = vmatpush1.msra.mxu0 %v683
    %839 = vmatprep.subr.mxu0 %v692
    %840 = vmatpush1.msra.mxu0 %v691
    %841 = vmatprep.subr.mxu0 %v700
    %842 = vmatpush1.msra.mxu0 %v699
    %843 = vmatprep.subr.mxu0 %v708
    %844 = vmatpush1.msra.mxu0 %v707
    %845 = vmatprep.subr.mxu0 %v716
    %846 = vmatpush1.msra.mxu0 %v715
    %847 = vmatprep.subr.mxu0 %v724
    %848 = vmatpush1.msra.mxu0 %v723
    %849 = vmatprep.subr.mxu0 %v732
    %850 = vmatpush1.msra.mxu0 %v731
    %851 = vmatprep.subr.mxu0 %v740
    %852 = vmatpush1.msra.mxu0 %v739
    %853 = vmatprep.subr.mxu0 %v748
    %854 = vmatpush1.msra.mxu0 %v747
    %855 = vmatprep.subr.mxu0 %v756
    %856 = vmatpush1.msra.mxu0 %v755
    %857 = vmatprep.subr.mxu0 %v764
    %858 = vmatpush1.msra.mxu0 %v763
    %859 = vmatprep.subr.mxu0 %v772
    %860 = vmatpush1.msra.mxu0 %v771
    %861 = vmatprep.subr.mxu0 %v780
    %862 = vmatpush1.msra.mxu0 %v779
    %863 = vmatprep.subr.mxu0 %v788
    %864 = vmatpush1.msra.mxu0 %v787
    %865 = vmatprep.subr.mxu0 %v796
    %866 = vmatpush1.msra.mxu0 %v795
    %867 = vmatprep.mubr.f32.mxu0 %v148
    %868 = vmatmul.mubr.f32.gmra.mrb[0].mxu0 %v147
    %v869 = vpop.f32.mrb[0].mxu0
    %v870 = vadd.f32 0.0, %v869
    %v871 = vpop.f32.mrb[0].mxu0
    %v872 = vadd.f32 0.0, %v871
    %873 = vdwg.mxu0
    %874 = vmatprep.subr.mxu0 %v550
    %875 = vmatpush1.msra.mxu0 %v549
    %876 = vmatprep.subr.mxu0 %v558
    %877 = vmatpush1.msra.mxu0 %v557
    %878 = vmatprep.subr.mxu0 %v566
    %879 = vmatpush1.msra.mxu0 %v565
    %880 = vmatprep.subr.mxu0 %v574
    %881 = vmatpush1.msra.mxu0 %v573
    %882 = vmatprep.subr.mxu0 %v582
    %883 = vmatpush1.msra.mxu0 %v581
    %884 = vmatprep.subr.mxu0 %v590
    %885 = vmatpush1.msra.mxu0 %v589
    %886 = vmatprep.subr.mxu0 %v598
    %887 = vmatpush1.msra.mxu0 %v597
    %888 = vmatprep.subr.mxu0 %v606
    %889 = vmatpush1.msra.mxu0 %v605
    %890 = vmatprep.subr.mxu0 %v614
    %891 = vmatpush1.msra.mxu0 %v613
    %892 = vmatprep.subr.mxu0 %v622
    %893 = vmatpush1.msra.mxu0 %v621
    %894 = vmatprep.subr.mxu0 %v630
    %895 = vmatpush1.msra.mxu0 %v629
    %896 = vmatprep.subr.mxu0 %v638
    %897 = vmatpush1.msra.mxu0 %v637
    %898 = vmatprep.subr.mxu0 %v646
    %899 = vmatpush1.msra.mxu0 %v645
    %900 = vmatprep.subr.mxu0 %v654
    %901 = vmatpush1.msra.mxu0 %v653
    %902 = vmatprep.subr.mxu0 %v662
    %903 = vmatpush1.msra.mxu0 %v661
    %904 = vmatprep.subr.mxu0 %v670
    %905 = vmatpush1.msra.mxu0 %v669
    %906 = vmatprep.subr.mxu0 %v678
    %907 = vmatpush1.msra.mxu0 %v677
    %908 = vmatprep.subr.mxu0 %v686
    %909 = vmatpush1.msra.mxu0 %v685
    %910 = vmatprep.subr.mxu0 %v694
    %911 = vmatpush1.msra.mxu0 %v693
    %912 = vmatprep.subr.mxu0 %v702
    %913 = vmatpush1.msra.mxu0 %v701
    %914 = vmatprep.subr.mxu0 %v710
    %915 = vmatpush1.msra.mxu0 %v709
    %916 = vmatprep.subr.mxu0 %v718
    %917 = vmatpush1.msra.mxu0 %v717
    %918 = vmatprep.subr.mxu0 %v726
    %919 = vmatpush1.msra.mxu0 %v725
    %920 = vmatprep.subr.mxu0 %v734
    %921 = vmatpush1.msra.mxu0 %v733
    %922 = vmatprep.subr.mxu0 %v742
    %923 = vmatpush1.msra.mxu0 %v741
    %924 = vmatprep.subr.mxu0 %v750
    %925 = vmatpush1.msra.mxu0 %v749
    %926 = vmatprep.subr.mxu0 %v758
    %927 = vmatpush1.msra.mxu0 %v757
    %928 = vmatprep.subr.mxu0 %v766
    %929 = vmatpush1.msra.mxu0 %v765
    %930 = vmatprep.subr.mxu0 %v774
    %931 = vmatpush1.msra.mxu0 %v773
    %932 = vmatprep.subr.mxu0 %v782
    %933 = vmatpush1.msra.mxu0 %v781
    %934 = vmatprep.subr.mxu0 %v790
    %935 = vmatpush1.msra.mxu0 %v789
    %936 = vmatprep.subr.mxu0 %v798
    %937 = vmatpush1.msra.mxu0 %v797
    %938 = vmatprep.mubr.f32.mxu0 %v148
    %939 = vmatmul.mubr.f32.gmra.mrb[0].mxu0 %v147
    %v940 = vpop.f32.mrb[0].mxu0
    %v941 = vadd.f32 0.0, %v940
    %v942 = vpop.f32.mrb[0].mxu0
    %v943 = vadd.f32 0.0, %v942
    %944 = vdwg.mxu0
    %945 = vmatprep.subr.mxu0 %v552
    %946 = vmatpush1.msra.mxu0 %v551
    %947 = vmatprep.subr.mxu0 %v560
    %948 = vmatpush1.msra.mxu0 %v559
    %949 = vmatprep.subr.mxu0 %v568
    %950 = vmatpush1.msra.mxu0 %v567
    %951 = vmatprep.subr.mxu0 %v576
    %952 = vmatpush1.msra.mxu0 %v575
    %953 = vmatprep.subr.mxu0 %v584
    %954 = vmatpush1.msra.mxu0 %v583
    %955 = vmatprep.subr.mxu0 %v592
    %956 = vmatpush1.msra.mxu0 %v591
    %957 = vmatprep.subr.mxu0 %v600
    %958 = vmatpush1.msra.mxu0 %v599
    %959 = vmatprep.subr.mxu0 %v608
    %960 = vmatpush1.msra.mxu0 %v607
    %961 = vmatprep.subr.mxu0 %v616
    %962 = vmatpush1.msra.mxu0 %v615
    %963 = vmatprep.subr.mxu0 %v624
    %964 = vmatpush1.msra.mxu0 %v623
    %965 = vmatprep.subr.mxu0 %v632
    %966 = vmatpush1.msra.mxu0 %v631
    %967 = vmatprep.subr.mxu0 %v640
    %968 = vmatpush1.msra.mxu0 %v639
    %969 = vmatprep.subr.mxu0 %v648
    %970 = vmatpush1.msra.mxu0 %v647
    %971 = vmatprep.subr.mxu0 %v656
    %972 = vmatpush1.msra.mxu0 %v655
    %973 = vmatprep.subr.mxu0 %v664
    %974 = vmatpush1.msra.mxu0 %v663
    %975 = vmatprep.subr.mxu0 %v672
    %976 = vmatpush1.msra.mxu0 %v671
    %977 = vmatprep.subr.mxu0 %v680
    %978 = vmatpush1.msra.mxu0 %v679
    %979 = vmatprep.subr.mxu0 %v688
    %980 = vmatpush1.msra.mxu0 %v687
    %981 = vmatprep.subr.mxu0 %v696
    %982 = vmatpush1.msra.mxu0 %v695
    %983 = vmatprep.subr.mxu0 %v704
    %984 = vmatpush1.msra.mxu0 %v703
    %985 = vmatprep.subr.mxu0 %v712
    %986 = vmatpush1.msra.mxu0 %v711
    %987 = vmatprep.subr.mxu0 %v720
    %988 = vmatpush1.msra.mxu0 %v719
    %989 = vmatprep.subr.mxu0 %v728
    %990 = vmatpush1.msra.mxu0 %v727
    %991 = vmatprep.subr.mxu0 %v736
    %992 = vmatpush1.msra.mxu0 %v735
    %993 = vmatprep.subr.mxu0 %v744
    %994 = vmatpush1.msra.mxu0 %v743
    %995 = vmatprep.subr.mxu0 %v752
    %996 = vmatpush1.msra.mxu0 %v751
    %997 = vmatprep.subr.mxu0 %v760
    %998 = vmatpush1.msra.mxu0 %v759
    %999 = vmatprep.subr.mxu0 %v768
    %1000 = vmatpush1.msra.mxu0 %v767
    %1001 = vmatprep.subr.mxu0 %v776
    %1002 = vmatpush1.msra.mxu0 %v775
    %1003 = vmatprep.subr.mxu0 %v784
    %1004 = vmatpush1.msra.mxu0 %v783
    %1005 = vmatprep.subr.mxu0 %v792
    %1006 = vmatpush1.msra.mxu0 %v791
    %1007 = vmatprep.subr.mxu0 %v800
    %1008 = vmatpush1.msra.mxu0 %v799
    %1009 = vmatprep.mubr.f32.mxu0 %v148
    %1010 = vmatmul.mubr.f32.gmra.mrb[0].mxu0 %v147
    %v1011 = vpop.f32.mrb[0].mxu0
    %v1012 = vadd.f32 0.0, %v1011
    %v1013 = vpop.f32.mrb[0].mxu0
    %v1014 = vadd.f32 0.0, %v1013
    %1015 = vdwg.mxu0
    %1016 = vmatprep.subr.mxu0 %v554
    %1017 = vmatpush1.msra.mxu0 %v553
    %1018 = vmatprep.subr.mxu0 %v562
    %1019 = vmatpush1.msra.mxu0 %v561
    %1020 = vmatprep.subr.mxu0 %v570
    %1021 = vmatpush1.msra.mxu0 %v569
    %1022 = vmatprep.subr.mxu0 %v578
    %1023 = vmatpush1.msra.mxu0 %v577
    %1024 = vmatprep.subr.mxu0 %v586
    %1025 = vmatpush1.msra.mxu0 %v585
    %1026 = vmatprep.subr.mxu0 %v594
    %1027 = vmatpush1.msra.mxu0 %v593
    %1028 = vmatprep.subr.mxu0 %v602
    %1029 = vmatpush1.msra.mxu0 %v601
    %1030 = vmatprep.subr.mxu0 %v610
    %1031 = vmatpush1.msra.mxu0 %v609
    %1032 = vmatprep.subr.mxu0 %v618
    %1033 = vmatpush1.msra.mxu0 %v617
    %1034 = vmatprep.subr.mxu0 %v626
    %1035 = vmatpush1.msra.mxu0 %v625
    %1036 = vmatprep.subr.mxu0 %v634
    %1037 = vmatpush1.msra.mxu0 %v633
    %1038 = vmatprep.subr.mxu0 %v642
    %1039 = vmatpush1.msra.mxu0 %v641
    %1040 = vmatprep.subr.mxu0 %v650
    %1041 = vmatpush1.msra.mxu0 %v649
    %1042 = vmatprep.subr.mxu0 %v658
    %1043 = vmatpush1.msra.mxu0 %v657
    %1044 = vmatprep.subr.mxu0 %v666
    %1045 = vmatpush1.msra.mxu0 %v665
    %1046 = vmatprep.subr.mxu0 %v674
    %1047 = vmatpush1.msra.mxu0 %v673
    %1048 = vmatprep.subr.mxu0 %v682
    %1049 = vmatpush1.msra.mxu0 %v681
    %1050 = vmatprep.subr.mxu0 %v690
    %1051 = vmatpush1.msra.mxu0 %v689
    %1052 = vmatprep.subr.mxu0 %v698
    %1053 = vmatpush1.msra.mxu0 %v697
    %1054 = vmatprep.subr.mxu0 %v706
    %1055 = vmatpush1.msra.mxu0 %v705
    %1056 = vmatprep.subr.mxu0 %v714
    %1057 = vmatpush1.msra.mxu0 %v713
    %1058 = vmatprep.subr.mxu0 %v722
    %1059 = vmatpush1.msra.mxu0 %v721
    %1060 = vmatprep.subr.mxu0 %v730
    %1061 = vmatpush1.msra.mxu0 %v729
    %1062 = vmatprep.subr.mxu0 %v738
    %1063 = vmatpush1.msra.mxu0 %v737
    %1064 = vmatprep.subr.mxu0 %v746
    %1065 = vmatpush1.msra.mxu0 %v745
    %1066 = vmatprep.subr.mxu0 %v754
    %1067 = vmatpush1.msra.mxu0 %v753
    %1068 = vmatprep.subr.mxu0 %v762
    %1069 = vmatpush1.msra.mxu0 %v761
    %1070 = vmatprep.subr.mxu0 %v770
    %1071 = vmatpush1.msra.mxu0 %v769
    %1072 = vmatprep.subr.mxu0 %v778
    %1073 = vmatpush1.msra.mxu0 %v777
    %1074 = vmatprep.subr.mxu0 %v786
    %1075 = vmatpush1.msra.mxu0 %v785
    %1076 = vmatprep.subr.mxu0 %v794
    %1077 = vmatpush1.msra.mxu0 %v793
    %1078 = vmatprep.subr.mxu0 %v802
    %1079 = vmatpush1.msra.mxu0 %v801
    %1080 = vmatprep.mubr.f32.mxu0 %v148
    %1081 = vmatmul.mubr.f32.gmra.mrb[0].mxu0 %v147
    %v1082 = vpop.f32.mrb[0].mxu0
    %v1083 = vadd.f32 0.0, %v1082
    %v1084 = vpop.f32.mrb[0].mxu0
    %v1085 = vadd.f32 0.0, %v1084
    %1086 = vdwg.mxu0
    %v1471 = vunpack.c.l.b16 %v163
    %v1472 = vunpack.c.h.b16 %v163
    %v1473 = vunpack.c.l.b16 %v164
    %v1474 = vunpack.c.h.b16 %v164
    %v1475 = vunpack.c.l.b16 %v165
    %v1476 = vunpack.c.h.b16 %v165
    %v1477 = vunpack.c.l.b16 %v166
    %v1478 = vunpack.c.h.b16 %v166
    %v1479 = vunpack.c.l.b16 %v167
    %v1480 = vunpack.c.h.b16 %v167
    %v1481 = vunpack.c.l.b16 %v168
    %v1482 = vunpack.c.h.b16 %v168
    %v1483 = vunpack.c.l.b16 %v169
    %v1484 = vunpack.c.h.b16 %v169
    %v1485 = vunpack.c.l.b16 %v170
    %v1486 = vunpack.c.h.b16 %v170
    %v1487 = vunpack.c.l.b16 %v171
    %v1488 = vunpack.c.h.b16 %v171
    %v1489 = vunpack.c.l.b16 %v172
    %v1490 = vunpack.c.h.b16 %v172
    %v1491 = vunpack.c.l.b16 %v173
    %v1492 = vunpack.c.h.b16 %v173
    %v1493 = vunpack.c.l.b16 %v174
    %v1494 = vunpack.c.h.b16 %v174
    %v1495 = vunpack.c.l.b16 %v175
    %v1496 = vunpack.c.h.b16 %v175
    %v1497 = vunpack.c.l.b16 %v176
    %v1498 = vunpack.c.h.b16 %v176
    %v1499 = vunpack.c.l.b16 %v177
    %v1500 = vunpack.c.h.b16 %v177
    %v1501 = vunpack.c.l.b16 %v178
    %v1502 = vunpack.c.h.b16 %v178
    %v1503 = vunpack.c.l.b16 %v179
    %v1504 = vunpack.c.h.b16 %v179
    %v1505 = vunpack.c.l.b16 %v180
    %v1506 = vunpack.c.h.b16 %v180
    %v1507 = vunpack.c.l.b16 %v181
    %v1508 = vunpack.c.h.b16 %v181
    %v1509 = vunpack.c.l.b16 %v182
    %v1510 = vunpack.c.h.b16 %v182
    %v1511 = vunpack.c.l.b16 %v183
    %v1512 = vunpack.c.h.b16 %v183
    %v1513 = vunpack.c.l.b16 %v184
    %v1514 = vunpack.c.h.b16 %v184
    %v1515 = vunpack.c.l.b16 %v185
    %v1516 = vunpack.c.h.b16 %v185
    %v1517 = vunpack.c.l.b16 %v186
    %v1518 = vunpack.c.h.b16 %v186
    %v1519 = vunpack.c.l.b16 %v187
    %v1520 = vunpack.c.h.b16 %v187
    %v1521 = vunpack.c.l.b16 %v188
    %v1522 = vunpack.c.h.b16 %v188
    %v1523 = vunpack.c.l.b16 %v189
    %v1524 = vunpack.c.h.b16 %v189
    %v1525 = vunpack.c.l.b16 %v190
    %v1526 = vunpack.c.h.b16 %v190
    %v1527 = vunpack.c.l.b16 %v191
    %v1528 = vunpack.c.h.b16 %v191
    %v1529 = vunpack.c.l.b16 %v192
    %v1530 = vunpack.c.h.b16 %v192
    %v1531 = vunpack.c.l.b16 %v193
    %v1532 = vunpack.c.h.b16 %v193
    %v1533 = vunpack.c.l.b16 %v194
    %v1534 = vunpack.c.h.b16 %v194
    %v1535 = vunpack.c.l.b16 %v195
    %v1536 = vunpack.c.h.b16 %v195
    %v1537 = vunpack.c.l.b16 %v196
    %v1538 = vunpack.c.h.b16 %v196
    %v1539 = vunpack.c.l.b16 %v197
    %v1540 = vunpack.c.h.b16 %v197
    %v1541 = vunpack.c.l.b16 %v198
    %v1542 = vunpack.c.h.b16 %v198
    %v1543 = vunpack.c.l.b16 %v199
    %v1544 = vunpack.c.h.b16 %v199
    %v1545 = vunpack.c.l.b16 %v200
    %v1546 = vunpack.c.h.b16 %v200
    %v1547 = vunpack.c.l.b16 %v201
    %v1548 = vunpack.c.h.b16 %v201
    %v1549 = vunpack.c.l.b16 %v202
    %v1550 = vunpack.c.h.b16 %v202
    %v1551 = vunpack.c.l.b16 %v203
    %v1552 = vunpack.c.h.b16 %v203
    %v1553 = vunpack.c.l.b16 %v204
    %v1554 = vunpack.c.h.b16 %v204
    %v1555 = vunpack.c.l.b16 %v205
    %v1556 = vunpack.c.h.b16 %v205
    %v1557 = vunpack.c.l.b16 %v206
    %v1558 = vunpack.c.h.b16 %v206
    %v1559 = vunpack.c.l.b16 %v207
    %v1560 = vunpack.c.h.b16 %v207
    %v1561 = vunpack.c.l.b16 %v208
    %v1562 = vunpack.c.h.b16 %v208
    %v1563 = vunpack.c.l.b16 %v209
    %v1564 = vunpack.c.h.b16 %v209
    %v1565 = vunpack.c.l.b16 %v210
    %v1566 = vunpack.c.h.b16 %v210
    %v1567 = vunpack.c.l.b16 %v211
    %v1568 = vunpack.c.h.b16 %v211
    %v1569 = vunpack.c.l.b16 %v212
    %v1570 = vunpack.c.h.b16 %v212
    %v1571 = vunpack.c.l.b16 %v213
    %v1572 = vunpack.c.h.b16 %v213
    %v1573 = vunpack.c.l.b16 %v214
    %v1574 = vunpack.c.h.b16 %v214
    %v1575 = vunpack.c.l.b16 %v215
    %v1576 = vunpack.c.h.b16 %v215
    %v1577 = vunpack.c.l.b16 %v216
    %v1578 = vunpack.c.h.b16 %v216
    %v1579 = vunpack.c.l.b16 %v217
    %v1580 = vunpack.c.h.b16 %v217
    %v1581 = vunpack.c.l.b16 %v218
    %v1582 = vunpack.c.h.b16 %v218
    %v1583 = vunpack.c.l.b16 %v219
    %v1584 = vunpack.c.h.b16 %v219
    %v1585 = vunpack.c.l.b16 %v220
    %v1586 = vunpack.c.h.b16 %v220
    %v1587 = vunpack.c.l.b16 %v221
    %v1588 = vunpack.c.h.b16 %v221
    %v1589 = vunpack.c.l.b16 %v222
    %v1590 = vunpack.c.h.b16 %v222
    %v1591 = vunpack.c.l.b16 %v223
    %v1592 = vunpack.c.h.b16 %v223
    %v1593 = vunpack.c.l.b16 %v224
    %v1594 = vunpack.c.h.b16 %v224
    %v1595 = vunpack.c.l.b16 %v225
    %v1596 = vunpack.c.h.b16 %v225
    %v1597 = vunpack.c.l.b16 %v226
    %v1598 = vunpack.c.h.b16 %v226
    %v1599 = vunpack.c.l.b16 %v227
    %v1600 = vunpack.c.h.b16 %v227
    %v1601 = vunpack.c.l.b16 %v228
    %v1602 = vunpack.c.h.b16 %v228
    %v1603 = vunpack.c.l.b16 %v229
    %v1604 = vunpack.c.h.b16 %v229
    %v1605 = vunpack.c.l.b16 %v230
    %v1606 = vunpack.c.h.b16 %v230
    %v1607 = vunpack.c.l.b16 %v231
    %v1608 = vunpack.c.h.b16 %v231
    %v1609 = vunpack.c.l.b16 %v232
    %v1610 = vunpack.c.h.b16 %v232
    %v1611 = vunpack.c.l.b16 %v233
    %v1612 = vunpack.c.h.b16 %v233
    %v1613 = vunpack.c.l.b16 %v234
    %v1614 = vunpack.c.h.b16 %v234
    %v1615 = vunpack.c.l.b16 %v235
    %v1616 = vunpack.c.h.b16 %v235
    %v1617 = vunpack.c.l.b16 %v236
    %v1618 = vunpack.c.h.b16 %v236
    %v1619 = vunpack.c.l.b16 %v237
    %v1620 = vunpack.c.h.b16 %v237
    %v1621 = vunpack.c.l.b16 %v238
    %v1622 = vunpack.c.h.b16 %v238
    %v1623 = vunpack.c.l.b16 %v239
    %v1624 = vunpack.c.h.b16 %v239
    %v1625 = vunpack.c.l.b16 %v240
    %v1626 = vunpack.c.h.b16 %v240
    %v1627 = vunpack.c.l.b16 %v241
    %v1628 = vunpack.c.h.b16 %v241
    %v1629 = vunpack.c.l.b16 %v242
    %v1630 = vunpack.c.h.b16 %v242
    %v1631 = vunpack.c.l.b16 %v243
    %v1632 = vunpack.c.h.b16 %v243
    %v1633 = vunpack.c.l.b16 %v244
    %v1634 = vunpack.c.h.b16 %v244
    %v1635 = vunpack.c.l.b16 %v245
    %v1636 = vunpack.c.h.b16 %v245
    %v1637 = vunpack.c.l.b16 %v246
    %v1638 = vunpack.c.h.b16 %v246
    %v1639 = vunpack.c.l.b16 %v247
    %v1640 = vunpack.c.h.b16 %v247
    %v1641 = vunpack.c.l.b16 %v248
    %v1642 = vunpack.c.h.b16 %v248
    %v1643 = vunpack.c.l.b16 %v249
    %v1644 = vunpack.c.h.b16 %v249
    %v1645 = vunpack.c.l.b16 %v250
    %v1646 = vunpack.c.h.b16 %v250
    %v1647 = vunpack.c.l.b16 %v251
    %v1648 = vunpack.c.h.b16 %v251
    %v1649 = vunpack.c.l.b16 %v252
    %v1650 = vunpack.c.h.b16 %v252
    %v1651 = vunpack.c.l.b16 %v253
    %v1652 = vunpack.c.h.b16 %v253
    %v1653 = vunpack.c.l.b16 %v254
    %v1654 = vunpack.c.h.b16 %v254
    %v1655 = vunpack.c.l.b16 %v255
    %v1656 = vunpack.c.h.b16 %v255
    %v1657 = vunpack.c.l.b16 %v256
    %v1658 = vunpack.c.h.b16 %v256
    %v1659 = vunpack.c.l.b16 %v257
    %v1660 = vunpack.c.h.b16 %v257
    %v1661 = vunpack.c.l.b16 %v258
    %v1662 = vunpack.c.h.b16 %v258
    %v1663 = vunpack.c.l.b16 %v259
    %v1664 = vunpack.c.h.b16 %v259
    %v1665 = vunpack.c.l.b16 %v260
    %v1666 = vunpack.c.h.b16 %v260
    %v1667 = vunpack.c.l.b16 %v261
    %v1668 = vunpack.c.h.b16 %v261
    %v1669 = vunpack.c.l.b16 %v262
    %v1670 = vunpack.c.h.b16 %v262
    %v1671 = vunpack.c.l.b16 %v263
    %v1672 = vunpack.c.h.b16 %v263
    %v1673 = vunpack.c.l.b16 %v264
    %v1674 = vunpack.c.h.b16 %v264
    %v1675 = vunpack.c.l.b16 %v265
    %v1676 = vunpack.c.h.b16 %v265
    %v1677 = vunpack.c.l.b16 %v266
    %v1678 = vunpack.c.h.b16 %v266
    %v1679 = vunpack.c.l.b16 %v267
    %v1680 = vunpack.c.h.b16 %v267
    %v1681 = vunpack.c.l.b16 %v268
    %v1682 = vunpack.c.h.b16 %v268
    %v1683 = vunpack.c.l.b16 %v269
    %v1684 = vunpack.c.h.b16 %v269
    %v1685 = vunpack.c.l.b16 %v270
    %v1686 = vunpack.c.h.b16 %v270
    %v1687 = vunpack.c.l.b16 %v271
    %v1688 = vunpack.c.h.b16 %v271
    %v1689 = vunpack.c.l.b16 %v272
    %v1690 = vunpack.c.h.b16 %v272
    %v1691 = vunpack.c.l.b16 %v273
    %v1692 = vunpack.c.h.b16 %v273
    %v1693 = vunpack.c.l.b16 %v274
    %v1694 = vunpack.c.h.b16 %v274
    %v1695 = vunpack.c.l.b16 %v275
    %v1696 = vunpack.c.h.b16 %v275
    %v1697 = vunpack.c.l.b16 %v276
    %v1698 = vunpack.c.h.b16 %v276
    %v1699 = vunpack.c.l.b16 %v277
    %v1700 = vunpack.c.h.b16 %v277
    %v1701 = vunpack.c.l.b16 %v278
    %v1702 = vunpack.c.h.b16 %v278
    %v1703 = vunpack.c.l.b16 %v279
    %v1704 = vunpack.c.h.b16 %v279
    %v1705 = vunpack.c.l.b16 %v280
    %v1706 = vunpack.c.h.b16 %v280
    %v1707 = vunpack.c.l.b16 %v281
    %v1708 = vunpack.c.h.b16 %v281
    %v1709 = vunpack.c.l.b16 %v282
    %v1710 = vunpack.c.h.b16 %v282
    %v1711 = vunpack.c.l.b16 %v283
    %v1712 = vunpack.c.h.b16 %v283
    %v1713 = vunpack.c.l.b16 %v284
    %v1714 = vunpack.c.h.b16 %v284
    %v1715 = vunpack.c.l.b16 %v285
    %v1716 = vunpack.c.h.b16 %v285
    %v1717 = vunpack.c.l.b16 %v286
    %v1718 = vunpack.c.h.b16 %v286
    %v1719 = vunpack.c.l.b16 %v287
    %v1720 = vunpack.c.h.b16 %v287
    %v1721 = vunpack.c.l.b16 %v288
    %v1722 = vunpack.c.h.b16 %v288
    %v1723 = vunpack.c.l.b16 %v289
    %v1724 = vunpack.c.h.b16 %v289
    %v1725 = vunpack.c.l.b16 %v290
    %v1726 = vunpack.c.h.b16 %v290
    %v1727 = vunpack.c.l.b16 %v291
    %v1728 = vunpack.c.h.b16 %v291
    %v1729 = vunpack.c.l.b16 %v292
    %v1730 = vunpack.c.h.b16 %v292
    %v1731 = vunpack.c.l.b16 %v293
    %v1732 = vunpack.c.h.b16 %v293
    %v1733 = vunpack.c.l.b16 %v294
    %v1734 = vunpack.c.h.b16 %v294
    %v1735 = vunpack.c.l.b16 %v295
    %v1736 = vunpack.c.h.b16 %v295
    %v1737 = vunpack.c.l.b16 %v296
    %v1738 = vunpack.c.h.b16 %v296
    %v1739 = vunpack.c.l.b16 %v297
    %v1740 = vunpack.c.h.b16 %v297
    %v1741 = vunpack.c.l.b16 %v298
    %v1742 = vunpack.c.h.b16 %v298
    %v1743 = vunpack.c.l.b16 %v299
    %v1744 = vunpack.c.h.b16 %v299
    %v1745 = vunpack.c.l.b16 %v300
    %v1746 = vunpack.c.h.b16 %v300
    %v1747 = vunpack.c.l.b16 %v301
    %v1748 = vunpack.c.h.b16 %v301
    %v1749 = vunpack.c.l.b16 %v302
    %v1750 = vunpack.c.h.b16 %v302
    %v1751 = vunpack.c.l.b16 %v303
    %v1752 = vunpack.c.h.b16 %v303
    %v1753 = vunpack.c.l.b16 %v304
    %v1754 = vunpack.c.h.b16 %v304
    %v1755 = vunpack.c.l.b16 %v305
    %v1756 = vunpack.c.h.b16 %v305
    %v1757 = vunpack.c.l.b16 %v306
    %v1758 = vunpack.c.h.b16 %v306
    %v1759 = vunpack.c.l.b16 %v307
    %v1760 = vunpack.c.h.b16 %v307
    %v1761 = vunpack.c.l.b16 %v308
    %v1762 = vunpack.c.h.b16 %v308
    %v1763 = vunpack.c.l.b16 %v309
    %v1764 = vunpack.c.h.b16 %v309
    %v1765 = vunpack.c.l.b16 %v310
    %v1766 = vunpack.c.h.b16 %v310
    %v1767 = vunpack.c.l.b16 %v311
    %v1768 = vunpack.c.h.b16 %v311
    %v1769 = vunpack.c.l.b16 %v312
    %v1770 = vunpack.c.h.b16 %v312
    %v1771 = vunpack.c.l.b16 %v313
    %v1772 = vunpack.c.h.b16 %v313
    %v1773 = vunpack.c.l.b16 %v314
    %v1774 = vunpack.c.h.b16 %v314
    %v1775 = vunpack.c.l.b16 %v315
    %v1776 = vunpack.c.h.b16 %v315
    %v1777 = vunpack.c.l.b16 %v316
    %v1778 = vunpack.c.h.b16 %v316
    %v1779 = vunpack.c.l.b16 %v317
    %v1780 = vunpack.c.h.b16 %v317
    %v1781 = vunpack.c.l.b16 %v318
    %v1782 = vunpack.c.h.b16 %v318
    %v1783 = vunpack.c.l.b16 %v319
    %v1784 = vunpack.c.h.b16 %v319
    %v1785 = vunpack.c.l.b16 %v320
    %v1786 = vunpack.c.h.b16 %v320
    %v1787 = vunpack.c.l.b16 %v321
    %v1788 = vunpack.c.h.b16 %v321
    %v1789 = vunpack.c.l.b16 %v322
    %v1790 = vunpack.c.h.b16 %v322
    %v1791 = vunpack.c.l.b16 %v323
    %v1792 = vunpack.c.h.b16 %v323
    %v1793 = vunpack.c.l.b16 %v324
    %v1794 = vunpack.c.h.b16 %v324
    %v1795 = vunpack.c.l.b16 %v325
    %v1796 = vunpack.c.h.b16 %v325
    %v1797 = vunpack.c.l.b16 %v326
    %v1798 = vunpack.c.h.b16 %v326
    %v1799 = vunpack.c.l.b16 %v327
    %v1800 = vunpack.c.h.b16 %v327
    %v1801 = vunpack.c.l.b16 %v328
    %v1802 = vunpack.c.h.b16 %v328
    %v1803 = vunpack.c.l.b16 %v329
    %v1804 = vunpack.c.h.b16 %v329
    %v1805 = vunpack.c.l.b16 %v330
    %v1806 = vunpack.c.h.b16 %v330
    %v1807 = vunpack.c.l.b16 %v331
    %v1808 = vunpack.c.h.b16 %v331
    %v1809 = vunpack.c.l.b16 %v332
    %v1810 = vunpack.c.h.b16 %v332
    %v1811 = vunpack.c.l.b16 %v333
    %v1812 = vunpack.c.h.b16 %v333
    %v1813 = vunpack.c.l.b16 %v334
    %v1814 = vunpack.c.h.b16 %v334
    %v1815 = vunpack.c.l.b16 %v335
    %v1816 = vunpack.c.h.b16 %v335
    %v1817 = vunpack.c.l.b16 %v336
    %v1818 = vunpack.c.h.b16 %v336
    %v1819 = vunpack.c.l.b16 %v337
    %v1820 = vunpack.c.h.b16 %v337
    %v1821 = vunpack.c.l.b16 %v338
    %v1822 = vunpack.c.h.b16 %v338
    %v1823 = vunpack.c.l.b16 %v339
    %v1824 = vunpack.c.h.b16 %v339
    %v1825 = vunpack.c.l.b16 %v340
    %v1826 = vunpack.c.h.b16 %v340
    %v1827 = vunpack.c.l.b16 %v341
    %v1828 = vunpack.c.h.b16 %v341
    %v1829 = vunpack.c.l.b16 %v342
    %v1830 = vunpack.c.h.b16 %v342
    %v1831 = vunpack.c.l.b16 %v343
    %v1832 = vunpack.c.h.b16 %v343
    %v1833 = vunpack.c.l.b16 %v344
    %v1834 = vunpack.c.h.b16 %v344
    %v1835 = vunpack.c.l.b16 %v345
    %v1836 = vunpack.c.h.b16 %v345
    %v1837 = vunpack.c.l.b16 %v346
    %v1838 = vunpack.c.h.b16 %v346
    %v1839 = vunpack.c.l.b16 %v347
    %v1840 = vunpack.c.h.b16 %v347
    %v1841 = vunpack.c.l.b16 %v348
    %v1842 = vunpack.c.h.b16 %v348
    %v1843 = vunpack.c.l.b16 %v349
    %v1844 = vunpack.c.h.b16 %v349
    %v1845 = vunpack.c.l.b16 %v350
    %v1846 = vunpack.c.h.b16 %v350
    %v1847 = vunpack.c.l.b16 %v351
    %v1848 = vunpack.c.h.b16 %v351
    %v1849 = vunpack.c.l.b16 %v352
    %v1850 = vunpack.c.h.b16 %v352
    %v1851 = vunpack.c.l.b16 %v353
    %v1852 = vunpack.c.h.b16 %v353
    %v1853 = vunpack.c.l.b16 %v354
    %v1854 = vunpack.c.h.b16 %v354
    %v1855 = vunpack.c.l.b16 %v355
    %v1856 = vunpack.c.h.b16 %v355
    %v1857 = vunpack.c.l.b16 %v356
    %v1858 = vunpack.c.h.b16 %v356
    %v1859 = vunpack.c.l.b16 %v357
    %v1860 = vunpack.c.h.b16 %v357
    %v1861 = vunpack.c.l.b16 %v358
    %v1862 = vunpack.c.h.b16 %v358
    %v1863 = vunpack.c.l.b16 %v359
    %v1864 = vunpack.c.h.b16 %v359
    %v1865 = vunpack.c.l.b16 %v360
    %v1866 = vunpack.c.h.b16 %v360
    %v1867 = vunpack.c.l.b16 %v361
    %v1868 = vunpack.c.h.b16 %v361
    %v1869 = vunpack.c.l.b16 %v362
    %v1870 = vunpack.c.h.b16 %v362
    %v1871 = vunpack.c.l.b16 %v363
    %v1872 = vunpack.c.h.b16 %v363
    %v1873 = vunpack.c.l.b16 %v364
    %v1874 = vunpack.c.h.b16 %v364
    %v1875 = vunpack.c.l.b16 %v365
    %v1876 = vunpack.c.h.b16 %v365
    %v1877 = vunpack.c.l.b16 %v366
    %v1878 = vunpack.c.h.b16 %v366
    %v1879 = vunpack.c.l.b16 %v367
    %v1880 = vunpack.c.h.b16 %v367
    %v1881 = vunpack.c.l.b16 %v368
    %v1882 = vunpack.c.h.b16 %v368
    %v1883 = vunpack.c.l.b16 %v369
    %v1884 = vunpack.c.h.b16 %v369
    %v1885 = vunpack.c.l.b16 %v370
    %v1886 = vunpack.c.h.b16 %v370
    %v1887 = vunpack.c.l.b16 %v371
    %v1888 = vunpack.c.h.b16 %v371
    %v1889 = vunpack.c.l.b16 %v372
    %v1890 = vunpack.c.h.b16 %v372
    %v1891 = vunpack.c.l.b16 %v373
    %v1892 = vunpack.c.h.b16 %v373
    %v1893 = vunpack.c.l.b16 %v374
    %v1894 = vunpack.c.h.b16 %v374
    %v1895 = vunpack.c.l.b16 %v375
    %v1896 = vunpack.c.h.b16 %v375
    %v1897 = vunpack.c.l.b16 %v376
    %v1898 = vunpack.c.h.b16 %v376
    %v1899 = vunpack.c.l.b16 %v377
    %v1900 = vunpack.c.h.b16 %v377
    %v1901 = vunpack.c.l.b16 %v378
    %v1902 = vunpack.c.h.b16 %v378
    %v1903 = vunpack.c.l.b16 %v379
    %v1904 = vunpack.c.h.b16 %v379
    %v1905 = vunpack.c.l.b16 %v380
    %v1906 = vunpack.c.h.b16 %v380
    %v1907 = vunpack.c.l.b16 %v381
    %v1908 = vunpack.c.h.b16 %v381
    %v1909 = vunpack.c.l.b16 %v382
    %v1910 = vunpack.c.h.b16 %v382
    %v1911 = vunpack.c.l.b16 %v383
    %v1912 = vunpack.c.h.b16 %v383
    %v1913 = vunpack.c.l.b16 %v384
    %v1914 = vunpack.c.h.b16 %v384
    %v1915 = vunpack.c.l.b16 %v385
    %v1916 = vunpack.c.h.b16 %v385
    %v1917 = vunpack.c.l.b16 %v386
    %v1918 = vunpack.c.h.b16 %v386
    %v1919 = vunpack.c.l.b16 %v387
    %v1920 = vunpack.c.h.b16 %v387
    %v1921 = vunpack.c.l.b16 %v388
    %v1922 = vunpack.c.h.b16 %v388
    %v1923 = vunpack.c.l.b16 %v389
    %v1924 = vunpack.c.h.b16 %v389
    %v1925 = vunpack.c.l.b16 %v390
    %v1926 = vunpack.c.h.b16 %v390
    %v1927 = vunpack.c.l.b16 %v391
    %v1928 = vunpack.c.h.b16 %v391
    %v1929 = vunpack.c.l.b16 %v392
    %v1930 = vunpack.c.h.b16 %v392
    %v1931 = vunpack.c.l.b16 %v393
    %v1932 = vunpack.c.h.b16 %v393
    %v1933 = vunpack.c.l.b16 %v394
    %v1934 = vunpack.c.h.b16 %v394
    %v1935 = vunpack.c.l.b16 %v395
    %v1936 = vunpack.c.h.b16 %v395
    %v1937 = vunpack.c.l.b16 %v396
    %v1938 = vunpack.c.h.b16 %v396
    %v1939 = vunpack.c.l.b16 %v397
    %v1940 = vunpack.c.h.b16 %v397
    %v1941 = vunpack.c.l.b16 %v398
    %v1942 = vunpack.c.h.b16 %v398
    %v1943 = vunpack.c.l.b16 %v399
    %v1944 = vunpack.c.h.b16 %v399
    %v1945 = vunpack.c.l.b16 %v400
    %v1946 = vunpack.c.h.b16 %v400
    %v1947 = vunpack.c.l.b16 %v401
    %v1948 = vunpack.c.h.b16 %v401
    %v1949 = vunpack.c.l.b16 %v402
    %v1950 = vunpack.c.h.b16 %v402
    %v1951 = vunpack.c.l.b16 %v403
    %v1952 = vunpack.c.h.b16 %v403
    %v1953 = vunpack.c.l.b16 %v404
    %v1954 = vunpack.c.h.b16 %v404
    %v1955 = vunpack.c.l.b16 %v405
    %v1956 = vunpack.c.h.b16 %v405
    %v1957 = vunpack.c.l.b16 %v406
    %v1958 = vunpack.c.h.b16 %v406
    %v1959 = vunpack.c.l.b16 %v407
    %v1960 = vunpack.c.h.b16 %v407
    %v1961 = vunpack.c.l.b16 %v408
    %v1962 = vunpack.c.h.b16 %v408
    %v1963 = vunpack.c.l.b16 %v409
    %v1964 = vunpack.c.h.b16 %v409
    %v1965 = vunpack.c.l.b16 %v410
    %v1966 = vunpack.c.h.b16 %v410
    %v1967 = vunpack.c.l.b16 %v411
    %v1968 = vunpack.c.h.b16 %v411
    %v1969 = vunpack.c.l.b16 %v412
    %v1970 = vunpack.c.h.b16 %v412
    %v1971 = vunpack.c.l.b16 %v413
    %v1972 = vunpack.c.h.b16 %v413
    %v1973 = vunpack.c.l.b16 %v414
    %v1974 = vunpack.c.h.b16 %v414
    %v1975 = vunpack.c.l.b16 %v415
    %v1976 = vunpack.c.h.b16 %v415
    %v1977 = vunpack.c.l.b16 %v416
    %v1978 = vunpack.c.h.b16 %v416
    %v1979 = vunpack.c.l.b16 %v417
    %v1980 = vunpack.c.h.b16 %v417
    %v1981 = vunpack.c.l.b16 %v418
    %v1982 = vunpack.c.h.b16 %v418
    %v1983 = vunpack.c.l.b16 %v419
    %v1984 = vunpack.c.h.b16 %v419
    %v1985 = vunpack.c.l.b16 %v420
    %v1986 = vunpack.c.h.b16 %v420
    %v1987 = vunpack.c.l.b16 %v421
    %v1988 = vunpack.c.h.b16 %v421
    %v1989 = vunpack.c.l.b16 %v422
    %v1990 = vunpack.c.h.b16 %v422
    %v1991 = vunpack.c.l.b16 %v423
    %v1992 = vunpack.c.h.b16 %v423
    %v1993 = vunpack.c.l.b16 %v424
    %v1994 = vunpack.c.h.b16 %v424
    %v1995 = vunpack.c.l.b16 %v425
    %v1996 = vunpack.c.h.b16 %v425
    %v1997 = vunpack.c.l.b16 %v426
    %v1998 = vunpack.c.h.b16 %v426
    %v1999 = vunpack.c.l.b16 %v427
    %v2000 = vunpack.c.h.b16 %v427
    %v2001 = vunpack.c.l.b16 %v428
    %v2002 = vunpack.c.h.b16 %v428
    %v2003 = vunpack.c.l.b16 %v429
    %v2004 = vunpack.c.h.b16 %v429
    %v2005 = vunpack.c.l.b16 %v430
    %v2006 = vunpack.c.h.b16 %v430
    %v2007 = vunpack.c.l.b16 %v431
    %v2008 = vunpack.c.h.b16 %v431
    %v2009 = vunpack.c.l.b16 %v432
    %v2010 = vunpack.c.h.b16 %v432
    %v2011 = vunpack.c.l.b16 %v433
    %v2012 = vunpack.c.h.b16 %v433
    %v2013 = vunpack.c.l.b16 %v434
    %v2014 = vunpack.c.h.b16 %v434
    %v2015 = vunpack.c.l.b16 %v435
    %v2016 = vunpack.c.h.b16 %v435
    %v2017 = vunpack.c.l.b16 %v436
    %v2018 = vunpack.c.h.b16 %v436
    %v2019 = vunpack.c.l.b16 %v437
    %v2020 = vunpack.c.h.b16 %v437
    %v2021 = vunpack.c.l.b16 %v438
    %v2022 = vunpack.c.h.b16 %v438
    %v2023 = vunpack.c.l.b16 %v439
    %v2024 = vunpack.c.h.b16 %v439
    %v2025 = vunpack.c.l.b16 %v440
    %v2026 = vunpack.c.h.b16 %v440
    %v2027 = vunpack.c.l.b16 %v441
    %v2028 = vunpack.c.h.b16 %v441
    %v2029 = vunpack.c.l.b16 %v442
    %v2030 = vunpack.c.h.b16 %v442
    %v2031 = vunpack.c.l.b16 %v443
    %v2032 = vunpack.c.h.b16 %v443
    %v2033 = vunpack.c.l.b16 %v444
    %v2034 = vunpack.c.h.b16 %v444
    %v2035 = vunpack.c.l.b16 %v445
    %v2036 = vunpack.c.h.b16 %v445
    %v2037 = vunpack.c.l.b16 %v446
    %v2038 = vunpack.c.h.b16 %v446
    %v2039 = vunpack.c.l.b16 %v447
    %v2040 = vunpack.c.h.b16 %v447
    %v2041 = vunpack.c.l.b16 %v448
    %v2042 = vunpack.c.h.b16 %v448
    %v2043 = vunpack.c.l.b16 %v449
    %v2044 = vunpack.c.h.b16 %v449
    %v2045 = vunpack.c.l.b16 %v450
    %v2046 = vunpack.c.h.b16 %v450
    %v2047 = vunpack.c.l.b16 %v451
    %v2048 = vunpack.c.h.b16 %v451
    %v2049 = vunpack.c.l.b16 %v452
    %v2050 = vunpack.c.h.b16 %v452
    %v2051 = vunpack.c.l.b16 %v453
    %v2052 = vunpack.c.h.b16 %v453
    %v2053 = vunpack.c.l.b16 %v454
    %v2054 = vunpack.c.h.b16 %v454
    %v2055 = vunpack.c.l.b16 %v455
    %v2056 = vunpack.c.h.b16 %v455
    %v2057 = vunpack.c.l.b16 %v456
    %v2058 = vunpack.c.h.b16 %v456
    %v2059 = vunpack.c.l.b16 %v457
    %v2060 = vunpack.c.h.b16 %v457
    %v2061 = vunpack.c.l.b16 %v458
    %v2062 = vunpack.c.h.b16 %v458
    %v2063 = vunpack.c.l.b16 %v459
    %v2064 = vunpack.c.h.b16 %v459
    %v2065 = vunpack.c.l.b16 %v460
    %v2066 = vunpack.c.h.b16 %v460
    %v2067 = vunpack.c.l.b16 %v461
    %v2068 = vunpack.c.h.b16 %v461
    %v2069 = vunpack.c.l.b16 %v462
    %v2070 = vunpack.c.h.b16 %v462
    %v2071 = vunpack.c.l.b16 %v463
    %v2072 = vunpack.c.h.b16 %v463
    %v2073 = vunpack.c.l.b16 %v464
    %v2074 = vunpack.c.h.b16 %v464
    %v2075 = vunpack.c.l.b16 %v465
    %v2076 = vunpack.c.h.b16 %v465
    %v2077 = vunpack.c.l.b16 %v466
    %v2078 = vunpack.c.h.b16 %v466
    %v2079 = vunpack.c.l.b16 %v467
    %v2080 = vunpack.c.h.b16 %v467
    %v2081 = vunpack.c.l.b16 %v468
    %v2082 = vunpack.c.h.b16 %v468
    %v2083 = vunpack.c.l.b16 %v469
    %v2084 = vunpack.c.h.b16 %v469
    %v2085 = vunpack.c.l.b16 %v470
    %v2086 = vunpack.c.h.b16 %v470
    %v2087 = vunpack.c.l.b16 %v471
    %v2088 = vunpack.c.h.b16 %v471
    %v2089 = vunpack.c.l.b16 %v472
    %v2090 = vunpack.c.h.b16 %v472
    %v2091 = vunpack.c.l.b16 %v473
    %v2092 = vunpack.c.h.b16 %v473
    %v2093 = vunpack.c.l.b16 %v474
    %v2094 = vunpack.c.h.b16 %v474
    %v2095 = vunpack.c.l.b16 %v475
    %v2096 = vunpack.c.h.b16 %v475
    %v2097 = vunpack.c.l.b16 %v476
    %v2098 = vunpack.c.h.b16 %v476
    %v2099 = vunpack.c.l.b16 %v477
    %v2100 = vunpack.c.h.b16 %v477
    %v2101 = vunpack.c.l.b16 %v478
    %v2102 = vunpack.c.h.b16 %v478
    %v2103 = vunpack.c.l.b16 %v479
    %v2104 = vunpack.c.h.b16 %v479
    %v2105 = vunpack.c.l.b16 %v480
    %v2106 = vunpack.c.h.b16 %v480
    %v2107 = vunpack.c.l.b16 %v481
    %v2108 = vunpack.c.h.b16 %v481
    %v2109 = vunpack.c.l.b16 %v482
    %v2110 = vunpack.c.h.b16 %v482
    %v2111 = vunpack.c.l.b16 %v483
    %v2112 = vunpack.c.h.b16 %v483
    %v2113 = vunpack.c.l.b16 %v484
    %v2114 = vunpack.c.h.b16 %v484
    %v2115 = vunpack.c.l.b16 %v485
    %v2116 = vunpack.c.h.b16 %v485
    %v2117 = vunpack.c.l.b16 %v486
    %v2118 = vunpack.c.h.b16 %v486
    %v2119 = vunpack.c.l.b16 %v487
    %v2120 = vunpack.c.h.b16 %v487
    %v2121 = vunpack.c.l.b16 %v488
    %v2122 = vunpack.c.h.b16 %v488
    %v2123 = vunpack.c.l.b16 %v489
    %v2124 = vunpack.c.h.b16 %v489
    %v2125 = vunpack.c.l.b16 %v490
    %v2126 = vunpack.c.h.b16 %v490
    %v2127 = vunpack.c.l.b16 %v491
    %v2128 = vunpack.c.h.b16 %v491
    %v2129 = vunpack.c.l.b16 %v492
    %v2130 = vunpack.c.h.b16 %v492
    %v2131 = vunpack.c.l.b16 %v493
    %v2132 = vunpack.c.h.b16 %v493
    %v2133 = vunpack.c.l.b16 %v494
    %v2134 = vunpack.c.h.b16 %v494
    %v2135 = vunpack.c.l.b16 %v495
    %v2136 = vunpack.c.h.b16 %v495
    %v2137 = vunpack.c.l.b16 %v496
    %v2138 = vunpack.c.h.b16 %v496
    %v2139 = vunpack.c.l.b16 %v497
    %v2140 = vunpack.c.h.b16 %v497
    %v2141 = vunpack.c.l.b16 %v498
    %v2142 = vunpack.c.h.b16 %v498
    %v2143 = vunpack.c.l.b16 %v499
    %v2144 = vunpack.c.h.b16 %v499
    %v2145 = vunpack.c.l.b16 %v500
    %v2146 = vunpack.c.h.b16 %v500
    %v2147 = vunpack.c.l.b16 %v501
    %v2148 = vunpack.c.h.b16 %v501
    %v2149 = vunpack.c.l.b16 %v502
    %v2150 = vunpack.c.h.b16 %v502
    %v2151 = vunpack.c.l.b16 %v503
    %v2152 = vunpack.c.h.b16 %v503
    %v2153 = vunpack.c.l.b16 %v504
    %v2154 = vunpack.c.h.b16 %v504
    %v2155 = vunpack.c.l.b16 %v505
    %v2156 = vunpack.c.h.b16 %v505
    %v2157 = vunpack.c.l.b16 %v506
    %v2158 = vunpack.c.h.b16 %v506
    %v2159 = vunpack.c.l.b16 %v507
    %v2160 = vunpack.c.h.b16 %v507
    %v2161 = vunpack.c.l.b16 %v508
    %v2162 = vunpack.c.h.b16 %v508
    %v2163 = vunpack.c.l.b16 %v509
    %v2164 = vunpack.c.h.b16 %v509
    %v2165 = vunpack.c.l.b16 %v510
    %v2166 = vunpack.c.h.b16 %v510
    %v2167 = vunpack.c.l.b16 %v511
    %v2168 = vunpack.c.h.b16 %v511
    %v2169 = vunpack.c.l.b16 %v512
    %v2170 = vunpack.c.h.b16 %v512
    %v2171 = vunpack.c.l.b16 %v513
    %v2172 = vunpack.c.h.b16 %v513
    %v2173 = vunpack.c.l.b16 %v514
    %v2174 = vunpack.c.h.b16 %v514
    %v2175 = vunpack.c.l.b16 %v515
    %v2176 = vunpack.c.h.b16 %v515
    %v2177 = vunpack.c.l.b16 %v516
    %v2178 = vunpack.c.h.b16 %v516
    %v2179 = vunpack.c.l.b16 %v517
    %v2180 = vunpack.c.h.b16 %v517
    %v2181 = vunpack.c.l.b16 %v518
    %v2182 = vunpack.c.h.b16 %v518
    %v2183 = vunpack.c.l.b16 %v519
    %v2184 = vunpack.c.h.b16 %v519
    %v2185 = vunpack.c.l.b16 %v520
    %v2186 = vunpack.c.h.b16 %v520
    %v2187 = vunpack.c.l.b16 %v521
    %v2188 = vunpack.c.h.b16 %v521
    %v2189 = vunpack.c.l.b16 %v522
    %v2190 = vunpack.c.h.b16 %v522
    %v2191 = vunpack.c.l.b16 %v523
    %v2192 = vunpack.c.h.b16 %v523
    %v2193 = vunpack.c.l.b16 %v524
    %v2194 = vunpack.c.h.b16 %v524
    %v2195 = vunpack.c.l.b16 %v525
    %v2196 = vunpack.c.h.b16 %v525
    %v2197 = vunpack.c.l.b16 %v526
    %v2198 = vunpack.c.h.b16 %v526
    %v2199 = vunpack.c.l.b16 %v527
    %v2200 = vunpack.c.h.b16 %v527
    %v2201 = vunpack.c.l.b16 %v528
    %v2202 = vunpack.c.h.b16 %v528
    %v2203 = vunpack.c.l.b16 %v529
    %v2204 = vunpack.c.h.b16 %v529
    %v2205 = vunpack.c.l.b16 %v530
    %v2206 = vunpack.c.h.b16 %v530
    %v2207 = vunpack.c.l.b16 %v531
    %v2208 = vunpack.c.h.b16 %v531
    %v2209 = vunpack.c.l.b16 %v532
    %v2210 = vunpack.c.h.b16 %v532
    %v2211 = vunpack.c.l.b16 %v533
    %v2212 = vunpack.c.h.b16 %v533
    %v2213 = vunpack.c.l.b16 %v534
    %v2214 = vunpack.c.h.b16 %v534
    %v2215 = vunpack.c.l.b16 %v535
    %v2216 = vunpack.c.h.b16 %v535
    %v2217 = vunpack.c.l.b16 %v536
    %v2218 = vunpack.c.h.b16 %v536
    %v2219 = vunpack.c.l.b16 %v537
    %v2220 = vunpack.c.h.b16 %v537
    %v2221 = vunpack.c.l.b16 %v538
    %v2222 = vunpack.c.h.b16 %v538
    %v2223 = vunpack.c.l.b16 %v539
    %v2224 = vunpack.c.h.b16 %v539
    %v2225 = vunpack.c.l.b16 %v540
    %v2226 = vunpack.c.h.b16 %v540
    %v2227 = vunpack.c.l.b16 %v541
    %v2228 = vunpack.c.h.b16 %v541
    %v2229 = vunpack.c.l.b16 %v542
    %v2230 = vunpack.c.h.b16 %v542
    %v2231 = vunpack.c.l.b16 %v543
    %v2232 = vunpack.c.h.b16 %v543
    %v2233 = vunpack.c.l.b16 %v544
    %v2234 = vunpack.c.h.b16 %v544
    %v2235 = vunpack.c.l.b16 %v545
    %v2236 = vunpack.c.h.b16 %v545
    %v2237 = vunpack.c.l.b16 %v546
    %v2238 = vunpack.c.h.b16 %v546
    %v2239 = vpack.c.b16 %v1479, %v1471
    %v2240 = vpack.c.b16 %v1480, %v1472
    %v2241 = vpack.c.b16 %v1481, %v1473
    %v2242 = vpack.c.b16 %v1482, %v1474
    %v2243 = vpack.c.b16 %v1483, %v1475
    %v2244 = vpack.c.b16 %v1484, %v1476
    %v2245 = vpack.c.b16 %v1485, %v1477
    %v2246 = vpack.c.b16 %v1486, %v1478
    %v2247 = vpack.c.b16 %v1495, %v1487
    %v2248 = vpack.c.b16 %v1496, %v1488
    %v2249 = vpack.c.b16 %v1497, %v1489
    %v2250 = vpack.c.b16 %v1498, %v1490
    %v2251 = vpack.c.b16 %v1499, %v1491
    %v2252 = vpack.c.b16 %v1500, %v1492
    %v2253 = vpack.c.b16 %v1501, %v1493
    %v2254 = vpack.c.b16 %v1502, %v1494
    %v2255 = vpack.c.b16 %v1511, %v1503
    %v2256 = vpack.c.b16 %v1512, %v1504
    %v2257 = vpack.c.b16 %v1513, %v1505
    %v2258 = vpack.c.b16 %v1514, %v1506
    %v2259 = vpack.c.b16 %v1515, %v1507
    %v2260 = vpack.c.b16 %v1516, %v1508
    %v2261 = vpack.c.b16 %v1517, %v1509
    %v2262 = vpack.c.b16 %v1518, %v1510
    %v2263 = vpack.c.b16 %v1527, %v1519
    %v2264 = vpack.c.b16 %v1528, %v1520
    %v2265 = vpack.c.b16 %v1529, %v1521
    %v2266 = vpack.c.b16 %v1530, %v1522
    %v2267 = vpack.c.b16 %v1531, %v1523
    %v2268 = vpack.c.b16 %v1532, %v1524
    %v2269 = vpack.c.b16 %v1533, %v1525
    %v2270 = vpack.c.b16 %v1534, %v1526
    %v2271 = vpack.c.b16 %v1543, %v1535
    %v2272 = vpack.c.b16 %v1544, %v1536
    %v2273 = vpack.c.b16 %v1545, %v1537
    %v2274 = vpack.c.b16 %v1546, %v1538
    %v2275 = vpack.c.b16 %v1547, %v1539
    %v2276 = vpack.c.b16 %v1548, %v1540
    %v2277 = vpack.c.b16 %v1549, %v1541
    %v2278 = vpack.c.b16 %v1550, %v1542
    %v2279 = vpack.c.b16 %v1559, %v1551
    %v2280 = vpack.c.b16 %v1560, %v1552
    %v2281 = vpack.c.b16 %v1561, %v1553
    %v2282 = vpack.c.b16 %v1562, %v1554
    %v2283 = vpack.c.b16 %v1563, %v1555
    %v2284 = vpack.c.b16 %v1564, %v1556
    %v2285 = vpack.c.b16 %v1565, %v1557
    %v2286 = vpack.c.b16 %v1566, %v1558
    %v2287 = vpack.c.b16 %v1575, %v1567
    %v2288 = vpack.c.b16 %v1576, %v1568
    %v2289 = vpack.c.b16 %v1577, %v1569
    %v2290 = vpack.c.b16 %v1578, %v1570
    %v2291 = vpack.c.b16 %v1579, %v1571
    %v2292 = vpack.c.b16 %v1580, %v1572
    %v2293 = vpack.c.b16 %v1581, %v1573
    %v2294 = vpack.c.b16 %v1582, %v1574
    %v2295 = vpack.c.b16 %v1591, %v1583
    %v2296 = vpack.c.b16 %v1592, %v1584
    %v2297 = vpack.c.b16 %v1593, %v1585
    %v2298 = vpack.c.b16 %v1594, %v1586
    %v2299 = vpack.c.b16 %v1595, %v1587
    %v2300 = vpack.c.b16 %v1596, %v1588
    %v2301 = vpack.c.b16 %v1597, %v1589
    %v2302 = vpack.c.b16 %v1598, %v1590
    %v2303 = vpack.c.b16 %v1607, %v1599
    %v2304 = vpack.c.b16 %v1608, %v1600
    %v2305 = vpack.c.b16 %v1609, %v1601
    %v2306 = vpack.c.b16 %v1610, %v1602
    %v2307 = vpack.c.b16 %v1611, %v1603
    %v2308 = vpack.c.b16 %v1612, %v1604
    %v2309 = vpack.c.b16 %v1613, %v1605
    %v2310 = vpack.c.b16 %v1614, %v1606
    %v2311 = vpack.c.b16 %v1623, %v1615
    %v2312 = vpack.c.b16 %v1624, %v1616
    %v2313 = vpack.c.b16 %v1625, %v1617
    %v2314 = vpack.c.b16 %v1626, %v1618
    %v2315 = vpack.c.b16 %v1627, %v1619
    %v2316 = vpack.c.b16 %v1628, %v1620
    %v2317 = vpack.c.b16 %v1629, %v1621
    %v2318 = vpack.c.b16 %v1630, %v1622
    %v2319 = vpack.c.b16 %v1639, %v1631
    %v2320 = vpack.c.b16 %v1640, %v1632
    %v2321 = vpack.c.b16 %v1641, %v1633
    %v2322 = vpack.c.b16 %v1642, %v1634
    %v2323 = vpack.c.b16 %v1643, %v1635
    %v2324 = vpack.c.b16 %v1644, %v1636
    %v2325 = vpack.c.b16 %v1645, %v1637
    %v2326 = vpack.c.b16 %v1646, %v1638
    %v2327 = vpack.c.b16 %v1655, %v1647
    %v2328 = vpack.c.b16 %v1656, %v1648
    %v2329 = vpack.c.b16 %v1657, %v1649
    %v2330 = vpack.c.b16 %v1658, %v1650
    %v2331 = vpack.c.b16 %v1659, %v1651
    %v2332 = vpack.c.b16 %v1660, %v1652
    %v2333 = vpack.c.b16 %v1661, %v1653
    %v2334 = vpack.c.b16 %v1662, %v1654
    %v2335 = vpack.c.b16 %v1671, %v1663
    %v2336 = vpack.c.b16 %v1672, %v1664
    %v2337 = vpack.c.b16 %v1673, %v1665
    %v2338 = vpack.c.b16 %v1674, %v1666
    %v2339 = vpack.c.b16 %v1675, %v1667
    %v2340 = vpack.c.b16 %v1676, %v1668
    %v2341 = vpack.c.b16 %v1677, %v1669
    %v2342 = vpack.c.b16 %v1678, %v1670
    %v2343 = vpack.c.b16 %v1687, %v1679
    %v2344 = vpack.c.b16 %v1688, %v1680
    %v2345 = vpack.c.b16 %v1689, %v1681
    %v2346 = vpack.c.b16 %v1690, %v1682
    %v2347 = vpack.c.b16 %v1691, %v1683
    %v2348 = vpack.c.b16 %v1692, %v1684
    %v2349 = vpack.c.b16 %v1693, %v1685
    %v2350 = vpack.c.b16 %v1694, %v1686
    %v2351 = vpack.c.b16 %v1703, %v1695
    %v2352 = vpack.c.b16 %v1704, %v1696
    %v2353 = vpack.c.b16 %v1705, %v1697
    %v2354 = vpack.c.b16 %v1706, %v1698
    %v2355 = vpack.c.b16 %v1707, %v1699
    %v2356 = vpack.c.b16 %v1708, %v1700
    %v2357 = vpack.c.b16 %v1709, %v1701
    %v2358 = vpack.c.b16 %v1710, %v1702
    %v2359 = vpack.c.b16 %v1719, %v1711
    %v2360 = vpack.c.b16 %v1720, %v1712
    %v2361 = vpack.c.b16 %v1721, %v1713
    %v2362 = vpack.c.b16 %v1722, %v1714
    %v2363 = vpack.c.b16 %v1723, %v1715
    %v2364 = vpack.c.b16 %v1724, %v1716
    %v2365 = vpack.c.b16 %v1725, %v1717
    %v2366 = vpack.c.b16 %v1726, %v1718
    %v2367 = vpack.c.b16 %v1735, %v1727
    %v2368 = vpack.c.b16 %v1736, %v1728
    %v2369 = vpack.c.b16 %v1737, %v1729
    %v2370 = vpack.c.b16 %v1738, %v1730
    %v2371 = vpack.c.b16 %v1739, %v1731
    %v2372 = vpack.c.b16 %v1740, %v1732
    %v2373 = vpack.c.b16 %v1741, %v1733
    %v2374 = vpack.c.b16 %v1742, %v1734
    %v2375 = vpack.c.b16 %v1751, %v1743
    %v2376 = vpack.c.b16 %v1752, %v1744
    %v2377 = vpack.c.b16 %v1753, %v1745
    %v2378 = vpack.c.b16 %v1754, %v1746
    %v2379 = vpack.c.b16 %v1755, %v1747
    %v2380 = vpack.c.b16 %v1756, %v1748
    %v2381 = vpack.c.b16 %v1757, %v1749
    %v2382 = vpack.c.b16 %v1758, %v1750
    %v2383 = vpack.c.b16 %v1767, %v1759
    %v2384 = vpack.c.b16 %v1768, %v1760
    %v2385 = vpack.c.b16 %v1769, %v1761
    %v2386 = vpack.c.b16 %v1770, %v1762
    %v2387 = vpack.c.b16 %v1771, %v1763
    %v2388 = vpack.c.b16 %v1772, %v1764
    %v2389 = vpack.c.b16 %v1773, %v1765
    %v2390 = vpack.c.b16 %v1774, %v1766
    %v2391 = vpack.c.b16 %v1783, %v1775
    %v2392 = vpack.c.b16 %v1784, %v1776
    %v2393 = vpack.c.b16 %v1785, %v1777
    %v2394 = vpack.c.b16 %v1786, %v1778
    %v2395 = vpack.c.b16 %v1787, %v1779
    %v2396 = vpack.c.b16 %v1788, %v1780
    %v2397 = vpack.c.b16 %v1789, %v1781
    %v2398 = vpack.c.b16 %v1790, %v1782
    %v2399 = vpack.c.b16 %v1799, %v1791
    %v2400 = vpack.c.b16 %v1800, %v1792
    %v2401 = vpack.c.b16 %v1801, %v1793
    %v2402 = vpack.c.b16 %v1802, %v1794
    %v2403 = vpack.c.b16 %v1803, %v1795
    %v2404 = vpack.c.b16 %v1804, %v1796
    %v2405 = vpack.c.b16 %v1805, %v1797
    %v2406 = vpack.c.b16 %v1806, %v1798
    %v2407 = vpack.c.b16 %v1815, %v1807
    %v2408 = vpack.c.b16 %v1816, %v1808
    %v2409 = vpack.c.b16 %v1817, %v1809
    %v2410 = vpack.c.b16 %v1818, %v1810
    %v2411 = vpack.c.b16 %v1819, %v1811
    %v2412 = vpack.c.b16 %v1820, %v1812
    %v2413 = vpack.c.b16 %v1821, %v1813
    %v2414 = vpack.c.b16 %v1822, %v1814
    %v2415 = vpack.c.b16 %v1831, %v1823
    %v2416 = vpack.c.b16 %v1832, %v1824
    %v2417 = vpack.c.b16 %v1833, %v1825
    %v2418 = vpack.c.b16 %v1834, %v1826
    %v2419 = vpack.c.b16 %v1835, %v1827
    %v2420 = vpack.c.b16 %v1836, %v1828
    %v2421 = vpack.c.b16 %v1837, %v1829
    %v2422 = vpack.c.b16 %v1838, %v1830
    %v2423 = vpack.c.b16 %v1847, %v1839
    %v2424 = vpack.c.b16 %v1848, %v1840
    %v2425 = vpack.c.b16 %v1849, %v1841
    %v2426 = vpack.c.b16 %v1850, %v1842
    %v2427 = vpack.c.b16 %v1851, %v1843
    %v2428 = vpack.c.b16 %v1852, %v1844
    %v2429 = vpack.c.b16 %v1853, %v1845
    %v2430 = vpack.c.b16 %v1854, %v1846
    %v2431 = vpack.c.b16 %v1863, %v1855
    %v2432 = vpack.c.b16 %v1864, %v1856
    %v2433 = vpack.c.b16 %v1865, %v1857
    %v2434 = vpack.c.b16 %v1866, %v1858
    %v2435 = vpack.c.b16 %v1867, %v1859
    %v2436 = vpack.c.b16 %v1868, %v1860
    %v2437 = vpack.c.b16 %v1869, %v1861
    %v2438 = vpack.c.b16 %v1870, %v1862
    %v2439 = vpack.c.b16 %v1879, %v1871
    %v2440 = vpack.c.b16 %v1880, %v1872
    %v2441 = vpack.c.b16 %v1881, %v1873
    %v2442 = vpack.c.b16 %v1882, %v1874
    %v2443 = vpack.c.b16 %v1883, %v1875
    %v2444 = vpack.c.b16 %v1884, %v1876
    %v2445 = vpack.c.b16 %v1885, %v1877
    %v2446 = vpack.c.b16 %v1886, %v1878
    %v2447 = vpack.c.b16 %v1895, %v1887
    %v2448 = vpack.c.b16 %v1896, %v1888
    %v2449 = vpack.c.b16 %v1897, %v1889
    %v2450 = vpack.c.b16 %v1898, %v1890
    %v2451 = vpack.c.b16 %v1899, %v1891
    %v2452 = vpack.c.b16 %v1900, %v1892
    %v2453 = vpack.c.b16 %v1901, %v1893
    %v2454 = vpack.c.b16 %v1902, %v1894
    %v2455 = vpack.c.b16 %v1911, %v1903
    %v2456 = vpack.c.b16 %v1912, %v1904
    %v2457 = vpack.c.b16 %v1913, %v1905
    %v2458 = vpack.c.b16 %v1914, %v1906
    %v2459 = vpack.c.b16 %v1915, %v1907
    %v2460 = vpack.c.b16 %v1916, %v1908
    %v2461 = vpack.c.b16 %v1917, %v1909
    %v2462 = vpack.c.b16 %v1918, %v1910
    %v2463 = vpack.c.b16 %v1927, %v1919
    %v2464 = vpack.c.b16 %v1928, %v1920
    %v2465 = vpack.c.b16 %v1929, %v1921
    %v2466 = vpack.c.b16 %v1930, %v1922
    %v2467 = vpack.c.b16 %v1931, %v1923
    %v2468 = vpack.c.b16 %v1932, %v1924
    %v2469 = vpack.c.b16 %v1933, %v1925
    %v2470 = vpack.c.b16 %v1934, %v1926
    %v2471 = vpack.c.b16 %v1943, %v1935
    %v2472 = vpack.c.b16 %v1944, %v1936
    %v2473 = vpack.c.b16 %v1945, %v1937
    %v2474 = vpack.c.b16 %v1946, %v1938
    %v2475 = vpack.c.b16 %v1947, %v1939
    %v2476 = vpack.c.b16 %v1948, %v1940
    %v2477 = vpack.c.b16 %v1949, %v1941
    %v2478 = vpack.c.b16 %v1950, %v1942
    %v2479 = vpack.c.b16 %v1959, %v1951
    %v2480 = vpack.c.b16 %v1960, %v1952
    %v2481 = vpack.c.b16 %v1961, %v1953
    %v2482 = vpack.c.b16 %v1962, %v1954
    %v2483 = vpack.c.b16 %v1963, %v1955
    %v2484 = vpack.c.b16 %v1964, %v1956
    %v2485 = vpack.c.b16 %v1965, %v1957
    %v2486 = vpack.c.b16 %v1966, %v1958
    %v2487 = vpack.c.b16 %v1975, %v1967
    %v2488 = vpack.c.b16 %v1976, %v1968
    %v2489 = vpack.c.b16 %v1977, %v1969
    %v2490 = vpack.c.b16 %v1978, %v1970
    %v2491 = vpack.c.b16 %v1979, %v1971
    %v2492 = vpack.c.b16 %v1980, %v1972
    %v2493 = vpack.c.b16 %v1981, %v1973
    %v2494 = vpack.c.b16 %v1982, %v1974
    %v2495 = vpack.c.b16 %v1991, %v1983
    %v2496 = vpack.c.b16 %v1992, %v1984
    %v2497 = vpack.c.b16 %v1993, %v1985
    %v2498 = vpack.c.b16 %v1994, %v1986
    %v2499 = vpack.c.b16 %v1995, %v1987
    %v2500 = vpack.c.b16 %v1996, %v1988
    %v2501 = vpack.c.b16 %v1997, %v1989
    %v2502 = vpack.c.b16 %v1998, %v1990
    %v2503 = vpack.c.b16 %v2007, %v1999
    %v2504 = vpack.c.b16 %v2008, %v2000
    %v2505 = vpack.c.b16 %v2009, %v2001
    %v2506 = vpack.c.b16 %v2010, %v2002
    %v2507 = vpack.c.b16 %v2011, %v2003
    %v2508 = vpack.c.b16 %v2012, %v2004
    %v2509 = vpack.c.b16 %v2013, %v2005
    %v2510 = vpack.c.b16 %v2014, %v2006
    %v2511 = vpack.c.b16 %v2023, %v2015
    %v2512 = vpack.c.b16 %v2024, %v2016
    %v2513 = vpack.c.b16 %v2025, %v2017
    %v2514 = vpack.c.b16 %v2026, %v2018
    %v2515 = vpack.c.b16 %v2027, %v2019
    %v2516 = vpack.c.b16 %v2028, %v2020
    %v2517 = vpack.c.b16 %v2029, %v2021
    %v2518 = vpack.c.b16 %v2030, %v2022
    %v2519 = vpack.c.b16 %v2039, %v2031
    %v2520 = vpack.c.b16 %v2040, %v2032
    %v2521 = vpack.c.b16 %v2041, %v2033
    %v2522 = vpack.c.b16 %v2042, %v2034
    %v2523 = vpack.c.b16 %v2043, %v2035
    %v2524 = vpack.c.b16 %v2044, %v2036
    %v2525 = vpack.c.b16 %v2045, %v2037
    %v2526 = vpack.c.b16 %v2046, %v2038
    %v2527 = vpack.c.b16 %v2055, %v2047
    %v2528 = vpack.c.b16 %v2056, %v2048
    %v2529 = vpack.c.b16 %v2057, %v2049
    %v2530 = vpack.c.b16 %v2058, %v2050
    %v2531 = vpack.c.b16 %v2059, %v2051
    %v2532 = vpack.c.b16 %v2060, %v2052
    %v2533 = vpack.c.b16 %v2061, %v2053
    %v2534 = vpack.c.b16 %v2062, %v2054
    %v2535 = vpack.c.b16 %v2071, %v2063
    %v2536 = vpack.c.b16 %v2072, %v2064
    %v2537 = vpack.c.b16 %v2073, %v2065
    %v2538 = vpack.c.b16 %v2074, %v2066
    %v2539 = vpack.c.b16 %v2075, %v2067
    %v2540 = vpack.c.b16 %v2076, %v2068
    %v2541 = vpack.c.b16 %v2077, %v2069
    %v2542 = vpack.c.b16 %v2078, %v2070
    %v2543 = vpack.c.b16 %v2087, %v2079
    %v2544 = vpack.c.b16 %v2088, %v2080
    %v2545 = vpack.c.b16 %v2089, %v2081
    %v2546 = vpack.c.b16 %v2090, %v2082
    %v2547 = vpack.c.b16 %v2091, %v2083
    %v2548 = vpack.c.b16 %v2092, %v2084
    %v2549 = vpack.c.b16 %v2093, %v2085
    %v2550 = vpack.c.b16 %v2094, %v2086
    %v2551 = vpack.c.b16 %v2103, %v2095
    %v2552 = vpack.c.b16 %v2104, %v2096
    %v2553 = vpack.c.b16 %v2105, %v2097
    %v2554 = vpack.c.b16 %v2106, %v2098
    %v2555 = vpack.c.b16 %v2107, %v2099
    %v2556 = vpack.c.b16 %v2108, %v2100
    %v2557 = vpack.c.b16 %v2109, %v2101
    %v2558 = vpack.c.b16 %v2110, %v2102
    %v2559 = vpack.c.b16 %v2119, %v2111
    %v2560 = vpack.c.b16 %v2120, %v2112
    %v2561 = vpack.c.b16 %v2121, %v2113
    %v2562 = vpack.c.b16 %v2122, %v2114
    %v2563 = vpack.c.b16 %v2123, %v2115
    %v2564 = vpack.c.b16 %v2124, %v2116
    %v2565 = vpack.c.b16 %v2125, %v2117
    %v2566 = vpack.c.b16 %v2126, %v2118
    %v2567 = vpack.c.b16 %v2135, %v2127
    %v2568 = vpack.c.b16 %v2136, %v2128
    %v2569 = vpack.c.b16 %v2137, %v2129
    %v2570 = vpack.c.b16 %v2138, %v2130
    %v2571 = vpack.c.b16 %v2139, %v2131
    %v2572 = vpack.c.b16 %v2140, %v2132
    %v2573 = vpack.c.b16 %v2141, %v2133
    %v2574 = vpack.c.b16 %v2142, %v2134
    %v2575 = vpack.c.b16 %v2151, %v2143
    %v2576 = vpack.c.b16 %v2152, %v2144
    %v2577 = vpack.c.b16 %v2153, %v2145
    %v2578 = vpack.c.b16 %v2154, %v2146
    %v2579 = vpack.c.b16 %v2155, %v2147
    %v2580 = vpack.c.b16 %v2156, %v2148
    %v2581 = vpack.c.b16 %v2157, %v2149
    %v2582 = vpack.c.b16 %v2158, %v2150
    %v2583 = vpack.c.b16 %v2167, %v2159
    %v2584 = vpack.c.b16 %v2168, %v2160
    %v2585 = vpack.c.b16 %v2169, %v2161
    %v2586 = vpack.c.b16 %v2170, %v2162
    %v2587 = vpack.c.b16 %v2171, %v2163
    %v2588 = vpack.c.b16 %v2172, %v2164
    %v2589 = vpack.c.b16 %v2173, %v2165
    %v2590 = vpack.c.b16 %v2174, %v2166
    %v2591 = vpack.c.b16 %v2183, %v2175
    %v2592 = vpack.c.b16 %v2184, %v2176
    %v2593 = vpack.c.b16 %v2185, %v2177
    %v2594 = vpack.c.b16 %v2186, %v2178
    %v2595 = vpack.c.b16 %v2187, %v2179
    %v2596 = vpack.c.b16 %v2188, %v2180
    %v2597 = vpack.c.b16 %v2189, %v2181
    %v2598 = vpack.c.b16 %v2190, %v2182
    %v2599 = vpack.c.b16 %v2199, %v2191
    %v2600 = vpack.c.b16 %v2200, %v2192
    %v2601 = vpack.c.b16 %v2201, %v2193
    %v2602 = vpack.c.b16 %v2202, %v2194
    %v2603 = vpack.c.b16 %v2203, %v2195
    %v2604 = vpack.c.b16 %v2204, %v2196
    %v2605 = vpack.c.b16 %v2205, %v2197
    %v2606 = vpack.c.b16 %v2206, %v2198
    %v2607 = vpack.c.b16 %v2215, %v2207
    %v2608 = vpack.c.b16 %v2216, %v2208
    %v2609 = vpack.c.b16 %v2217, %v2209
    %v2610 = vpack.c.b16 %v2218, %v2210
    %v2611 = vpack.c.b16 %v2219, %v2211
    %v2612 = vpack.c.b16 %v2220, %v2212
    %v2613 = vpack.c.b16 %v2221, %v2213
    %v2614 = vpack.c.b16 %v2222, %v2214
    %v2615 = vpack.c.b16 %v2231, %v2223
    %v2616 = vpack.c.b16 %v2232, %v2224
    %v2617 = vpack.c.b16 %v2233, %v2225
    %v2618 = vpack.c.b16 %v2234, %v2226
    %v2619 = vpack.c.b16 %v2235, %v2227
    %v2620 = vpack.c.b16 %v2236, %v2228
    %v2621 = vpack.c.b16 %v2237, %v2229
    %v2622 = vpack.c.b16 %v2238, %v2230
    %3007 = vmatprep.subr.bf16.mxu0 %v2240
    %3008 = vmatpush1.bf16.msra.mxu0 %v2239
    %3009 = vmatprep.subr.bf16.mxu0 %v2248
    %3010 = vmatpush1.bf16.msra.mxu0 %v2247
    %3011 = vmatprep.subr.bf16.mxu0 %v2256
    %3012 = vmatpush1.bf16.msra.mxu0 %v2255
    %3013 = vmatprep.subr.bf16.mxu0 %v2264
    %3014 = vmatpush1.bf16.msra.mxu0 %v2263
    %3015 = vmatprep.subr.bf16.mxu0 %v2272
    %3016 = vmatpush1.bf16.msra.mxu0 %v2271
    %3017 = vmatprep.subr.bf16.mxu0 %v2280
    %3018 = vmatpush1.bf16.msra.mxu0 %v2279
    %3019 = vmatprep.subr.bf16.mxu0 %v2288
    %3020 = vmatpush1.bf16.msra.mxu0 %v2287
    %3021 = vmatprep.subr.bf16.mxu0 %v2296
    %3022 = vmatpush1.bf16.msra.mxu0 %v2295
    %3023 = vmatprep.subr.bf16.mxu0 %v2304
    %3024 = vmatpush1.bf16.msra.mxu0 %v2303
    %3025 = vmatprep.subr.bf16.mxu0 %v2312
    %3026 = vmatpush1.bf16.msra.mxu0 %v2311
    %3027 = vmatprep.subr.bf16.mxu0 %v2320
    %3028 = vmatpush1.bf16.msra.mxu0 %v2319
    %3029 = vmatprep.subr.bf16.mxu0 %v2328
    %3030 = vmatpush1.bf16.msra.mxu0 %v2327
    %3031 = vmatprep.subr.bf16.mxu0 %v2336
    %3032 = vmatpush1.bf16.msra.mxu0 %v2335
    %3033 = vmatprep.subr.bf16.mxu0 %v2344
    %3034 = vmatpush1.bf16.msra.mxu0 %v2343
    %3035 = vmatprep.subr.bf16.mxu0 %v2352
    %3036 = vmatpush1.bf16.msra.mxu0 %v2351
    %3037 = vmatprep.subr.bf16.mxu0 %v2360
    %3038 = vmatpush1.bf16.msra.mxu0 %v2359
    %3039 = vmatprep.mubr.bf16.mxu0 %v158
    %3040 = vmatmul.mubr.bf16.gmra.mrb[0].mxu0 %v157
    %v3041 = vpop.f32.mrb[0].mxu0
    %v3042 = vadd.f32 %v870, %v3041
    %v3043 = vpop.f32.mrb[0].mxu0
    %v3044 = vadd.f32 %v872, %v3043
    %v3045 = vpop.f32.mrb[0].mxu0
    %v3046 = vpop.f32.mrb[0].mxu0
    %3047 = vdwg.mxu0
    %3048 = vmatprep.subr.bf16.mxu0 %v2368
    %3049 = vmatpush1.bf16.msra.mxu0 %v2367
    %3050 = vmatprep.subr.bf16.mxu0 %v2376
    %3051 = vmatpush1.bf16.msra.mxu0 %v2375
    %3052 = vmatprep.subr.bf16.mxu0 %v2384
    %3053 = vmatpush1.bf16.msra.mxu0 %v2383
    %3054 = vmatprep.subr.bf16.mxu0 %v2392
    %3055 = vmatpush1.bf16.msra.mxu0 %v2391
    %3056 = vmatprep.subr.bf16.mxu0 %v2400
    %3057 = vmatpush1.bf16.msra.mxu0 %v2399
    %3058 = vmatprep.subr.bf16.mxu0 %v2408
    %3059 = vmatpush1.bf16.msra.mxu0 %v2407
    %3060 = vmatprep.subr.bf16.mxu0 %v2416
    %3061 = vmatpush1.bf16.msra.mxu0 %v2415
    %3062 = vmatprep.subr.bf16.mxu0 %v2424
    %3063 = vmatpush1.bf16.msra.mxu0 %v2423
    %3064 = vmatprep.subr.bf16.mxu0 %v2432
    %3065 = vmatpush1.bf16.msra.mxu0 %v2431
    %3066 = vmatprep.subr.bf16.mxu0 %v2440
    %3067 = vmatpush1.bf16.msra.mxu0 %v2439
    %3068 = vmatprep.subr.bf16.mxu0 %v2448
    %3069 = vmatpush1.bf16.msra.mxu0 %v2447
    %3070 = vmatprep.subr.bf16.mxu0 %v2456
    %3071 = vmatpush1.bf16.msra.mxu0 %v2455
    %3072 = vmatprep.subr.bf16.mxu0 %v2464
    %3073 = vmatpush1.bf16.msra.mxu0 %v2463
    %3074 = vmatprep.subr.bf16.mxu0 %v2472
    %3075 = vmatpush1.bf16.msra.mxu0 %v2471
    %3076 = vmatprep.subr.bf16.mxu0 %v2480
    %3077 = vmatpush1.bf16.msra.mxu0 %v2479
    %3078 = vmatprep.subr.bf16.mxu0 %v2488
    %3079 = vmatpush1.bf16.msra.mxu0 %v2487
    %3080 = vmatprep.mubr.bf16.mxu0 %v160
    %3081 = vmatmul.mubr.bf16.gmra.mrb[0].mxu0 %v159
    %v3082 = vpop.f32.mrb[0].mxu0
    %v3083 = vadd.f32 %v3042, %v3082
    %v3084 = vpop.f32.mrb[0].mxu0
    %v3085 = vadd.f32 %v3044, %v3084
    %v3086 = vpop.f32.mrb[0].mxu0
    %v3087 = vpop.f32.mrb[0].mxu0
    %3088 = vdwg.mxu0
    %3089 = vmatprep.subr.bf16.mxu0 %v2496
    %3090 = vmatpush1.bf16.msra.mxu0 %v2495
    %3091 = vmatprep.subr.bf16.mxu0 %v2504
    %3092 = vmatpush1.bf16.msra.mxu0 %v2503
    %3093 = vmatprep.subr.bf16.mxu0 %v2512
    %3094 = vmatpush1.bf16.msra.mxu0 %v2511
    %3095 = vmatprep.subr.bf16.mxu0 %v2520
    %3096 = vmatpush1.bf16.msra.mxu0 %v2519
    %3097 = vmatprep.subr.bf16.mxu0 %v2528
    %3098 = vmatpush1.bf16.msra.mxu0 %v2527
    %3099 = vmatprep.subr.bf16.mxu0 %v2536
    %3100 = vmatpush1.bf16.msra.mxu0 %v2535
    %3101 = vmatprep.subr.bf16.mxu0 %v2544
    %3102 = vmatpush1.bf16.msra.mxu0 %v2543
    %3103 = vmatprep.subr.bf16.mxu0 %v2552
    %3104 = vmatpush1.bf16.msra.mxu0 %v2551
    %3105 = vmatprep.subr.bf16.mxu0 %v2560
    %3106 = vmatpush1.bf16.msra.mxu0 %v2559
    %3107 = vmatprep.subr.bf16.mxu0 %v2568
    %3108 = vmatpush1.bf16.msra.mxu0 %v2567
    %3109 = vmatprep.subr.bf16.mxu0 %v2576
    %3110 = vmatpush1.bf16.msra.mxu0 %v2575
    %3111 = vmatprep.subr.bf16.mxu0 %v2584
    %3112 = vmatpush1.bf16.msra.mxu0 %v2583
    %3113 = vmatprep.subr.bf16.mxu0 %v2592
    %3114 = vmatpush1.bf16.msra.mxu0 %v2591
    %3115 = vmatprep.subr.bf16.mxu0 %v2600
    %3116 = vmatpush1.bf16.msra.mxu0 %v2599
    %3117 = vmatprep.subr.bf16.mxu0 %v2608
    %3118 = vmatpush1.bf16.msra.mxu0 %v2607
    %3119 = vmatprep.subr.bf16.mxu0 %v2616
    %3120 = vmatpush1.bf16.msra.mxu0 %v2615
    %3121 = vmatprep.mubr.bf16.mxu0 %v162
    %3122 = vmatmul.mubr.bf16.gmra.mrb[0].mxu0 %v161
    %v3123 = vpop.f32.mrb[0].mxu0
    %v3124 = vadd.f32 %v3083, %v3123
    %v3125 = vpop.f32.mrb[0].mxu0
    %v3126 = vadd.f32 %v3085, %v3125
    %v3127 = vpop.f32.mrb[0].mxu0
    %v3128 = vpop.f32.mrb[0].mxu0
    %3129 = vdwg.mxu0
    %3130 = vmatprep.subr.bf16.mxu0 %v2242
    %3131 = vmatpush1.bf16.msra.mxu0 %v2241
    %3132 = vmatprep.subr.bf16.mxu0 %v2250
    %3133 = vmatpush1.bf16.msra.mxu0 %v2249
    %3134 = vmatprep.subr.bf16.mxu0 %v2258
    %3135 = vmatpush1.bf16.msra.mxu0 %v2257
    %3136 = vmatprep.subr.bf16.mxu0 %v2266
    %3137 = vmatpush1.bf16.msra.mxu0 %v2265
    %3138 = vmatprep.subr.bf16.mxu0 %v2274
    %3139 = vmatpush1.bf16.msra.mxu0 %v2273
    %3140 = vmatprep.subr.bf16.mxu0 %v2282
    %3141 = vmatpush1.bf16.msra.mxu0 %v2281
    %3142 = vmatprep.subr.bf16.mxu0 %v2290
    %3143 = vmatpush1.bf16.msra.mxu0 %v2289
    %3144 = vmatprep.subr.bf16.mxu0 %v2298
    %3145 = vmatpush1.bf16.msra.mxu0 %v2297
    %3146 = vmatprep.subr.bf16.mxu0 %v2306
    %3147 = vmatpush1.bf16.msra.mxu0 %v2305
    %3148 = vmatprep.subr.bf16.mxu0 %v2314
    %3149 = vmatpush1.bf16.msra.mxu0 %v2313
    %3150 = vmatprep.subr.bf16.mxu0 %v2322
    %3151 = vmatpush1.bf16.msra.mxu0 %v2321
    %3152 = vmatprep.subr.bf16.mxu0 %v2330
    %3153 = vmatpush1.bf16.msra.mxu0 %v2329
    %3154 = vmatprep.subr.bf16.mxu0 %v2338
    %3155 = vmatpush1.bf16.msra.mxu0 %v2337
    %3156 = vmatprep.subr.bf16.mxu0 %v2346
    %3157 = vmatpush1.bf16.msra.mxu0 %v2345
    %3158 = vmatprep.subr.bf16.mxu0 %v2354
    %3159 = vmatpush1.bf16.msra.mxu0 %v2353
    %3160 = vmatprep.subr.bf16.mxu0 %v2362
    %3161 = vmatpush1.bf16.msra.mxu0 %v2361
    %3162 = vmatprep.mubr.bf16.mxu0 %v158
    %3163 = vmatmul.mubr.bf16.gmra.mrb[0].mxu0 %v157
    %v3164 = vpop.f32.mrb[0].mxu0
    %v3165 = vadd.f32 %v941, %v3164
    %v3166 = vpop.f32.mrb[0].mxu0
    %v3167 = vadd.f32 %v943, %v3166
    %v3168 = vpop.f32.mrb[0].mxu0
    %v3169 = vpop.f32.mrb[0].mxu0
    %3170 = vdwg.mxu0
    %3171 = vmatprep.subr.bf16.mxu0 %v2370
    %3172 = vmatpush1.bf16.msra.mxu0 %v2369
    %3173 = vmatprep.subr.bf16.mxu0 %v2378
    %3174 = vmatpush1.bf16.msra.mxu0 %v2377
    %3175 = vmatprep.subr.bf16.mxu0 %v2386
    %3176 = vmatpush1.bf16.msra.mxu0 %v2385
    %3177 = vmatprep.subr.bf16.mxu0 %v2394
    %3178 = vmatpush1.bf16.msra.mxu0 %v2393
    %3179 = vmatprep.subr.bf16.mxu0 %v2402
    %3180 = vmatpush1.bf16.msra.mxu0 %v2401
    %3181 = vmatprep.subr.bf16.mxu0 %v2410
    %3182 = vmatpush1.bf16.msra.mxu0 %v2409
    %3183 = vmatprep.subr.bf16.mxu0 %v2418
    %3184 = vmatpush1.bf16.msra.mxu0 %v2417
    %3185 = vmatprep.subr.bf16.mxu0 %v2426
    %3186 = vmatpush1.bf16.msra.mxu0 %v2425
    %3187 = vmatprep.subr.bf16.mxu0 %v2434
    %3188 = vmatpush1.bf16.msra.mxu0 %v2433
    %3189 = vmatprep.subr.bf16.mxu0 %v2442
    %3190 = vmatpush1.bf16.msra.mxu0 %v2441
    %3191 = vmatprep.subr.bf16.mxu0 %v2450
    %3192 = vmatpush1.bf16.msra.mxu0 %v2449
    %3193 = vmatprep.subr.bf16.mxu0 %v2458
    %3194 = vmatpush1.bf16.msra.mxu0 %v2457
    %3195 = vmatprep.subr.bf16.mxu0 %v2466
    %3196 = vmatpush1.bf16.msra.mxu0 %v2465
    %3197 = vmatprep.subr.bf16.mxu0 %v2474
    %3198 = vmatpush1.bf16.msra.mxu0 %v2473
    %3199 = vmatprep.subr.bf16.mxu0 %v2482
    %3200 = vmatpush1.bf16.msra.mxu0 %v2481
    %3201 = vmatprep.subr.bf16.mxu0 %v2490
    %3202 = vmatpush1.bf16.msra.mxu0 %v2489
    %3203 = vmatprep.mubr.bf16.mxu0 %v160
    %3204 = vmatmul.mubr.bf16.gmra.mrb[0].mxu0 %v159
    %v3205 = vpop.f32.mrb[0].mxu0
    %v3206 = vadd.f32 %v3165, %v3205
    %v3207 = vpop.f32.mrb[0].mxu0
    %v3208 = vadd.f32 %v3167, %v3207
    %v3209 = vpop.f32.mrb[0].mxu0
    %v3210 = vpop.f32.mrb[0].mxu0
    %3211 = vdwg.mxu0
    %3212 = vmatprep.subr.bf16.mxu0 %v2498
    %3213 = vmatpush1.bf16.msra.mxu0 %v2497
    %3214 = vmatprep.subr.bf16.mxu0 %v2506
    %3215 = vmatpush1.bf16.msra.mxu0 %v2505
    %3216 = vmatprep.subr.bf16.mxu0 %v2514
    %3217 = vmatpush1.bf16.msra.mxu0 %v2513
    %3218 = vmatprep.subr.bf16.mxu0 %v2522
    %3219 = vmatpush1.bf16.msra.mxu0 %v2521
    %3220 = vmatprep.subr.bf16.mxu0 %v2530
    %3221 = vmatpush1.bf16.msra.mxu0 %v2529
    %3222 = vmatprep.subr.bf16.mxu0 %v2538
    %3223 = vmatpush1.bf16.msra.mxu0 %v2537
    %3224 = vmatprep.subr.bf16.mxu0 %v2546
    %3225 = vmatpush1.bf16.msra.mxu0 %v2545
    %3226 = vmatprep.subr.bf16.mxu0 %v2554
    %3227 = vmatpush1.bf16.msra.mxu0 %v2553
    %3228 = vmatprep.subr.bf16.mxu0 %v2562
    %3229 = vmatpush1.bf16.msra.mxu0 %v2561
    %3230 = vmatprep.subr.bf16.mxu0 %v2570
    %3231 = vmatpush1.bf16.msra.mxu0 %v2569
    %3232 = vmatprep.subr.bf16.mxu0 %v2578
    %3233 = vmatpush1.bf16.msra.mxu0 %v2577
    %3234 = vmatprep.subr.bf16.mxu0 %v2586
    %3235 = vmatpush1.bf16.msra.mxu0 %v2585
    %3236 = vmatprep.subr.bf16.mxu0 %v2594
    %3237 = vmatpush1.bf16.msra.mxu0 %v2593
    %3238 = vmatprep.subr.bf16.mxu0 %v2602
    %3239 = vmatpush1.bf16.msra.mxu0 %v2601
    %3240 = vmatprep.subr.bf16.mxu0 %v2610
    %3241 = vmatpush1.bf16.msra.mxu0 %v2609
    %3242 = vmatprep.subr.bf16.mxu0 %v2618
    %3243 = vmatpush1.bf16.msra.mxu0 %v2617
    %3244 = vmatprep.mubr.bf16.mxu0 %v162
    %3245 = vmatmul.mubr.bf16.gmra.mrb[0].mxu0 %v161
    %v3246 = vpop.f32.mrb[0].mxu0
    %v3247 = vadd.f32 %v3206, %v3246
    %v3248 = vpop.f32.mrb[0].mxu0
    %v3249 = vadd.f32 %v3208, %v3248
    %v3250 = vpop.f32.mrb[0].mxu0
    %v3251 = vpop.f32.mrb[0].mxu0
    %3252 = vdwg.mxu0
    %3253 = vmatprep.subr.bf16.mxu0 %v2244
    %3254 = vmatpush1.bf16.msra.mxu0 %v2243
    %3255 = vmatprep.subr.bf16.mxu0 %v2252
    %3256 = vmatpush1.bf16.msra.mxu0 %v2251
    %3257 = vmatprep.subr.bf16.mxu0 %v2260
    %3258 = vmatpush1.bf16.msra.mxu0 %v2259
    %3259 = vmatprep.subr.bf16.mxu0 %v2268
    %3260 = vmatpush1.bf16.msra.mxu0 %v2267
    %3261 = vmatprep.subr.bf16.mxu0 %v2276
    %3262 = vmatpush1.bf16.msra.mxu0 %v2275
    %3263 = vmatprep.subr.bf16.mxu0 %v2284
    %3264 = vmatpush1.bf16.msra.mxu0 %v2283
    %3265 = vmatprep.subr.bf16.mxu0 %v2292
    %3266 = vmatpush1.bf16.msra.mxu0 %v2291
    %3267 = vmatprep.subr.bf16.mxu0 %v2300
    %3268 = vmatpush1.bf16.msra.mxu0 %v2299
    %3269 = vmatprep.subr.bf16.mxu0 %v2308
    %3270 = vmatpush1.bf16.msra.mxu0 %v2307
    %3271 = vmatprep.subr.bf16.mxu0 %v2316
    %3272 = vmatpush1.bf16.msra.mxu0 %v2315
    %3273 = vmatprep.subr.bf16.mxu0 %v2324
    %3274 = vmatpush1.bf16.msra.mxu0 %v2323
    %3275 = vmatprep.subr.bf16.mxu0 %v2332
    %3276 = vmatpush1.bf16.msra.mxu0 %v2331
    %3277 = vmatprep.subr.bf16.mxu0 %v2340
    %3278 = vmatpush1.bf16.msra.mxu0 %v2339
    %3279 = vmatprep.subr.bf16.mxu0 %v2348
    %3280 = vmatpush1.bf16.msra.mxu0 %v2347
    %3281 = vmatprep.subr.bf16.mxu0 %v2356
    %3282 = vmatpush1.bf16.msra.mxu0 %v2355
    %3283 = vmatprep.subr.bf16.mxu0 %v2364
    %3284 = vmatpush1.bf16.msra.mxu0 %v2363
    %3285 = vmatprep.mubr.bf16.mxu0 %v158
    %3286 = vmatmul.mubr.bf16.gmra.mrb[0].mxu0 %v157
    %v3287 = vpop.f32.mrb[0].mxu0
    %v3288 = vadd.f32 %v1012, %v3287
    %v3289 = vpop.f32.mrb[0].mxu0
    %v3290 = vadd.f32 %v1014, %v3289
    %v3291 = vpop.f32.mrb[0].mxu0
    %v3292 = vpop.f32.mrb[0].mxu0
    %3293 = vdwg.mxu0
    %3294 = vmatprep.subr.bf16.mxu0 %v2372
    %3295 = vmatpush1.bf16.msra.mxu0 %v2371
    %3296 = vmatprep.subr.bf16.mxu0 %v2380
    %3297 = vmatpush1.bf16.msra.mxu0 %v2379
    %3298 = vmatprep.subr.bf16.mxu0 %v2388
    %3299 = vmatpush1.bf16.msra.mxu0 %v2387
    %3300 = vmatprep.subr.bf16.mxu0 %v2396
    %3301 = vmatpush1.bf16.msra.mxu0 %v2395
    %3302 = vmatprep.subr.bf16.mxu0 %v2404
    %3303 = vmatpush1.bf16.msra.mxu0 %v2403
    %3304 = vmatprep.subr.bf16.mxu0 %v2412
    %3305 = vmatpush1.bf16.msra.mxu0 %v2411
    %3306 = vmatprep.subr.bf16.mxu0 %v2420
    %3307 = vmatpush1.bf16.msra.mxu0 %v2419
    %3308 = vmatprep.subr.bf16.mxu0 %v2428
    %3309 = vmatpush1.bf16.msra.mxu0 %v2427
    %3310 = vmatprep.subr.bf16.mxu0 %v2436
    %3311 = vmatpush1.bf16.msra.mxu0 %v2435
    %3312 = vmatprep.subr.bf16.mxu0 %v2444
    %3313 = vmatpush1.bf16.msra.mxu0 %v2443
    %3314 = vmatprep.subr.bf16.mxu0 %v2452
    %3315 = vmatpush1.bf16.msra.mxu0 %v2451
    %3316 = vmatprep.subr.bf16.mxu0 %v2460
    %3317 = vmatpush1.bf16.msra.mxu0 %v2459
    %3318 = vmatprep.subr.bf16.mxu0 %v2468
    %3319 = vmatpush1.bf16.msra.mxu0 %v2467
    %3320 = vmatprep.subr.bf16.mxu0 %v2476
    %3321 = vmatpush1.bf16.msra.mxu0 %v2475
    %3322 = vmatprep.subr.bf16.mxu0 %v2484
    %3323 = vmatpush1.bf16.msra.mxu0 %v2483
    %3324 = vmatprep.subr.bf16.mxu0 %v2492
    %3325 = vmatpush1.bf16.msra.mxu0 %v2491
    %3326 = vmatprep.mubr.bf16.mxu0 %v160
    %3327 = vmatmul.mubr.bf16.gmra.mrb[0].mxu0 %v159
    %v3328 = vpop.f32.mrb[0].mxu0
    %v3329 = vadd.f32 %v3288, %v3328
    %v3330 = vpop.f32.mrb[0].mxu0
    %v3331 = vadd.f32 %v3290, %v3330
    %v3332 = vpop.f32.mrb[0].mxu0
    %v3333 = vpop.f32.mrb[0].mxu0
    %3334 = vdwg.mxu0
    %3335 = vmatprep.subr.bf16.mxu0 %v2500
    %3336 = vmatpush1.bf16.msra.mxu0 %v2499
    %3337 = vmatprep.subr.bf16.mxu0 %v2508
    %3338 = vmatpush1.bf16.msra.mxu0 %v2507
    %3339 = vmatprep.subr.bf16.mxu0 %v2516
    %3340 = vmatpush1.bf16.msra.mxu0 %v2515
    %3341 = vmatprep.subr.bf16.mxu0 %v2524
    %3342 = vmatpush1.bf16.msra.mxu0 %v2523
    %3343 = vmatprep.subr.bf16.mxu0 %v2532
    %3344 = vmatpush1.bf16.msra.mxu0 %v2531
    %3345 = vmatprep.subr.bf16.mxu0 %v2540
    %3346 = vmatpush1.bf16.msra.mxu0 %v2539
    %3347 = vmatprep.subr.bf16.mxu0 %v2548
    %3348 = vmatpush1.bf16.msra.mxu0 %v2547
    %3349 = vmatprep.subr.bf16.mxu0 %v2556
    %3350 = vmatpush1.bf16.msra.mxu0 %v2555
    %3351 = vmatprep.subr.bf16.mxu0 %v2564
    %3352 = vmatpush1.bf16.msra.mxu0 %v2563
    %3353 = vmatprep.subr.bf16.mxu0 %v2572
    %3354 = vmatpush1.bf16.msra.mxu0 %v2571
    %3355 = vmatprep.subr.bf16.mxu0 %v2580
    %3356 = vmatpush1.bf16.msra.mxu0 %v2579
    %3357 = vmatprep.subr.bf16.mxu0 %v2588
    %3358 = vmatpush1.bf16.msra.mxu0 %v2587
    %3359 = vmatprep.subr.bf16.mxu0 %v2596
    %3360 = vmatpush1.bf16.msra.mxu0 %v2595
    %3361 = vmatprep.subr.bf16.mxu0 %v2604
    %3362 = vmatpush1.bf16.msra.mxu0 %v2603
    %3363 = vmatprep.subr.bf16.mxu0 %v2612
    %3364 = vmatpush1.bf16.msra.mxu0 %v2611
    %3365 = vmatprep.subr.bf16.mxu0 %v2620
    %3366 = vmatpush1.bf16.msra.mxu0 %v2619
    %3367 = vmatprep.mubr.bf16.mxu0 %v162
    %3368 = vmatmul.mubr.bf16.gmra.mrb[0].mxu0 %v161
    %v3369 = vpop.f32.mrb[0].mxu0
    %v3370 = vadd.f32 %v3329, %v3369
    %v3371 = vpop.f32.mrb[0].mxu0
    %v3372 = vadd.f32 %v3331, %v3371
    %v3373 = vpop.f32.mrb[0].mxu0
    %v3374 = vpop.f32.mrb[0].mxu0
    %3375 = vdwg.mxu0
    %3376 = vmatprep.subr.bf16.mxu0 %v2246
    %3377 = vmatpush1.bf16.msra.mxu0 %v2245
    %3378 = vmatprep.subr.bf16.mxu0 %v2254
    %3379 = vmatpush1.bf16.msra.mxu0 %v2253
    %3380 = vmatprep.subr.bf16.mxu0 %v2262
    %3381 = vmatpush1.bf16.msra.mxu0 %v2261
    %3382 = vmatprep.subr.bf16.mxu0 %v2270
    %3383 = vmatpush1.bf16.msra.mxu0 %v2269
    %3384 = vmatprep.subr.bf16.mxu0 %v2278
    %3385 = vmatpush1.bf16.msra.mxu0 %v2277
    %3386 = vmatprep.subr.bf16.mxu0 %v2286
    %3387 = vmatpush1.bf16.msra.mxu0 %v2285
    %3388 = vmatprep.subr.bf16.mxu0 %v2294
    %3389 = vmatpush1.bf16.msra.mxu0 %v2293
    %3390 = vmatprep.subr.bf16.mxu0 %v2302
    %3391 = vmatpush1.bf16.msra.mxu0 %v2301
    %3392 = vmatprep.subr.bf16.mxu0 %v2310
    %3393 = vmatpush1.bf16.msra.mxu0 %v2309
    %3394 = vmatprep.subr.bf16.mxu0 %v2318
    %3395 = vmatpush1.bf16.msra.mxu0 %v2317
    %3396 = vmatprep.subr.bf16.mxu0 %v2326
    %3397 = vmatpush1.bf16.msra.mxu0 %v2325
    %3398 = vmatprep.subr.bf16.mxu0 %v2334
    %3399 = vmatpush1.bf16.msra.mxu0 %v2333
    %3400 = vmatprep.subr.bf16.mxu0 %v2342
    %3401 = vmatpush1.bf16.msra.mxu0 %v2341
    %3402 = vmatprep.subr.bf16.mxu0 %v2350
    %3403 = vmatpush1.bf16.msra.mxu0 %v2349
    %3404 = vmatprep.subr.bf16.mxu0 %v2358
    %3405 = vmatpush1.bf16.msra.mxu0 %v2357
    %3406 = vmatprep.subr.bf16.mxu0 %v2366
    %3407 = vmatpush1.bf16.msra.mxu0 %v2365
    %3408 = vmatprep.mubr.bf16.mxu0 %v158
    %3409 = vmatmul.mubr.bf16.gmra.mrb[0].mxu0 %v157
    %v3410 = vpop.f32.mrb[0].mxu0
    %v3411 = vadd.f32 %v1083, %v3410
    %v3412 = vpop.f32.mrb[0].mxu0
    %v3413 = vadd.f32 %v1085, %v3412
    %v3414 = vpop.f32.mrb[0].mxu0
    %v3415 = vpop.f32.mrb[0].mxu0
    %3416 = vdwg.mxu0
    %3417 = vmatprep.subr.bf16.mxu0 %v2374
    %3418 = vmatpush1.bf16.msra.mxu0 %v2373
    %3419 = vmatprep.subr.bf16.mxu0 %v2382
    %3420 = vmatpush1.bf16.msra.mxu0 %v2381
    %3421 = vmatprep.subr.bf16.mxu0 %v2390
    %3422 = vmatpush1.bf16.msra.mxu0 %v2389
    %3423 = vmatprep.subr.bf16.mxu0 %v2398
    %3424 = vmatpush1.bf16.msra.mxu0 %v2397
    %3425 = vmatprep.subr.bf16.mxu0 %v2406
    %3426 = vmatpush1.bf16.msra.mxu0 %v2405
    %3427 = vmatprep.subr.bf16.mxu0 %v2414
    %3428 = vmatpush1.bf16.msra.mxu0 %v2413
    %3429 = vmatprep.subr.bf16.mxu0 %v2422
    %3430 = vmatpush1.bf16.msra.mxu0 %v2421
    %3431 = vmatprep.subr.bf16.mxu0 %v2430
    %3432 = vmatpush1.bf16.msra.mxu0 %v2429
    %3433 = vmatprep.subr.bf16.mxu0 %v2438
    %3434 = vmatpush1.bf16.msra.mxu0 %v2437
    %3435 = vmatprep.subr.bf16.mxu0 %v2446
    %3436 = vmatpush1.bf16.msra.mxu0 %v2445
    %3437 = vmatprep.subr.bf16.mxu0 %v2454
    %3438 = vmatpush1.bf16.msra.mxu0 %v2453
    %3439 = vmatprep.subr.bf16.mxu0 %v2462
    %3440 = vmatpush1.bf16.msra.mxu0 %v2461
    %3441 = vmatprep.subr.bf16.mxu0 %v2470
    %3442 = vmatpush1.bf16.msra.mxu0 %v2469
    %3443 = vmatprep.subr.bf16.mxu0 %v2478
    %3444 = vmatpush1.bf16.msra.mxu0 %v2477
    %3445 = vmatprep.subr.bf16.mxu0 %v2486
    %3446 = vmatpush1.bf16.msra.mxu0 %v2485
    %3447 = vmatprep.subr.bf16.mxu0 %v2494
    %3448 = vmatpush1.bf16.msra.mxu0 %v2493
    %3449 = vmatprep.mubr.bf16.mxu0 %v160
    %3450 = vmatmul.mubr.bf16.gmra.mrb[0].mxu0 %v159
    %v3451 = vpop.f32.mrb[0].mxu0
    %v3452 = vadd.f32 %v3411, %v3451
    %v3453 = vpop.f32.mrb[0].mxu0
    %v3454 = vadd.f32 %v3413, %v3453
    %v3455 = vpop.f32.mrb[0].mxu0
    %v3456 = vpop.f32.mrb[0].mxu0
    %3457 = vdwg.mxu0
    %3458 = vmatprep.subr.bf16.mxu0 %v2502
    %3459 = vmatpush1.bf16.msra.mxu0 %v2501
    %3460 = vmatprep.subr.bf16.mxu0 %v2510
    %3461 = vmatpush1.bf16.msra.mxu0 %v2509
    %3462 = vmatprep.subr.bf16.mxu0 %v2518
    %3463 = vmatpush1.bf16.msra.mxu0 %v2517
    %3464 = vmatprep.subr.bf16.mxu0 %v2526
    %3465 = vmatpush1.bf16.msra.mxu0 %v2525
    %3466 = vmatprep.subr.bf16.mxu0 %v2534
    %3467 = vmatpush1.bf16.msra.mxu0 %v2533
    %3468 = vmatprep.subr.bf16.mxu0 %v2542
    %3469 = vmatpush1.bf16.msra.mxu0 %v2541
    %3470 = vmatprep.subr.bf16.mxu0 %v2550
    %3471 = vmatpush1.bf16.msra.mxu0 %v2549
    %3472 = vmatprep.subr.bf16.mxu0 %v2558
    %3473 = vmatpush1.bf16.msra.mxu0 %v2557
    %3474 = vmatprep.subr.bf16.mxu0 %v2566
    %3475 = vmatpush1.bf16.msra.mxu0 %v2565
    %3476 = vmatprep.subr.bf16.mxu0 %v2574
    %3477 = vmatpush1.bf16.msra.mxu0 %v2573
    %3478 = vmatprep.subr.bf16.mxu0 %v2582
    %3479 = vmatpush1.bf16.msra.mxu0 %v2581
    %3480 = vmatprep.subr.bf16.mxu0 %v2590
    %3481 = vmatpush1.bf16.msra.mxu0 %v2589
    %3482 = vmatprep.subr.bf16.mxu0 %v2598
    %3483 = vmatpush1.bf16.msra.mxu0 %v2597
    %3484 = vmatprep.subr.bf16.mxu0 %v2606
    %3485 = vmatpush1.bf16.msra.mxu0 %v2605
    %3486 = vmatprep.subr.bf16.mxu0 %v2614
    %3487 = vmatpush1.bf16.msra.mxu0 %v2613
    %3488 = vmatprep.subr.bf16.mxu0 %v2622
    %3489 = vmatpush1.bf16.msra.mxu0 %v2621
    %3490 = vmatprep.mubr.bf16.mxu0 %v162
    %3491 = vmatmul.mubr.bf16.gmra.mrb[0].mxu0 %v161
    %v3492 = vpop.f32.mrb[0].mxu0
    %v3493 = vadd.f32 %v3452, %v3492
    %v3494 = vpop.f32.mrb[0].mxu0
    %v3495 = vadd.f32 %v3454, %v3494
    %v3496 = vpop.f32.mrb[0].mxu0
    %v3497 = vpop.f32.mrb[0].mxu0
    %3498 = vdwg.mxu0
    %v3500 = vlaneseq
    %v3501 = vshrl.u32 %v3500, 7
    %v3502 = vsub.s32 0, %v3501
    %v3503 = vrot.slane %v145, %v3502
    %v3504 = vlaneseq
    %v3505 = vshrl.u32 %v3504, 7
    %v3506 = vsub.s32 1, %v3505
    %v3507 = vrot.slane %v145, %v3506
    %v3508 = vlaneseq
    %v3509 = vshrl.u32 %v3508, 7
    %v3510 = vsub.s32 2, %v3509
    %v3511 = vrot.slane %v145, %v3510
    %v3512 = vlaneseq
    %v3513 = vshrl.u32 %v3512, 7
    %v3514 = vsub.s32 3, %v3513
    %v3515 = vrot.slane %v145, %v3514
    %v3516 = vlaneseq
    %v3517 = vshrl.u32 %v3516, 7
    %v3518 = vsub.s32 4, %v3517
    %v3519 = vrot.slane %v145, %v3518
    %v3520 = vlaneseq
    %v3521 = vshrl.u32 %v3520, 7
    %v3522 = vsub.s32 5, %v3521
    %v3523 = vrot.slane %v145, %v3522
    %v3524 = vlaneseq
    %v3525 = vshrl.u32 %v3524, 7
    %v3526 = vsub.s32 6, %v3525
    %v3527 = vrot.slane %v145, %v3526
    %v3528 = vlaneseq
    %v3529 = vshrl.u32 %v3528, 7
    %v3530 = vsub.s32 7, %v3529
    %v3531 = vrot.slane %v145, %v3530
    %v3540 = vadd.f32 %v3124, %v3503
    %v3541 = vadd.f32 %v3126, %v3507
    %v3542 = vadd.f32 %v3247, %v3511
    %v3543 = vadd.f32 %v3249, %v3515
    %v3544 = vadd.f32 %v3370, %v3519
    %v3545 = vadd.f32 %v3372, %v3523
    %v3546 = vadd.f32 %v3493, %v3527
    %v3547 = vadd.f32 %v3495, %v3531
    %v3548 = vxor.u32 %v3540, 2147483648
    %v3549 = vxor.u32 %v3541, 2147483648
    %v3550 = vmul.f32 %v3548, 1.442695
    %v3551 = vpow.pop %v3550
    %v3552 = vmul.f32 %v3549, 1.442695
    %v3553 = vpow.pop %v3552
    %v3554 = vadd.f32 %v3551, 1.0
    %v3555 = vadd.f32 %v3553, 1.0
    %v3556 = vrcp.pop %v3554
    %v3557 = vmul.f32 1.0, %v3556
    %v3558 = vrcp.pop %v3555
    %v3559 = vmul.f32 1.0, %v3558
    %v3560 = vxor.u32 %v3542, 2147483648
    %v3561 = vxor.u32 %v3543, 2147483648
    %v3562 = vmul.f32 %v3560, 1.442695
    %v3563 = vpow.pop %v3562
    %v3564 = vmul.f32 %v3561, 1.442695
    %v3565 = vpow.pop %v3564
    %v3566 = vadd.f32 %v3563, 1.0
    %v3567 = vadd.f32 %v3565, 1.0
    %v3568 = vrcp.pop %v3566
    %v3569 = vmul.f32 1.0, %v3568
    %v3570 = vrcp.pop %v3567
    %v3571 = vmul.f32 1.0, %v3570
    %v3572 = vtanh.pop %v3544
    %v3573 = vtanh.pop %v3545
    %v3574 = vxor.u32 %v3546, 2147483648
    %v3575 = vxor.u32 %v3547, 2147483648
    %v3576 = vmul.f32 %v3574, 1.442695
    %v3577 = vpow.pop %v3576
    %v3578 = vmul.f32 %v3575, 1.442695
    %v3579 = vpow.pop %v3578
    %v3580 = vadd.f32 %v3577, 1.0
    %v3581 = vadd.f32 %v3579, 1.0
    %v3582 = vrcp.pop %v3580
    %v3583 = vmul.f32 1.0, %v3582
    %v3584 = vrcp.pop %v3581
    %v3585 = vmul.f32 1.0, %v3584
    %v3586 = vmul.f32 %v3569, %v149
    %v3587 = vmul.f32 %v3571, %v150
    %v3588 = vmul.f32 %v3557, %v3572
    %v3589 = vmul.f32 %v3559, %v3573
    %v3590 = vadd.f32 %v3586, %v3588
    %v3591 = vadd.f32 %v3587, %v3589
    %v3592 = vtanh.pop %v3590
    %v3593 = vtanh.pop %v3591
    %v3594 = vmul.f32 %v3583, %v3592
    %v3595 = vmul.f32 %v3585, %v3593
    %v3596 = vpack.c.bf16 %v3594, %v3594
    %v3597 = vpack.c.bf16 %v3595, %v3595
    %v3598 = vld [vmem:[#allocation15] sm:$0xff]
    %v3599 = vld [vmem:[#allocation15 + $0x8] sm:$0xff]
    %v3600 = vld [vmem:[#allocation15 + $0x10] sm:$0xff]
    %v3601 = vld [vmem:[#allocation15 + $0x18] sm:$0xff]
    %v3602 = vld [vmem:[#allocation15 + $0x20] sm:$0xff]
    %v3603 = vld [vmem:[#allocation15 + $0x28] sm:$0xff]
    %v3604 = vld [vmem:[#allocation15 + $0x30] sm:$0xff]
    %v3605 = vld [vmem:[#allocation15 + $0x38] sm:$0xff]
    %v3606 = vld [vmem:[#allocation15 + $0x40] sm:$0xff]
    %v3607 = vld [vmem:[#allocation15 + $0x48] sm:$0xff]
    %v3608 = vld [vmem:[#allocation15 + $0x50] sm:$0xff]
    %v3609 = vld [vmem:[#allocation15 + $0x58] sm:$0xff]
    %v3610 = vld [vmem:[#allocation15 + $0x60] sm:$0xff]
    %v3611 = vld [vmem:[#allocation15 + $0x68] sm:$0xff]
    %v3612 = vld [vmem:[#allocation15 + $0x70] sm:$0xff]
    %v3613 = vld [vmem:[#allocation15 + $0x78] sm:$0xff]
    %v3614 = vld [vmem:[#allocation15 + $0x80] sm:$0xff]
    %v3615 = vld [vmem:[#allocation15 + $0x88] sm:$0xff]
    %v3616 = vld [vmem:[#allocation15 + $0x90] sm:$0xff]
    %v3617 = vld [vmem:[#allocation15 + $0x98] sm:$0xff]
    %v3618 = vld [vmem:[#allocation15 + $0xa0] sm:$0xff]
    %v3619 = vld [vmem:[#allocation15 + $0xa8] sm:$0xff]
    %v3620 = vld [vmem:[#allocation15 + $0xb0] sm:$0xff]
    %v3621 = vld [vmem:[#allocation15 + $0xb8] sm:$0xff]
    %v3622 = vld [vmem:[#allocation15 + $0xc0] sm:$0xff]
    %v3623 = vld [vmem:[#allocation15 + $0xc8] sm:$0xff]
    %v3624 = vld [vmem:[#allocation15 + $0xd0] sm:$0xff]
    %v3625 = vld [vmem:[#allocation15 + $0xd8] sm:$0xff]
    %v3626 = vld [vmem:[#allocation15 + $0xe0] sm:$0xff]
    %v3627 = vld [vmem:[#allocation15 + $0xe8] sm:$0xff]
    %v3628 = vld [vmem:[#allocation15 + $0xf0] sm:$0xff]
    %v3629 = vld [vmem:[#allocation15 + $0xf8] sm:$0xff]
    %v3630 = vld [vmem:[#allocation15 + $0x100] sm:$0xff]
    %v3631 = vld [vmem:[#allocation15 + $0x108] sm:$0xff]
    %v3632 = vld [vmem:[#allocation15 + $0x110] sm:$0xff]
    %v3633 = vld [vmem:[#allocation15 + $0x118] sm:$0xff]
    %v3634 = vld [vmem:[#allocation15 + $0x120] sm:$0xff]
    %v3635 = vld [vmem:[#allocation15 + $0x128] sm:$0xff]
    %v3636 = vld [vmem:[#allocation15 + $0x130] sm:$0xff]
    %v3637 = vld [vmem:[#allocation15 + $0x138] sm:$0xff]
    %v3638 = vld [vmem:[#allocation15 + $0x140] sm:$0xff]
    %v3639 = vld [vmem:[#allocation15 + $0x148] sm:$0xff]
    %v3640 = vld [vmem:[#allocation15 + $0x150] sm:$0xff]
    %v3641 = vld [vmem:[#allocation15 + $0x158] sm:$0xff]
    %v3642 = vld [vmem:[#allocation15 + $0x160] sm:$0xff]
    %v3643 = vld [vmem:[#allocation15 + $0x168] sm:$0xff]
    %v3644 = vld [vmem:[#allocation15 + $0x170] sm:$0xff]
    %v3645 = vld [vmem:[#allocation15 + $0x178] sm:$0xff]
    %v3646 = vld [vmem:[#allocation15 + $0x180] sm:$0xff]
    %v3647 = vld [vmem:[#allocation15 + $0x188] sm:$0xff]
    %v3648 = vld [vmem:[#allocation15 + $0x190] sm:$0xff]
    %v3649 = vld [vmem:[#allocation15 + $0x198] sm:$0xff]
    %v3650 = vld [vmem:[#allocation15 + $0x1a0] sm:$0xff]
    %v3651 = vld [vmem:[#allocation15 + $0x1a8] sm:$0xff]
    %v3652 = vld [vmem:[#allocation15 + $0x1b0] sm:$0xff]
    %v3653 = vld [vmem:[#allocation15 + $0x1b8] sm:$0xff]
    %v3654 = vld [vmem:[#allocation15 + $0x1c0] sm:$0xff]
    %v3655 = vld [vmem:[#allocation15 + $0x1c8] sm:$0xff]
    %v3656 = vld [vmem:[#allocation15 + $0x1d0] sm:$0xff]
    %v3657 = vld [vmem:[#allocation15 + $0x1d8] sm:$0xff]
    %v3658 = vld [vmem:[#allocation15 + $0x1e0] sm:$0xff]
    %v3659 = vld [vmem:[#allocation15 + $0x1e8] sm:$0xff]
    %v3660 = vld [vmem:[#allocation15 + $0x1f0] sm:$0xff]
    %v3661 = vld [vmem:[#allocation15 + $0x1f8] sm:$0xff]
    %v3662 = vld [vmem:[#allocation15 + $0x200] sm:$0xff]
    %v3663 = vld [vmem:[#allocation15 + $0x208] sm:$0xff]
    %v3664 = vld [vmem:[#allocation15 + $0x210] sm:$0xff]
    %v3665 = vld [vmem:[#allocation15 + $0x218] sm:$0xff]
    %v3666 = vld [vmem:[#allocation15 + $0x220] sm:$0xff]
    %v3667 = vld [vmem:[#allocation15 + $0x228] sm:$0xff]
    %v3668 = vld [vmem:[#allocation15 + $0x230] sm:$0xff]
    %v3669 = vld [vmem:[#allocation15 + $0x238] sm:$0xff]
    %v3670 = vld [vmem:[#allocation15 + $0x240] sm:$0xff]
    %v3671 = vld [vmem:[#allocation15 + $0x248] sm:$0xff]
    %v3672 = vld [vmem:[#allocation15 + $0x250] sm:$0xff]
    %v3673 = vld [vmem:[#allocation15 + $0x258] sm:$0xff]
    %v3674 = vld [vmem:[#allocation15 + $0x260] sm:$0xff]
    %v3675 = vld [vmem:[#allocation15 + $0x268] sm:$0xff]
    %v3676 = vld [vmem:[#allocation15 + $0x270] sm:$0xff]
    %v3677 = vld [vmem:[#allocation15 + $0x278] sm:$0xff]
    %v3678 = vld [vmem:[#allocation15 + $0x280] sm:$0xff]
    %v3679 = vld [vmem:[#allocation15 + $0x288] sm:$0xff]
    %v3680 = vld [vmem:[#allocation15 + $0x290] sm:$0xff]
    %v3681 = vld [vmem:[#allocation15 + $0x298] sm:$0xff]
    %v3682 = vld [vmem:[#allocation15 + $0x2a0] sm:$0xff]
    %v3683 = vld [vmem:[#allocation15 + $0x2a8] sm:$0xff]
    %v3684 = vld [vmem:[#allocation15 + $0x2b0] sm:$0xff]
    %v3685 = vld [vmem:[#allocation15 + $0x2b8] sm:$0xff]
    %v3686 = vld [vmem:[#allocation15 + $0x2c0] sm:$0xff]
    %v3687 = vld [vmem:[#allocation15 + $0x2c8] sm:$0xff]
    %v3688 = vld [vmem:[#allocation15 + $0x2d0] sm:$0xff]
    %v3689 = vld [vmem:[#allocation15 + $0x2d8] sm:$0xff]
    %v3690 = vld [vmem:[#allocation15 + $0x2e0] sm:$0xff]
    %v3691 = vld [vmem:[#allocation15 + $0x2e8] sm:$0xff]
    %v3692 = vld [vmem:[#allocation15 + $0x2f0] sm:$0xff]
    %v3693 = vld [vmem:[#allocation15 + $0x2f8] sm:$0xff]
    %v3695 = vlaneseq
    %v3696 = vshrl.u32 %v3695, 7
    %v3697 = vsub.s32 0, %v3696
    %v3698 = vrot.slane %v146, %v3697
    %v3699 = vlaneseq
    %v3700 = vshrl.u32 %v3699, 7
    %v3701 = vsub.s32 1, %v3700
    %v3702 = vrot.slane %v146, %v3701
    %v3703 = vlaneseq
    %v3704 = vshrl.u32 %v3703, 7
    %v3705 = vsub.s32 2, %v3704
    %v3706 = vrot.slane %v146, %v3705
    %v3707 = vlaneseq
    %v3708 = vshrl.u32 %v3707, 7
    %v3709 = vsub.s32 3, %v3708
    %v3710 = vrot.slane %v146, %v3709
    %v3711 = vlaneseq
    %v3712 = vshrl.u32 %v3711, 7
    %v3713 = vsub.s32 4, %v3712
    %v3714 = vrot.slane %v146, %v3713
    %v3715 = vlaneseq
    %v3716 = vshrl.u32 %v3715, 7
    %v3717 = vsub.s32 5, %v3716
    %v3718 = vrot.slane %v146, %v3717
    %v3821 = vunpack.c.l.b16 %v3598
    %v3822 = vunpack.c.h.b16 %v3598
    %v3823 = vunpack.c.l.b16 %v3599
    %v3824 = vunpack.c.h.b16 %v3599
    %v3825 = vunpack.c.l.b16 %v3600
    %v3826 = vunpack.c.h.b16 %v3600
    %v3827 = vunpack.c.l.b16 %v3601
    %v3828 = vunpack.c.h.b16 %v3601
    %v3829 = vunpack.c.l.b16 %v3602
    %v3830 = vunpack.c.h.b16 %v3602
    %v3831 = vunpack.c.l.b16 %v3603
    %v3832 = vunpack.c.h.b16 %v3603
    %v3833 = vunpack.c.l.b16 %v3604
    %v3834 = vunpack.c.h.b16 %v3604
    %v3835 = vunpack.c.l.b16 %v3605
    %v3836 = vunpack.c.h.b16 %v3605
    %v3837 = vunpack.c.l.b16 %v3606
    %v3838 = vunpack.c.h.b16 %v3606
    %v3839 = vunpack.c.l.b16 %v3607
    %v3840 = vunpack.c.h.b16 %v3607
    %v3841 = vunpack.c.l.b16 %v3608
    %v3842 = vunpack.c.h.b16 %v3608
    %v3843 = vunpack.c.l.b16 %v3609
    %v3844 = vunpack.c.h.b16 %v3609
    %v3845 = vunpack.c.l.b16 %v3610
    %v3846 = vunpack.c.h.b16 %v3610
    %v3847 = vunpack.c.l.b16 %v3611
    %v3848 = vunpack.c.h.b16 %v3611
    %v3849 = vunpack.c.l.b16 %v3612
    %v3850 = vunpack.c.h.b16 %v3612
    %v3851 = vunpack.c.l.b16 %v3613
    %v3852 = vunpack.c.h.b16 %v3613
    %v3853 = vunpack.c.l.b16 %v3614
    %v3854 = vunpack.c.h.b16 %v3614
    %v3855 = vunpack.c.l.b16 %v3615
    %v3856 = vunpack.c.h.b16 %v3615
    %v3857 = vunpack.c.l.b16 %v3616
    %v3858 = vunpack.c.h.b16 %v3616
    %v3859 = vunpack.c.l.b16 %v3617
    %v3860 = vunpack.c.h.b16 %v3617
    %v3861 = vunpack.c.l.b16 %v3618
    %v3862 = vunpack.c.h.b16 %v3618
    %v3863 = vunpack.c.l.b16 %v3619
    %v3864 = vunpack.c.h.b16 %v3619
    %v3865 = vunpack.c.l.b16 %v3620
    %v3866 = vunpack.c.h.b16 %v3620
    %v3867 = vunpack.c.l.b16 %v3621
    %v3868 = vunpack.c.h.b16 %v3621
    %v3869 = vunpack.c.l.b16 %v3622
    %v3870 = vunpack.c.h.b16 %v3622
    %v3871 = vunpack.c.l.b16 %v3623
    %v3872 = vunpack.c.h.b16 %v3623
    %v3873 = vunpack.c.l.b16 %v3624
    %v3874 = vunpack.c.h.b16 %v3624
    %v3875 = vunpack.c.l.b16 %v3625
    %v3876 = vunpack.c.h.b16 %v3625
    %v3877 = vunpack.c.l.b16 %v3626
    %v3878 = vunpack.c.h.b16 %v3626
    %v3879 = vunpack.c.l.b16 %v3627
    %v3880 = vunpack.c.h.b16 %v3627
    %v3881 = vunpack.c.l.b16 %v3628
    %v3882 = vunpack.c.h.b16 %v3628
    %v3883 = vunpack.c.l.b16 %v3629
    %v3884 = vunpack.c.h.b16 %v3629
    %v3885 = vunpack.c.l.b16 %v3630
    %v3886 = vunpack.c.h.b16 %v3630
    %v3887 = vunpack.c.l.b16 %v3631
    %v3888 = vunpack.c.h.b16 %v3631
    %v3889 = vunpack.c.l.b16 %v3632
    %v3890 = vunpack.c.h.b16 %v3632
    %v3891 = vunpack.c.l.b16 %v3633
    %v3892 = vunpack.c.h.b16 %v3633
    %v3893 = vunpack.c.l.b16 %v3634
    %v3894 = vunpack.c.h.b16 %v3634
    %v3895 = vunpack.c.l.b16 %v3635
    %v3896 = vunpack.c.h.b16 %v3635
    %v3897 = vunpack.c.l.b16 %v3636
    %v3898 = vunpack.c.h.b16 %v3636
    %v3899 = vunpack.c.l.b16 %v3637
    %v3900 = vunpack.c.h.b16 %v3637
    %v3901 = vunpack.c.l.b16 %v3638
    %v3902 = vunpack.c.h.b16 %v3638
    %v3903 = vunpack.c.l.b16 %v3639
    %v3904 = vunpack.c.h.b16 %v3639
    %v3905 = vunpack.c.l.b16 %v3640
    %v3906 = vunpack.c.h.b16 %v3640
    %v3907 = vunpack.c.l.b16 %v3641
    %v3908 = vunpack.c.h.b16 %v3641
    %v3909 = vunpack.c.l.b16 %v3642
    %v3910 = vunpack.c.h.b16 %v3642
    %v3911 = vunpack.c.l.b16 %v3643
    %v3912 = vunpack.c.h.b16 %v3643
    %v3913 = vunpack.c.l.b16 %v3644
    %v3914 = vunpack.c.h.b16 %v3644
    %v3915 = vunpack.c.l.b16 %v3645
    %v3916 = vunpack.c.h.b16 %v3645
    %v3917 = vunpack.c.l.b16 %v3646
    %v3918 = vunpack.c.h.b16 %v3646
    %v3919 = vunpack.c.l.b16 %v3647
    %v3920 = vunpack.c.h.b16 %v3647
    %v3921 = vunpack.c.l.b16 %v3648
    %v3922 = vunpack.c.h.b16 %v3648
    %v3923 = vunpack.c.l.b16 %v3649
    %v3924 = vunpack.c.h.b16 %v3649
    %v3925 = vunpack.c.l.b16 %v3650
    %v3926 = vunpack.c.h.b16 %v3650
    %v3927 = vunpack.c.l.b16 %v3651
    %v3928 = vunpack.c.h.b16 %v3651
    %v3929 = vunpack.c.l.b16 %v3652
    %v3930 = vunpack.c.h.b16 %v3652
    %v3931 = vunpack.c.l.b16 %v3653
    %v3932 = vunpack.c.h.b16 %v3653
    %v3933 = vunpack.c.l.b16 %v3654
    %v3934 = vunpack.c.h.b16 %v3654
    %v3935 = vunpack.c.l.b16 %v3655
    %v3936 = vunpack.c.h.b16 %v3655
    %v3937 = vunpack.c.l.b16 %v3656
    %v3938 = vunpack.c.h.b16 %v3656
    %v3939 = vunpack.c.l.b16 %v3657
    %v3940 = vunpack.c.h.b16 %v3657
    %v3941 = vunpack.c.l.b16 %v3658
    %v3942 = vunpack.c.h.b16 %v3658
    %v3943 = vunpack.c.l.b16 %v3659
    %v3944 = vunpack.c.h.b16 %v3659
    %v3945 = vunpack.c.l.b16 %v3660
    %v3946 = vunpack.c.h.b16 %v3660
    %v3947 = vunpack.c.l.b16 %v3661
    %v3948 = vunpack.c.h.b16 %v3661
    %v3949 = vunpack.c.l.b16 %v3662
    %v3950 = vunpack.c.h.b16 %v3662
    %v3951 = vunpack.c.l.b16 %v3663
    %v3952 = vunpack.c.h.b16 %v3663
    %v3953 = vunpack.c.l.b16 %v3664
    %v3954 = vunpack.c.h.b16 %v3664
    %v3955 = vunpack.c.l.b16 %v3665
    %v3956 = vunpack.c.h.b16 %v3665
    %v3957 = vunpack.c.l.b16 %v3666
    %v3958 = vunpack.c.h.b16 %v3666
    %v3959 = vunpack.c.l.b16 %v3667
    %v3960 = vunpack.c.h.b16 %v3667
    %v3961 = vunpack.c.l.b16 %v3668
    %v3962 = vunpack.c.h.b16 %v3668
    %v3963 = vunpack.c.l.b16 %v3669
    %v3964 = vunpack.c.h.b16 %v3669
    %v3965 = vunpack.c.l.b16 %v3670
    %v3966 = vunpack.c.h.b16 %v3670
    %v3967 = vunpack.c.l.b16 %v3671
    %v3968 = vunpack.c.h.b16 %v3671
    %v3969 = vunpack.c.l.b16 %v3672
    %v3970 = vunpack.c.h.b16 %v3672
    %v3971 = vunpack.c.l.b16 %v3673
    %v3972 = vunpack.c.h.b16 %v3673
    %v3973 = vunpack.c.l.b16 %v3674
    %v3974 = vunpack.c.h.b16 %v3674
    %v3975 = vunpack.c.l.b16 %v3675
    %v3976 = vunpack.c.h.b16 %v3675
    %v3977 = vunpack.c.l.b16 %v3676
    %v3978 = vunpack.c.h.b16 %v3676
    %v3979 = vunpack.c.l.b16 %v3677
    %v3980 = vunpack.c.h.b16 %v3677
    %v3981 = vunpack.c.l.b16 %v3678
    %v3982 = vunpack.c.h.b16 %v3678
    %v3983 = vunpack.c.l.b16 %v3679
    %v3984 = vunpack.c.h.b16 %v3679
    %v3985 = vunpack.c.l.b16 %v3680
    %v3986 = vunpack.c.h.b16 %v3680
    %v3987 = vunpack.c.l.b16 %v3681
    %v3988 = vunpack.c.h.b16 %v3681
    %v3989 = vunpack.c.l.b16 %v3682
    %v3990 = vunpack.c.h.b16 %v3682
    %v3991 = vunpack.c.l.b16 %v3683
    %v3992 = vunpack.c.h.b16 %v3683
    %v3993 = vunpack.c.l.b16 %v3684
    %v3994 = vunpack.c.h.b16 %v3684
    %v3995 = vunpack.c.l.b16 %v3685
    %v3996 = vunpack.c.h.b16 %v3685
    %v3997 = vunpack.c.l.b16 %v3686
    %v3998 = vunpack.c.h.b16 %v3686
    %v3999 = vunpack.c.l.b16 %v3687
    %v4000 = vunpack.c.h.b16 %v3687
    %v4001 = vunpack.c.l.b16 %v3688
    %v4002 = vunpack.c.h.b16 %v3688
    %v4003 = vunpack.c.l.b16 %v3689
    %v4004 = vunpack.c.h.b16 %v3689
    %v4005 = vunpack.c.l.b16 %v3690
    %v4006 = vunpack.c.h.b16 %v3690
    %v4007 = vunpack.c.l.b16 %v3691
    %v4008 = vunpack.c.h.b16 %v3691
    %v4009 = vunpack.c.l.b16 %v3692
    %v4010 = vunpack.c.h.b16 %v3692
    %v4011 = vunpack.c.l.b16 %v3693
    %v4012 = vunpack.c.h.b16 %v3693
    %v4013 = vpack.c.b16 %v3827, %v3821
    %v4014 = vpack.c.b16 %v3828, %v3822
    %v4015 = vpack.c.b16 %v3829, %v3823
    %v4016 = vpack.c.b16 %v3830, %v3824
    %v4017 = vpack.c.b16 %v3831, %v3825
    %v4018 = vpack.c.b16 %v3832, %v3826
    %v4019 = vpack.c.b16 %v3839, %v3833
    %v4020 = vpack.c.b16 %v3840, %v3834
    %v4021 = vpack.c.b16 %v3841, %v3835
    %v4022 = vpack.c.b16 %v3842, %v3836
    %v4023 = vpack.c.b16 %v3843, %v3837
    %v4024 = vpack.c.b16 %v3844, %v3838
    %v4025 = vpack.c.b16 %v3851, %v3845
    %v4026 = vpack.c.b16 %v3852, %v3846
    %v4027 = vpack.c.b16 %v3853, %v3847
    %v4028 = vpack.c.b16 %v3854, %v3848
    %v4029 = vpack.c.b16 %v3855, %v3849
    %v4030 = vpack.c.b16 %v3856, %v3850
    %v4031 = vpack.c.b16 %v3863, %v3857
    %v4032 = vpack.c.b16 %v3864, %v3858
    %v4033 = vpack.c.b16 %v3865, %v3859
    %v4034 = vpack.c.b16 %v3866, %v3860
    %v4035 = vpack.c.b16 %v3867, %v3861
    %v4036 = vpack.c.b16 %v3868, %v3862
    %v4037 = vpack.c.b16 %v3875, %v3869
    %v4038 = vpack.c.b16 %v3876, %v3870
    %v4039 = vpack.c.b16 %v3877, %v3871
    %v4040 = vpack.c.b16 %v3878, %v3872
    %v4041 = vpack.c.b16 %v3879, %v3873
    %v4042 = vpack.c.b16 %v3880, %v3874
    %v4043 = vpack.c.b16 %v3887, %v3881
    %v4044 = vpack.c.b16 %v3888, %v3882
    %v4045 = vpack.c.b16 %v3889, %v3883
    %v4046 = vpack.c.b16 %v3890, %v3884
    %v4047 = vpack.c.b16 %v3891, %v3885
    %v4048 = vpack.c.b16 %v3892, %v3886
    %v4049 = vpack.c.b16 %v3899, %v3893
    %v4050 = vpack.c.b16 %v3900, %v3894
    %v4051 = vpack.c.b16 %v3901, %v3895
    %v4052 = vpack.c.b16 %v3902, %v3896
    %v4053 = vpack.c.b16 %v3903, %v3897
    %v4054 = vpack.c.b16 %v3904, %v3898
    %v4055 = vpack.c.b16 %v3911, %v3905
    %v4056 = vpack.c.b16 %v3912, %v3906
    %v4057 = vpack.c.b16 %v3913, %v3907
    %v4058 = vpack.c.b16 %v3914, %v3908
    %v4059 = vpack.c.b16 %v3915, %v3909
    %v4060 = vpack.c.b16 %v3916, %v3910
    %v4061 = vpack.c.b16 %v3923, %v3917
    %v4062 = vpack.c.b16 %v3924, %v3918
    %v4063 = vpack.c.b16 %v3925, %v3919
    %v4064 = vpack.c.b16 %v3926, %v3920
    %v4065 = vpack.c.b16 %v3927, %v3921
    %v4066 = vpack.c.b16 %v3928, %v3922
    %v4067 = vpack.c.b16 %v3935, %v3929
    %v4068 = vpack.c.b16 %v3936, %v3930
    %v4069 = vpack.c.b16 %v3937, %v3931
    %v4070 = vpack.c.b16 %v3938, %v3932
    %v4071 = vpack.c.b16 %v3939, %v3933
    %v4072 = vpack.c.b16 %v3940, %v3934
    %v4073 = vpack.c.b16 %v3947, %v3941
    %v4074 = vpack.c.b16 %v3948, %v3942
    %v4075 = vpack.c.b16 %v3949, %v3943
    %v4076 = vpack.c.b16 %v3950, %v3944
    %v4077 = vpack.c.b16 %v3951, %v3945
    %v4078 = vpack.c.b16 %v3952, %v3946
    %v4079 = vpack.c.b16 %v3959, %v3953
    %v4080 = vpack.c.b16 %v3960, %v3954
    %v4081 = vpack.c.b16 %v3961, %v3955
    %v4082 = vpack.c.b16 %v3962, %v3956
    %v4083 = vpack.c.b16 %v3963, %v3957
    %v4084 = vpack.c.b16 %v3964, %v3958
    %v4085 = vpack.c.b16 %v3971, %v3965
    %v4086 = vpack.c.b16 %v3972, %v3966
    %v4087 = vpack.c.b16 %v3973, %v3967
    %v4088 = vpack.c.b16 %v3974, %v3968
    %v4089 = vpack.c.b16 %v3975, %v3969
    %v4090 = vpack.c.b16 %v3976, %v3970
    %v4091 = vpack.c.b16 %v3983, %v3977
    %v4092 = vpack.c.b16 %v3984, %v3978
    %v4093 = vpack.c.b16 %v3985, %v3979
    %v4094 = vpack.c.b16 %v3986, %v3980
    %v4095 = vpack.c.b16 %v3987, %v3981
    %v4096 = vpack.c.b16 %v3988, %v3982
    %v4097 = vpack.c.b16 %v3995, %v3989
    %v4098 = vpack.c.b16 %v3996, %v3990
    %v4099 = vpack.c.b16 %v3997, %v3991
    %v4100 = vpack.c.b16 %v3998, %v3992
    %v4101 = vpack.c.b16 %v3999, %v3993
    %v4102 = vpack.c.b16 %v4000, %v3994
    %v4103 = vpack.c.b16 %v4007, %v4001
    %v4104 = vpack.c.b16 %v4008, %v4002
    %v4105 = vpack.c.b16 %v4009, %v4003
    %v4106 = vpack.c.b16 %v4010, %v4004
    %v4107 = vpack.c.b16 %v4011, %v4005
    %v4108 = vpack.c.b16 %v4012, %v4006
    %4205 = vmatprep.subr.bf16.mxu0 %v4014
    %4206 = vmatpush1.bf16.msra.mxu0 %v4013
    %4207 = vmatprep.subr.bf16.mxu0 %v4020
    %4208 = vmatpush1.bf16.msra.mxu0 %v4019
    %4209 = vmatprep.subr.bf16.mxu0 %v4026
    %4210 = vmatpush1.bf16.msra.mxu0 %v4025
    %4211 = vmatprep.subr.bf16.mxu0 %v4032
    %4212 = vmatpush1.bf16.msra.mxu0 %v4031
    %4213 = vmatprep.subr.bf16.mxu0 %v4038
    %4214 = vmatpush1.bf16.msra.mxu0 %v4037
    %4215 = vmatprep.subr.bf16.mxu0 %v4044
    %4216 = vmatpush1.bf16.msra.mxu0 %v4043
    %4217 = vmatprep.subr.bf16.mxu0 %v4050
    %4218 = vmatpush1.bf16.msra.mxu0 %v4049
    %4219 = vmatprep.subr.bf16.mxu0 %v4056
    %4220 = vmatpush1.bf16.msra.mxu0 %v4055
    %4221 = vmatprep.subr.bf16.mxu0 %v4062
    %4222 = vmatpush1.bf16.msra.mxu0 %v4061
    %4223 = vmatprep.subr.bf16.mxu0 %v4068
    %4224 = vmatpush1.bf16.msra.mxu0 %v4067
    %4225 = vmatprep.subr.bf16.mxu0 %v4074
    %4226 = vmatpush1.bf16.msra.mxu0 %v4073
    %4227 = vmatprep.subr.bf16.mxu0 %v4080
    %4228 = vmatpush1.bf16.msra.mxu0 %v4079
    %4229 = vmatprep.subr.bf16.mxu0 %v4086
    %4230 = vmatpush1.bf16.msra.mxu0 %v4085
    %4231 = vmatprep.subr.bf16.mxu0 %v4092
    %4232 = vmatpush1.bf16.msra.mxu0 %v4091
    %4233 = vmatprep.subr.bf16.mxu0 %v4098
    %4234 = vmatpush1.bf16.msra.mxu0 %v4097
    %4235 = vmatprep.subr.bf16.mxu0 %v4104
    %4236 = vmatpush1.bf16.msra.mxu0 %v4103
    %4237 = vmatprep.mubr.bf16.mxu0 %v3597
    %4238 = vmatmul.mubr.bf16.gmra.mrb[0].mxu0 %v3596
    %v4239 = vpop.f32.mrb[0].mxu0
    %v4240 = vadd.f32 %v3698, %v4239
    %v4241 = vpop.f32.mrb[0].mxu0
    %v4242 = vadd.f32 %v3702, %v4241
    %v4243 = vpop.f32.mrb[0].mxu0
    %v4244 = vpop.f32.mrb[0].mxu0
    %4245 = vdwg.mxu0
    %4246 = vmatprep.subr.bf16.mxu0 %v4016
    %4247 = vmatpush1.bf16.msra.mxu0 %v4015
    %4248 = vmatprep.subr.bf16.mxu0 %v4022
    %4249 = vmatpush1.bf16.msra.mxu0 %v4021
    %4250 = vmatprep.subr.bf16.mxu0 %v4028
    %4251 = vmatpush1.bf16.msra.mxu0 %v4027
    %4252 = vmatprep.subr.bf16.mxu0 %v4034
    %4253 = vmatpush1.bf16.msra.mxu0 %v4033
    %4254 = vmatprep.subr.bf16.mxu0 %v4040
    %4255 = vmatpush1.bf16.msra.mxu0 %v4039
    %4256 = vmatprep.subr.bf16.mxu0 %v4046
    %4257 = vmatpush1.bf16.msra.mxu0 %v4045
    %4258 = vmatprep.subr.bf16.mxu0 %v4052
    %4259 = vmatpush1.bf16.msra.mxu0 %v4051
    %4260 = vmatprep.subr.bf16.mxu0 %v4058
    %4261 = vmatpush1.bf16.msra.mxu0 %v4057
    %4262 = vmatprep.subr.bf16.mxu0 %v4064
    %4263 = vmatpush1.bf16.msra.mxu0 %v4063
    %4264 = vmatprep.subr.bf16.mxu0 %v4070
    %4265 = vmatpush1.bf16.msra.mxu0 %v4069
    %4266 = vmatprep.subr.bf16.mxu0 %v4076
    %4267 = vmatpush1.bf16.msra.mxu0 %v4075
    %4268 = vmatprep.subr.bf16.mxu0 %v4082
    %4269 = vmatpush1.bf16.msra.mxu0 %v4081
    %4270 = vmatprep.subr.bf16.mxu0 %v4088
    %4271 = vmatpush1.bf16.msra.mxu0 %v4087
    %4272 = vmatprep.subr.bf16.mxu0 %v4094
    %4273 = vmatpush1.bf16.msra.mxu0 %v4093
    %4274 = vmatprep.subr.bf16.mxu0 %v4100
    %4275 = vmatpush1.bf16.msra.mxu0 %v4099
    %4276 = vmatprep.subr.bf16.mxu0 %v4106
    %4277 = vmatpush1.bf16.msra.mxu0 %v4105
    %4278 = vmatprep.mubr.bf16.mxu0 %v3597
    %4279 = vmatmul.mubr.bf16.gmra.mrb[0].mxu0 %v3596
    %v4280 = vpop.f32.mrb[0].mxu0
    %v4281 = vadd.f32 %v3706, %v4280
    %v4282 = vpop.f32.mrb[0].mxu0
    %v4283 = vadd.f32 %v3710, %v4282
    %v4284 = vpop.f32.mrb[0].mxu0
    %v4285 = vpop.f32.mrb[0].mxu0
    %4286 = vdwg.mxu0
    %4287 = vmatprep.subr.bf16.mxu0 %v4018
    %4288 = vmatpush1.bf16.msra.mxu0 %v4017
    %4289 = vmatprep.subr.bf16.mxu0 %v4024
    %4290 = vmatpush1.bf16.msra.mxu0 %v4023
    %4291 = vmatprep.subr.bf16.mxu0 %v4030
    %4292 = vmatpush1.bf16.msra.mxu0 %v4029
    %4293 = vmatprep.subr.bf16.mxu0 %v4036
    %4294 = vmatpush1.bf16.msra.mxu0 %v4035
    %4295 = vmatprep.subr.bf16.mxu0 %v4042
    %4296 = vmatpush1.bf16.msra.mxu0 %v4041
    %4297 = vmatprep.subr.bf16.mxu0 %v4048
    %4298 = vmatpush1.bf16.msra.mxu0 %v4047
    %4299 = vmatprep.subr.bf16.mxu0 %v4054
    %4300 = vmatpush1.bf16.msra.mxu0 %v4053
    %4301 = vmatprep.subr.bf16.mxu0 %v4060
    %4302 = vmatpush1.bf16.msra.mxu0 %v4059
    %4303 = vmatprep.subr.bf16.mxu0 %v4066
    %4304 = vmatpush1.bf16.msra.mxu0 %v4065
    %4305 = vmatprep.subr.bf16.mxu0 %v4072
    %4306 = vmatpush1.bf16.msra.mxu0 %v4071
    %4307 = vmatprep.subr.bf16.mxu0 %v4078
    %4308 = vmatpush1.bf16.msra.mxu0 %v4077
    %4309 = vmatprep.subr.bf16.mxu0 %v4084
    %4310 = vmatpush1.bf16.msra.mxu0 %v4083
    %4311 = vmatprep.subr.bf16.mxu0 %v4090
    %4312 = vmatpush1.bf16.msra.mxu0 %v4089
    %4313 = vmatprep.subr.bf16.mxu0 %v4096
    %4314 = vmatpush1.bf16.msra.mxu0 %v4095
    %4315 = vmatprep.subr.bf16.mxu0 %v4102
    %4316 = vmatpush1.bf16.msra.mxu0 %v4101
    %4317 = vmatprep.subr.bf16.mxu0 %v4108
    %4318 = vmatpush1.bf16.msra.mxu0 %v4107
    %4319 = vmatprep.mubr.bf16.mxu0 %v3597
    %4320 = vmatmul.mubr.bf16.gmra.mrb[0].mxu0 %v3596
    %v4321 = vpop.f32.mrb[0].mxu0
    %v4322 = vadd.f32 %v3714, %v4321
    %v4323 = vpop.f32.mrb[0].mxu0
    %v4324 = vadd.f32 %v3718, %v4323
    %v4325 = vpop.f32.mrb[0].mxu0
    %v4326 = vpop.f32.mrb[0].mxu0
    %4327 = vdwg.mxu0
    %4328 = vst [vmem:[#allocation18] sm:$0xff] %v4240
    %4329 = vst [vmem:[#allocation18 + $0x8] sm:$0xff] %v4242
    %4330 = vst [vmem:[#allocation18 + $0x10] sm:$0xff] %v4281
    %4331 = vst [vmem:[#allocation18 + $0x18] sm:$0xff] %v4283
    %4332 = vst [vmem:[#allocation18 + $0x20] sm:$0xff] %v4322
    %4333 = vst [vmem:[#allocation18 + $0x28] sm:$0xff] %v4324
    %4334 = vst [vmem:[#allocation2] sm:$0xff] %v3594
    %4335 = vst [vmem:[#allocation2 + $0x8] sm:$0xff] %v3595
    %4336 = vst [vmem:[#allocation3] sm:$0xff] %v3590
    %4337 = vst [vmem:[#allocation3 + $0x8] sm:$0xff] %v3591
    // Predicated region
    $region70: #{_decode_sequence_impl.1} parent=1 // pred_check
      %p4338 = pneg %p133
    $region71: #{_decode_sequence_impl.1} parent=1 // pred_check_branch
      %4340 = sbr.rel (%p4338) target = $region73
    $region72: #{_decode_sequence_impl.1} parent=1 // pred_region
      %4341 = vst [vmem:[#allocation19] sm:$0xff] %v3594
      %4342 = vst [vmem:[#allocation19 + $0x8] sm:$0xff] %v3595
      %4343 = vst [vmem:[#allocation21] sm:$0xff] %v3590
      %4344 = vst [vmem:[#allocation21 + $0x8] sm:$0xff] %v3591
    $region73: #{_decode_sequence_impl.1} parent=1 // pred_fallthru
      _
    // Predicated region
    $region74: #{_decode_sequence_impl.1} parent=1 // pred_check
      _
    $region75: #{_decode_sequence_impl.1} parent=1 // pred_check_branch
      %4346 = sbr.rel (0) target = $region77
    $region76: #{_decode_sequence_impl.1} parent=1 // pred_region
      %s4348 = ssub.s32 768, 768
      %4349 = vsyncadd [#allocation6], %s4348
      %s4351 = sshll.u32 [#allocation18], 4
      %s4352 = int_to_ptr.vmem [resolvable:$true] %s4351
      %4354 = dma.vmem_to_hbm [thread:$0]  %s4352, 768, %s8, [#allocation6]
    $region77: #{_decode_sequence_impl.1} parent=1 // pred_fallthru
      _
    // Predicated region
    $region78: #{_decode_sequence_impl.1} parent=1 // pred_check
      _
    $region79: #{_decode_sequence_impl.1} parent=1 // pred_check_branch
      %4356 = sbr.rel (0) target = $region81
    $region80: #{_decode_sequence_impl.1} parent=1 // pred_region
      %s4358 = ssub.s32 256, 256
      %4359 = vsyncadd [#allocation20], %s4358
      %s4361 = sshll.u32 [#allocation19], 4
      %s4362 = int_to_ptr.vmem [resolvable:$true] %s4361
      %4364 = dma.vmem_to_hbm [thread:$0]  %s4362, 256, %s9, [#allocation20]
    $region81: #{_decode_sequence_impl.1} parent=1 // pred_fallthru
      _
    // Predicated region
    $region82: #{_decode_sequence_impl.1} parent=1 // pred_check
      _
    $region83: #{_decode_sequence_impl.1} parent=1 // pred_check_branch
      %4366 = sbr.rel (0) target = $region85
    $region84: #{_decode_sequence_impl.1} parent=1 // pred_region
      %s4368 = ssub.s32 256, 256
      %4369 = vsyncadd [#allocation20], %s4368
      %s4371 = sshll.u32 [#allocation21], 4
      %s4372 = int_to_ptr.vmem [resolvable:$true] %s4371
      %4374 = dma.vmem_to_hbm [thread:$0]  %s4372, 256, %s10, [#allocation20]
    $region85: #{_decode_sequence_impl.1} parent=1 // pred_fallthru
      _
    // Predicated region
    $region86: #{_decode_sequence_impl.1} parent=1 // pred_check
      _
    $region87: #{_decode_sequence_impl.1} parent=1 // pred_check_branch
      %4376 = sbr.rel (0) target = $region89
    $region88: #{_decode_sequence_impl.1} parent=1 // pred_region
      %4377 = dma.done [#allocation6], 768
    $region89: #{_decode_sequence_impl.1} parent=1 // pred_fallthru
      _
    // Predicated region
    $region90: #{_decode_sequence_impl.1} parent=1 // pred_check
      _
    $region91: #{_decode_sequence_impl.1} parent=1 // pred_check_branch
      %4379 = sbr.rel (0) target = $region93
    $region92: #{_decode_sequence_impl.1} parent=1 // pred_region
      %4380 = dma.done [#allocation20], 256
    $region93: #{_decode_sequence_impl.1} parent=1 // pred_fallthru
      _
    // Predicated region
    $region94: #{_decode_sequence_impl.1} parent=1 // pred_check
      _
    $region95: #{_decode_sequence_impl.1} parent=1 // pred_check_branch
      %4382 = sbr.rel (0) target = $region97
    $region96: #{_decode_sequence_impl.1} parent=1 // pred_region
      %4383 = dma.done [#allocation20], 256
    $region97: #{_decode_sequence_impl.1} parent=1 // pred_fallthru
      _
    %4384 = vsyncpa [#allocation5], 1
    %4385 = vsyncpa [#allocation8], 1
    %4386 = vsyncpa [#allocation11], 1
    %4387 = vsyncpa [#allocation14], 1
    %4388 = vsyncpa [#allocation17], 1
    %4389 = vsyncpa [#allocation6], 1
    %4390 = vsyncpa [#allocation20], 1

</llo_original>
